<compile_context>
chip_gen: v6e
topology: v6e:2x2x1
jax: 0.10.0
libtpu: 0.0.40
codegen_flags: <defaults>
</compile_context>

<pallas_src>
import functools
import math

import jax
import jax.numpy as jnp
from jax.experimental import pallas as pl
from jax.experimental.pallas import tpu as pltpu


# --------------------------- model configuration ---------------------------

B = 2            # batch
C = 3            # image channels
IMG = 32         # image spatial size
PATCH = 16       # patch size  -> grid 2x2 -> 4 patches
WIDTH = 32       # transformer width
HEADS = 4
HEAD_DIM = WIDTH // HEADS
LAYERS = 2
EMBED = 16       # output feature dim (CLIP embed dim)
NUM_TEXT = 6     # number of text embeddings

GRID_HW = IMG // PATCH
NUM_PATCHES = GRID_HW * GRID_HW
T = NUM_PATCHES + 1          # tokens (+ class token)
BT = B * T                   # flattened (batch, token) rows
PATCH_DIM = C * PATCH * PATCH


# ------------------------------ kernel helpers ------------------------------

def _ln(x, g, b, eps=1e-5):
    """Row-wise layernorm in f32. g, b: (1, D)."""
    x = x.astype(jnp.float32)
    mean = jnp.mean(x, axis=-1, keepdims=True)
    var = jnp.mean(jnp.square(x - mean), axis=-1, keepdims=True)
    return (x - mean) * jax.lax.rsqrt(var + eps) * g + b


# ------------------------------ fused kernel -------------------------------

def _fused_kernel(patch_ref, wp_ref, cls_ref, pos_ref, lnpre_g_ref, lnpre_b_ref,
                  mask_ref,
                  ln1g_ref, ln1b_ref, wqkv_ref, bqkv_ref, wout_ref, bout_ref,
                  ln2g_ref, ln2b_ref, wfc1_ref, bfc1_ref, wfc2_ref, bfc2_ref,
                  lnpost_g_ref, lnpost_b_ref, proj_ref, txt_ref, scale_ref,
                  logits_ref,
                  h_ref, cls_sc,
                  *, batch, tokens, heads, head_dim):
    layer = pl.program_id(0)
    width = heads * head_dim
    npatch = tokens - 1

    # ---- prologue (layer 0 only): patch-embed + cls/pos + ln_pre into VMEM h ----
    @pl.when(layer == 0)
    def _prologue():
        g = lnpre_g_ref[...]
        b = lnpre_b_ref[...]
        pos_tail = pos_ref[1:, :].astype(jnp.float32)                   # (P, W)
        cls_row = _ln(cls_ref[...].astype(jnp.float32) + pos_ref[0:1, :], g, b)
        for bb in range(batch):
            emb_b = jnp.dot(patch_ref[pl.ds(bb * npatch, npatch), :], wp_ref[...],
                            preferred_element_type=jnp.float32)         # (P, W)
            h_ref[pl.ds(bb * tokens, 1), :] = cls_row
            h_ref[pl.ds(bb * tokens + 1, npatch), :] = _ln(emb_b + pos_tail, g, b)

    # ---- transformer layer (every grid step), fully resident in VMEM/vregs ----
    x = h_ref[...]                                                      # (B*T, W) f32

    a = _ln(x, ln1g_ref[...], ln1b_ref[...]).astype(jnp.bfloat16)
    qkv = jnp.dot(a, wqkv_ref[...],
                  preferred_element_type=jnp.float32) + bqkv_ref[...]   # (B*T, 3W) f32
    scale = 1.0 / math.sqrt(head_dim)
    mask = mask_ref[...]                                                # block-diag batch mask
    ctx_parts = []
    for hd in range(heads):
        lo, hi = hd * head_dim, (hd + 1) * head_dim
        qh = qkv[:, lo:hi].astype(jnp.bfloat16)                         # (B*T, Dh)
        kh = qkv[:, width + lo:width + hi].astype(jnp.bfloat16)
        vh = qkv[:, 2 * width + lo:2 * width + hi].astype(jnp.bfloat16)
        s = jax.lax.dot_general(qh, kh, (((1,), (1,)), ((), ())),
                                preferred_element_type=jnp.float32)     # (B*T, B*T)
        s = s * scale + mask
        m = jnp.max(s, axis=-1, keepdims=True)
        p = jnp.exp(s - m)
        p = p * pl.reciprocal(jnp.sum(p, axis=-1, keepdims=True), approx=True)
        ctx_parts.append(jnp.dot(p.astype(jnp.bfloat16), vh,
                                 preferred_element_type=jnp.float32))   # (B*T, Dh)
    # Merge heads along lanes once, then a SINGLE (B*T, W) @ (W, W) output projection.
    ctx = jnp.concatenate(ctx_parts, axis=-1)                           # (B*T, W) f32
    x = x + jnp.dot(ctx.astype(jnp.bfloat16), wout_ref[...],
                    preferred_element_type=jnp.float32) + bout_ref[...]

    # MLP block (bias + QuickGELU fused as fc1 epilogue)
    mi = _ln(x, ln2g_ref[...], ln2b_ref[...]).astype(jnp.bfloat16)
    f1 = jnp.dot(mi, wfc1_ref[...],
                 preferred_element_type=jnp.float32) + bfc1_ref[...]    # (B*T, 4W)
    f1 = f1 * (1.0 / (1.0 + jnp.exp(-1.702 * f1)))                      # QuickGELU
    x = x + jnp.dot(f1.astype(jnp.bfloat16), wfc2_ref[...],
                    preferred_element_type=jnp.float32) + bfc2_ref[...]
    h_ref[...] = x

    # ---- epilogue (last layer only): ln_post + proj + L2-norm + logits ----
    @pl.when(layer == pl.num_programs(0) - 1)
    def _epilogue():
        # Gather the CLS row of each image into a tiny (B, W) scratch, then one matmul each.
        for bb in range(batch):
            cls_sc[pl.ds(bb, 1), :] = h_ref[pl.ds(bb * tokens, 1), :]
        y = _ln(cls_sc[...], lnpost_g_ref[...], lnpost_b_ref[...])      # (B, W)
        img = jnp.dot(y.astype(jnp.bfloat16), proj_ref[...],
                      preferred_element_type=jnp.float32)               # (B, E)
        img = img * jax.lax.rsqrt(jnp.sum(img * img, axis=-1, keepdims=True))
        txt = txt_ref[...].astype(jnp.float32)
        txt = txt * jax.lax.rsqrt(jnp.sum(txt * txt, axis=-1, keepdims=True))
        logits = jax.lax.dot_general(img.astype(jnp.bfloat16), txt.astype(jnp.bfloat16),
                                     (((1,), (1,)), ((), ())),
                                     preferred_element_type=jnp.float32)  # (B, NT)
        logits_ref[...] = (jnp.exp(scale_ref[0, 0]) * logits).astype(logits_ref.dtype)


# ----------------------------- pallas wrapper -------------------------------

def _const_spec(shape):
    """Full-array block, constant across the layer grid (fetched once)."""
    return pl.BlockSpec(shape, lambda l, _n=len(shape): (0,) * _n)


def _layer_spec(tail):
    """Per-layer block of a weight stacked along a leading LAYERS axis."""
    return pl.BlockSpec((None,) + tail, lambda l, _n=len(tail): (l,) + (0,) * _n)


def patchify(x):
    # NCHW -> (B, num_patches, C*patch*patch); pure-XLA layout glue (conv1 as matmul).
    b, c, h, w = x.shape
    gh, gw = h // PATCH, w // PATCH
    x = x.reshape(b, c, gh, PATCH, gw, PATCH)
    x = x.transpose(0, 2, 4, 1, 3, 5)
    return x.reshape(b, gh * gw, c * PATCH * PATCH)


def vision_clip_forward(params, x, text_features):
    patches = patchify(x).reshape(B * NUM_PATCHES, PATCH_DIM).astype(jnp.bfloat16)

    bf16 = lambda a: a.astype(jnp.bfloat16)
    r2 = lambda a: a.reshape(1, -1)          # (D,)   -> (1, D)
    r3 = lambda a: a[:, None, :]             # (L, D) -> (L, 1, D)

    # Block-diagonal additive attention mask so all images share one (B*T, W) slab
    # without cross-image attention.  Constant-folded under jit.
    tok_batch = jnp.arange(BT, dtype=jnp.int32) // T
    mask = jnp.where(tok_batch[:, None] == tok_batch[None, :], 0.0, -1e9).astype(jnp.float32)

    scale = jnp.asarray(params["logit_scale"], jnp.float32).reshape(1, 1)

    kern = functools.partial(_fused_kernel, batch=B, tokens=T,
                             heads=HEADS, head_dim=HEAD_DIM)

    return pl.pallas_call(
        kern,
        out_shape=jax.ShapeDtypeStruct((B, NUM_TEXT), jnp.float32),
        grid=(LAYERS,),
        in_specs=[
            _const_spec((B * NUM_PATCHES, PATCH_DIM)),        # patches
            _const_spec((PATCH_DIM, WIDTH)),                  # w_patch
            _const_spec((1, WIDTH)),                          # cls
            _const_spec((T, WIDTH)),                          # pos
            _const_spec((1, WIDTH)),                          # ln_pre_g
            _const_spec((1, WIDTH)),                          # ln_pre_b
            _const_spec((BT, BT)),                            # attention batch mask
            _layer_spec((1, WIDTH)), _layer_spec((1, WIDTH)),               # ln1 g/b
            _layer_spec((WIDTH, 3 * WIDTH)), _layer_spec((1, 3 * WIDTH)),   # qkv
            _layer_spec((WIDTH, WIDTH)), _layer_spec((1, WIDTH)),           # out proj
            _layer_spec((1, WIDTH)), _layer_spec((1, WIDTH)),               # ln2 g/b
            _layer_spec((WIDTH, 4 * WIDTH)), _layer_spec((1, 4 * WIDTH)),   # fc1
            _layer_spec((4 * WIDTH, WIDTH)), _layer_spec((1, WIDTH)),       # fc2
            _const_spec((1, WIDTH)),                          # ln_post_g
            _const_spec((1, WIDTH)),                          # ln_post_b
            _const_spec((WIDTH, EMBED)),                      # proj
            _const_spec((NUM_TEXT, EMBED)),                   # text features
            pl.BlockSpec(memory_space=pltpu.MemorySpace.SMEM),  # logit_scale scalar
        ],
        out_specs=_const_spec((B, NUM_TEXT)),
        scratch_shapes=[
            pltpu.VMEM((BT, WIDTH), jnp.float32),             # resident activation slab
            pltpu.VMEM((B, WIDTH), jnp.float32),              # CLS gather scratch
        ],
        compiler_params=pltpu.CompilerParams(dimension_semantics=("arbitrary",)),
    )(
        patches, bf16(params["w_patch"]),
        r2(params["cls"]), params["pos"],
        r2(params["ln_pre_g"]), r2(params["ln_pre_b"]),
        mask,
        r3(params["ln1_g"]), r3(params["ln1_b"]),
        bf16(params["w_qkv"]), r3(params["b_qkv"]),
        bf16(params["w_out"]), r3(params["b_out"]),
        r3(params["ln2_g"]), r3(params["ln2_b"]),
        bf16(params["w_fc1"]), r3(params["b_fc1"]),
        bf16(params["w_fc2"]), r3(params["b_fc2"]),
        r2(params["ln_post_g"]), r2(params["ln_post_b"]),
        bf16(params["proj"]), text_features, scale,
    )


# ------------------------------- parameters --------------------------------

def init_params(key):
    def nrm(k, shape, s=0.02):
        return (s * jax.random.normal(k, shape)).astype(jnp.float32)

    ks = jax.random.split(key, 8)
    return {
        # conv1 (kernel==stride) expressed as a patch matmul
        "w_patch": nrm(ks[0], (PATCH_DIM, WIDTH)),
        "cls": nrm(ks[1], (WIDTH,)),
        "pos": nrm(ks[2], (T, WIDTH)),
        "ln_pre_g": jnp.ones((WIDTH,), jnp.float32),
        "ln_pre_b": jnp.zeros((WIDTH,), jnp.float32),
        "ln_post_g": jnp.ones((WIDTH,), jnp.float32),
        "ln_post_b": jnp.zeros((WIDTH,), jnp.float32),
        "proj": nrm(ks[3], (WIDTH, EMBED)),
        "logit_scale": jnp.asarray(math.log(1.0 / 0.07), jnp.float32),
        # per-layer weights stacked along a leading LAYERS axis
        "ln1_g": jnp.ones((LAYERS, WIDTH), jnp.float32),
        "ln1_b": jnp.zeros((LAYERS, WIDTH), jnp.float32),
        "w_qkv": nrm(ks[4], (LAYERS, WIDTH, 3 * WIDTH)),
        "b_qkv": jnp.zeros((LAYERS, 3 * WIDTH), jnp.float32),
        "w_out": nrm(ks[5], (LAYERS, WIDTH, WIDTH)),
        "b_out": jnp.zeros((LAYERS, WIDTH), jnp.float32),
        "ln2_g": jnp.ones((LAYERS, WIDTH), jnp.float32),
        "ln2_b": jnp.zeros((LAYERS, WIDTH), jnp.float32),
        "w_fc1": nrm(ks[6], (LAYERS, WIDTH, 4 * WIDTH)),
        "b_fc1": jnp.zeros((LAYERS, 4 * WIDTH), jnp.float32),
        "w_fc2": nrm(ks[7], (LAYERS, 4 * WIDTH, WIDTH)),
        "b_fc2": jnp.zeros((LAYERS, WIDTH), jnp.float32),
    }


# ----------------------------------- main -----------------------------------

if __name__ == "__main__":
    key = jax.random.PRNGKey(0)
    k_param, k_img, k_txt = jax.random.split(key, 3)

    params = init_params(k_param)
    x = jax.random.normal(k_img, (B, C, IMG, IMG), dtype=jnp.float32)           # NCHW
    text_features = jax.random.normal(k_txt, (NUM_TEXT, EMBED), dtype=jnp.float32)

    fwd = jax.jit(vision_clip_forward)
    logits = fwd(params, x, text_features)
    jax.block_until_ready(logits)
    assert logits.shape == (B, NUM_TEXT), logits.shape
    print("KERNEL_OK")
</pallas_src>

<mosaic_0001>
module attributes {stable_mosaic.version = 11 : i64} {
  func.func @_fused_kernel(%arg0: i32, %arg1: memref<8x768xbf16, #tpu.memory_space<vmem>>, %arg2: memref<768x32xbf16, #tpu.memory_space<vmem>>, %arg3: memref<1x32xf32, #tpu.memory_space<vmem>>, %arg4: memref<5x32xf32, #tpu.memory_space<vmem>>, %arg5: memref<1x32xf32, #tpu.memory_space<vmem>>, %arg6: memref<1x32xf32, #tpu.memory_space<vmem>>, %arg7: memref<10x10xf32, #tpu.memory_space<vmem>>, %arg8: memref<1x1x32xf32, #tpu.memory_space<vmem>>, %arg9: memref<1x1x32xf32, #tpu.memory_space<vmem>>, %arg10: memref<1x32x96xbf16, #tpu.memory_space<vmem>>, %arg11: memref<1x1x96xf32, #tpu.memory_space<vmem>>, %arg12: memref<1x32x32xbf16, #tpu.memory_space<vmem>>, %arg13: memref<1x1x32xf32, #tpu.memory_space<vmem>>, %arg14: memref<1x1x32xf32, #tpu.memory_space<vmem>>, %arg15: memref<1x1x32xf32, #tpu.memory_space<vmem>>, %arg16: memref<1x32x128xbf16, #tpu.memory_space<vmem>>, %arg17: memref<1x1x128xf32, #tpu.memory_space<vmem>>, %arg18: memref<1x128x32xbf16, #tpu.memory_space<vmem>>, %arg19: memref<1x1x32xf32, #tpu.memory_space<vmem>>, %arg20: memref<1x32xf32, #tpu.memory_space<vmem>>, %arg21: memref<1x32xf32, #tpu.memory_space<vmem>>, %arg22: memref<32x16xbf16, #tpu.memory_space<vmem>>, %arg23: memref<6x16xf32, #tpu.memory_space<vmem>>, %arg24: memref<1x1xf32, #tpu.memory_space<smem>>, %arg25: memref<2x6xf32, #tpu.memory_space<vmem>>, %arg26: memref<10x32xf32, #tpu.memory_space<vmem>>, %arg27: memref<2x32xf32, #tpu.memory_space<vmem>>) attributes {dimension_semantics = [#tpu.dimension_semantics<arbitrary>], iteration_bounds = array<i64: 2>, scalar_prefetch = 0 : i64, scratch_operands = 2 : i64, tpu.core_type = #tpu.core_type<tc>, window_params = [{pipeline_mode = #tpu.pipeline_mode<synchronous>, transform_indices = @transform_0, window_bounds = array<i64: 8, 768>}, {pipeline_mode = #tpu.pipeline_mode<synchronous>, transform_indices = @transform_1, window_bounds = array<i64: 768, 32>}, {pipeline_mode = #tpu.pipeline_mode<synchronous>, transform_indices = @transform_2, window_bounds = array<i64: 1, 32>}, {pipeline_mode = #tpu.pipeline_mode<synchronous>, transform_indices = @transform_3, window_bounds = array<i64: 5, 32>}, {pipeline_mode = #tpu.pipeline_mode<synchronous>, transform_indices = @transform_4, window_bounds = array<i64: 1, 32>}, {pipeline_mode = #tpu.pipeline_mode<synchronous>, transform_indices = @transform_5, window_bounds = array<i64: 1, 32>}, {pipeline_mode = #tpu.pipeline_mode<synchronous>, transform_indices = @transform_6, window_bounds = array<i64: 10, 10>}, {transform_indices = @transform_7, window_bounds = array<i64: 1, 1, 32>}, {transform_indices = @transform_8, window_bounds = array<i64: 1, 1, 32>}, {transform_indices = @transform_9, window_bounds = array<i64: 1, 32, 96>}, {transform_indices = @transform_10, window_bounds = array<i64: 1, 1, 96>}, {transform_indices = @transform_11, window_bounds = array<i64: 1, 32, 32>}, {transform_indices = @transform_12, window_bounds = array<i64: 1, 1, 32>}, {transform_indices = @transform_13, window_bounds = array<i64: 1, 1, 32>}, {transform_indices = @transform_14, window_bounds = array<i64: 1, 1, 32>}, {transform_indices = @transform_15, window_bounds = array<i64: 1, 32, 128>}, {transform_indices = @transform_16, window_bounds = array<i64: 1, 1, 128>}, {transform_indices = @transform_17, window_bounds = array<i64: 1, 128, 32>}, {transform_indices = @transform_18, window_bounds = array<i64: 1, 1, 32>}, {pipeline_mode = #tpu.pipeline_mode<synchronous>, transform_indices = @transform_19, window_bounds = array<i64: 1, 32>}, {pipeline_mode = #tpu.pipeline_mode<synchronous>, transform_indices = @transform_20, window_bounds = array<i64: 1, 32>}, {pipeline_mode = #tpu.pipeline_mode<synchronous>, transform_indices = @transform_21, window_bounds = array<i64: 32, 16>}, {pipeline_mode = #tpu.pipeline_mode<synchronous>, transform_indices = @transform_22, window_bounds = array<i64: 6, 16>}, {transform_indices = @transform_23, window_bounds = array<i64: 1, 1>}, {pipeline_mode = #tpu.pipeline_mode<synchronous>, transform_indices = @transform_24, window_bounds = array<i64: 2, 6>}]} {
    %c0_i32 = arith.constant 0 : i32
    %0 = arith.cmpi eq, %arg0, %c0_i32 : i32
    %1 = arith.extui %0 : i1 to i32
    %c0_i32_0 = arith.constant 0 : i32
    %2 = arith.cmpi ne, %1, %c0_i32_0 : i32
    scf.if %2 {
      %c0_79 = arith.constant 0 : index
      %c0_80 = arith.constant 0 : index
      %192 = vector.load %arg5[%c0_79, %c0_80] : memref<1x32xf32, #tpu.memory_space<vmem>>, vector<1x32xf32>
      %c0_81 = arith.constant 0 : index
      %c0_82 = arith.constant 0 : index
      %193 = vector.load %arg6[%c0_81, %c0_82] : memref<1x32xf32, #tpu.memory_space<vmem>>, vector<1x32xf32>
      %c1 = arith.constant 1 : index
      %c0_83 = arith.constant 0 : index
      %194 = vector.load %arg4[%c1, %c0_83] : memref<5x32xf32, #tpu.memory_space<vmem>>, vector<4x32xf32>
      %c0_84 = arith.constant 0 : index
      %c0_85 = arith.constant 0 : index
      %195 = vector.load %arg3[%c0_84, %c0_85] : memref<1x32xf32, #tpu.memory_space<vmem>>, vector<1x32xf32>
      %c0_86 = arith.constant 0 : index
      %c0_87 = arith.constant 0 : index
      %196 = vector.load %arg4[%c0_86, %c0_87] : memref<5x32xf32, #tpu.memory_space<vmem>>, vector<1x32xf32>
      %197 = arith.addf %195, %196 : vector<1x32xf32>
      %cst_88 = arith.constant dense<0.000000e+00> : vector<1xf32>
      %198 = vector.multi_reduction <add>, %197, %cst_88 [1] : vector<1x32xf32> to vector<1xf32>
      %199 = vector.shape_cast %198 : vector<1xf32> to vector<1x1xf32>
      %cst_89 = arith.constant 3.200000e+01 : f32
      %200 = vector.broadcast %cst_89 : f32 to vector<1x1xf32>
      %201 = arith.divf %199, %200 : vector<1x1xf32>
      %202 = vector.broadcast %201 : vector<1x1xf32> to vector<1x32xf32>
      %203 = arith.subf %197, %202 : vector<1x32xf32>
      %204 = arith.mulf %203, %203 : vector<1x32xf32>
      %cst_90 = arith.constant dense<0.000000e+00> : vector<1xf32>
      %205 = vector.multi_reduction <add>, %204, %cst_90 [1] : vector<1x32xf32> to vector<1xf32>
      %206 = vector.shape_cast %205 : vector<1xf32> to vector<1x1xf32>
      %cst_91 = arith.constant 3.200000e+01 : f32
      %207 = vector.broadcast %cst_91 : f32 to vector<1x1xf32>
      %208 = arith.divf %206, %207 : vector<1x1xf32>
      %209 = vector.broadcast %201 : vector<1x1xf32> to vector<1x32xf32>
      %210 = arith.subf %197, %209 : vector<1x32xf32>
      %cst_92 = arith.constant 9.99999974E-6 : f32
      %211 = vector.broadcast %cst_92 : f32 to vector<1x1xf32>
      %212 = arith.addf %208, %211 : vector<1x1xf32>
      %213 = math.rsqrt %212 : vector<1x1xf32>
      %214 = vector.broadcast %213 : vector<1x1xf32> to vector<1x32xf32>
      %215 = arith.mulf %210, %214 : vector<1x32xf32>
      %216 = arith.mulf %215, %192 : vector<1x32xf32>
      %217 = arith.addf %216, %193 : vector<1x32xf32>
      %c0_93 = arith.constant 0 : index
      %c0_94 = arith.constant 0 : index
      %218 = vector.load %arg1[%c0_93, %c0_94] : memref<8x768xbf16, #tpu.memory_space<vmem>>, vector<4x768xbf16>
      %c0_95 = arith.constant 0 : index
      %c0_96 = arith.constant 0 : index
      %219 = vector.load %arg2[%c0_95, %c0_96] : memref<768x32xbf16, #tpu.memory_space<vmem>>, vector<768x32xbf16>
      %cst_97 = arith.constant dense<0.000000e+00> : vector<4x32xf32>
      %220 = tpu.matmul %218, %219, %cst_97 {dimension_numbers = #tpu.dot_dimension_numbers<[1], [0], [0], [1], [0, 0, 1, 1], [], []>} : vector<4x768xbf16>, vector<768x32xbf16>, vector<4x32xf32> -> vector<4x32xf32>
      %c0_98 = arith.constant 0 : index
      %c0_99 = arith.constant 0 : index
      %221 = vector.load %arg26[%c0_98, %c0_99] : memref<10x32xf32, #tpu.memory_space<vmem>>, vector<1x32xf32>
      tpu.vector_store %arg26[%c0_98, %c0_99], %217 {strides = array<i32>} : memref<10x32xf32, #tpu.memory_space<vmem>>, vector<1x32xf32>,
      %222 = arith.addf %220, %194 : vector<4x32xf32>
      %cst_100 = arith.constant dense<0.000000e+00> : vector<4xf32>
      %223 = vector.multi_reduction <add>, %222, %cst_100 [1] : vector<4x32xf32> to vector<4xf32>
      %224 = vector.shape_cast %223 : vector<4xf32> to vector<4x1xf32>
      %cst_101 = arith.constant 3.200000e+01 : f32
      %225 = vector.broadcast %cst_101 : f32 to vector<4x1xf32>
      %226 = arith.divf %224, %225 : vector<4x1xf32>
      %227 = vector.broadcast %226 : vector<4x1xf32> to vector<4x32xf32>
      %228 = arith.subf %222, %227 : vector<4x32xf32>
      %229 = arith.mulf %228, %228 : vector<4x32xf32>
      %cst_102 = arith.constant dense<0.000000e+00> : vector<4xf32>
      %230 = vector.multi_reduction <add>, %229, %cst_102 [1] : vector<4x32xf32> to vector<4xf32>
      %231 = vector.shape_cast %230 : vector<4xf32> to vector<4x1xf32>
      %cst_103 = arith.constant 3.200000e+01 : f32
      %232 = vector.broadcast %cst_103 : f32 to vector<4x1xf32>
      %233 = arith.divf %231, %232 : vector<4x1xf32>
      %234 = vector.broadcast %226 : vector<4x1xf32> to vector<4x32xf32>
      %235 = arith.subf %222, %234 : vector<4x32xf32>
      %cst_104 = arith.constant 9.99999974E-6 : f32
      %236 = vector.broadcast %cst_104 : f32 to vector<4x1xf32>
      %237 = arith.addf %233, %236 : vector<4x1xf32>
      %238 = math.rsqrt %237 : vector<4x1xf32>
      %239 = vector.broadcast %238 : vector<4x1xf32> to vector<4x32xf32>
      %240 = arith.mulf %235, %239 : vector<4x32xf32>
      %241 = vector.broadcast %192 : vector<1x32xf32> to vector<4x32xf32>
      %242 = arith.mulf %240, %241 : vector<4x32xf32>
      %243 = vector.broadcast %193 : vector<1x32xf32> to vector<4x32xf32>
      %244 = arith.addf %242, %243 : vector<4x32xf32>
      %c1_105 = arith.constant 1 : index
      %c0_106 = arith.constant 0 : index
      %245 = vector.load %arg26[%c1_105, %c0_106] : memref<10x32xf32, #tpu.memory_space<vmem>>, vector<4x32xf32>
      tpu.vector_store %arg26[%c1_105, %c0_106], %244 {strides = array<i32>} : memref<10x32xf32, #tpu.memory_space<vmem>>, vector<4x32xf32>,
      %c4 = arith.constant 4 : index
      %c0_107 = arith.constant 0 : index
      %246 = vector.load %arg1[%c4, %c0_107] : memref<8x768xbf16, #tpu.memory_space<vmem>>, vector<4x768xbf16>
      %c0_108 = arith.constant 0 : index
      %c0_109 = arith.constant 0 : index
      %247 = vector.load %arg2[%c0_108, %c0_109] : memref<768x32xbf16, #tpu.memory_space<vmem>>, vector<768x32xbf16>
      %cst_110 = arith.constant dense<0.000000e+00> : vector<4x32xf32>
      %248 = tpu.matmul %246, %247, %cst_110 {dimension_numbers = #tpu.dot_dimension_numbers<[1], [0], [0], [1], [0, 0, 1, 1], [], []>} : vector<4x768xbf16>, vector<768x32xbf16>, vector<4x32xf32> -> vector<4x32xf32>
      %c5 = arith.constant 5 : index
      %c0_111 = arith.constant 0 : index
      %249 = vector.load %arg26[%c5, %c0_111] : memref<10x32xf32, #tpu.memory_space<vmem>>, vector<1x32xf32>
      tpu.vector_store %arg26[%c5, %c0_111], %217 {strides = array<i32>} : memref<10x32xf32, #tpu.memory_space<vmem>>, vector<1x32xf32>,
      %250 = arith.addf %248, %194 : vector<4x32xf32>
      %cst_112 = arith.constant dense<0.000000e+00> : vector<4xf32>
      %251 = vector.multi_reduction <add>, %250, %cst_112 [1] : vector<4x32xf32> to vector<4xf32>
      %252 = vector.shape_cast %251 : vector<4xf32> to vector<4x1xf32>
      %cst_113 = arith.constant 3.200000e+01 : f32
      %253 = vector.broadcast %cst_113 : f32 to vector<4x1xf32>
      %254 = arith.divf %252, %253 : vector<4x1xf32>
      %255 = vector.broadcast %254 : vector<4x1xf32> to vector<4x32xf32>
      %256 = arith.subf %250, %255 : vector<4x32xf32>
      %257 = arith.mulf %256, %256 : vector<4x32xf32>
      %cst_114 = arith.constant dense<0.000000e+00> : vector<4xf32>
      %258 = vector.multi_reduction <add>, %257, %cst_114 [1] : vector<4x32xf32> to vector<4xf32>
      %259 = vector.shape_cast %258 : vector<4xf32> to vector<4x1xf32>
      %cst_115 = arith.constant 3.200000e+01 : f32
      %260 = vector.broadcast %cst_115 : f32 to vector<4x1xf32>
      %261 = arith.divf %259, %260 : vector<4x1xf32>
      %262 = vector.broadcast %254 : vector<4x1xf32> to vector<4x32xf32>
      %263 = arith.subf %250, %262 : vector<4x32xf32>
      %cst_116 = arith.constant 9.99999974E-6 : f32
      %264 = vector.broadcast %cst_116 : f32 to vector<4x1xf32>
      %265 = arith.addf %261, %264 : vector<4x1xf32>
      %266 = math.rsqrt %265 : vector<4x1xf32>
      %267 = vector.broadcast %266 : vector<4x1xf32> to vector<4x32xf32>
      %268 = arith.mulf %263, %267 : vector<4x32xf32>
      %269 = vector.broadcast %192 : vector<1x32xf32> to vector<4x32xf32>
      %270 = arith.mulf %268, %269 : vector<4x32xf32>
      %271 = vector.broadcast %193 : vector<1x32xf32> to vector<4x32xf32>
      %272 = arith.addf %270, %271 : vector<4x32xf32>
      %c6 = arith.constant 6 : index
      %c0_117 = arith.constant 0 : index
      %273 = vector.load %arg26[%c6, %c0_117] : memref<10x32xf32, #tpu.memory_space<vmem>>, vector<4x32xf32>
      tpu.vector_store %arg26[%c6, %c0_117], %272 {strides = array<i32>} : memref<10x32xf32, #tpu.memory_space<vmem>>, vector<4x32xf32>,
    } else {
    }
    %c0 = arith.constant 0 : index
    %c0_1 = arith.constant 0 : index
    %3 = vector.load %arg26[%c0, %c0_1] : memref<10x32xf32, #tpu.memory_space<vmem>>, vector<10x32xf32>
    %c0_2 = arith.constant 0 : index
    %c0_3 = arith.constant 0 : index
    %c0_4 = arith.constant 0 : index
    %4 = vector.load %arg8[%c0_2, %c0_3, %c0_4] : memref<1x1x32xf32, #tpu.memory_space<vmem>>, vector<1x1x32xf32>
    %5 = vector.shape_cast %4 : vector<1x1x32xf32> to vector<1x32xf32>
    %c0_5 = arith.constant 0 : index
    %c0_6 = arith.constant 0 : index
    %c0_7 = arith.constant 0 : index
    %6 = vector.load %arg9[%c0_5, %c0_6, %c0_7] : memref<1x1x32xf32, #tpu.memory_space<vmem>>, vector<1x1x32xf32>
    %7 = vector.shape_cast %6 : vector<1x1x32xf32> to vector<1x32xf32>
    %cst = arith.constant dense<0.000000e+00> : vector<10xf32>
    %8 = vector.multi_reduction <add>, %3, %cst [1] : vector<10x32xf32> to vector<10xf32>
    %9 = vector.shape_cast %8 : vector<10xf32> to vector<10x1xf32>
    %cst_8 = arith.constant 3.200000e+01 : f32
    %10 = vector.broadcast %cst_8 : f32 to vector<10x1xf32>
    %11 = arith.divf %9, %10 : vector<10x1xf32>
    %12 = vector.broadcast %11 : vector<10x1xf32> to vector<10x32xf32>
    %13 = arith.subf %3, %12 : vector<10x32xf32>
    %14 = arith.mulf %13, %13 : vector<10x32xf32>
    %cst_9 = arith.constant dense<0.000000e+00> : vector<10xf32>
    %15 = vector.multi_reduction <add>, %14, %cst_9 [1] : vector<10x32xf32> to vector<10xf32>
    %16 = vector.shape_cast %15 : vector<10xf32> to vector<10x1xf32>
    %cst_10 = arith.constant 3.200000e+01 : f32
    %17 = vector.broadcast %cst_10 : f32 to vector<10x1xf32>
    %18 = arith.divf %16, %17 : vector<10x1xf32>
    %19 = vector.broadcast %11 : vector<10x1xf32> to vector<10x32xf32>
    %20 = arith.subf %3, %19 : vector<10x32xf32>
    %cst_11 = arith.constant 9.99999974E-6 : f32
    %21 = vector.broadcast %cst_11 : f32 to vector<10x1xf32>
    %22 = arith.addf %18, %21 : vector<10x1xf32>
    %23 = math.rsqrt %22 : vector<10x1xf32>
    %24 = vector.broadcast %23 : vector<10x1xf32> to vector<10x32xf32>
    %25 = arith.mulf %20, %24 : vector<10x32xf32>
    %26 = vector.broadcast %5 : vector<1x32xf32> to vector<10x32xf32>
    %27 = arith.mulf %25, %26 : vector<10x32xf32>
    %28 = vector.broadcast %7 : vector<1x32xf32> to vector<10x32xf32>
    %29 = arith.addf %27, %28 : vector<10x32xf32>
    %30 = arith.truncf %29 : vector<10x32xf32> to vector<10x32xbf16>
    %c0_12 = arith.constant 0 : index
    %c0_13 = arith.constant 0 : index
    %c0_14 = arith.constant 0 : index
    %31 = vector.load %arg10[%c0_12, %c0_13, %c0_14] : memref<1x32x96xbf16, #tpu.memory_space<vmem>>, vector<1x32x96xbf16>
    %32 = vector.shape_cast %31 : vector<1x32x96xbf16> to vector<32x96xbf16>
    %cst_15 = arith.constant dense<0.000000e+00> : vector<10x96xf32>
    %33 = tpu.matmul %30, %32, %cst_15 {dimension_numbers = #tpu.dot_dimension_numbers<[1], [0], [0], [1], [0, 0, 1, 1], [], []>} : vector<10x32xbf16>, vector<32x96xbf16>, vector<10x96xf32> -> vector<10x96xf32>
    %c0_16 = arith.constant 0 : index
    %c0_17 = arith.constant 0 : index
    %c0_18 = arith.constant 0 : index
    %34 = vector.load %arg11[%c0_16, %c0_17, %c0_18] : memref<1x1x96xf32, #tpu.memory_space<vmem>>, vector<1x1x96xf32>
    %35 = vector.shape_cast %34 : vector<1x1x96xf32> to vector<1x96xf32>
    %36 = vector.broadcast %35 : vector<1x96xf32> to vector<10x96xf32>
    %37 = arith.addf %33, %36 : vector<10x96xf32>
    %c0_19 = arith.constant 0 : index
    %c0_20 = arith.constant 0 : index
    %38 = vector.load %arg7[%c0_19, %c0_20] : memref<10x10xf32, #tpu.memory_space<vmem>>, vector<10x10xf32>
    %39 = vector.extract_strided_slice %37 {offsets = [0, 0], sizes = [10, 8], strides = [1, 1]} : vector<10x96xf32> to vector<10x8xf32>
    %40 = arith.truncf %39 : vector<10x8xf32> to vector<10x8xbf16>
    %41 = vector.extract_strided_slice %37 {offsets = [0, 32], sizes = [10, 8], strides = [1, 1]} : vector<10x96xf32> to vector<10x8xf32>
    %42 = arith.truncf %41 : vector<10x8xf32> to vector<10x8xbf16>
    %43 = vector.extract_strided_slice %37 {offsets = [0, 64], sizes = [10, 8], strides = [1, 1]} : vector<10x96xf32> to vector<10x8xf32>
    %44 = arith.truncf %43 : vector<10x8xf32> to vector<10x8xbf16>
    %cst_21 = arith.constant dense<0.000000e+00> : vector<10x10xf32>
    %45 = tpu.matmul %40, %42, %cst_21 {dimension_numbers = #tpu.dot_dimension_numbers<[1], [1], [0], [0], [0, 0, 1, 0], [], []>} : vector<10x8xbf16>, vector<10x8xbf16>, vector<10x10xf32> -> vector<10x10xf32>
    %cst_22 = arith.constant 0.353553385 : f32
    %46 = vector.broadcast %cst_22 : f32 to vector<10x10xf32>
    %47 = arith.mulf %45, %46 : vector<10x10xf32>
    %48 = arith.addf %47, %38 : vector<10x10xf32>
    %cst_23 = arith.constant dense<0xFF800000> : vector<10xf32>
    %49 = vector.multi_reduction <maximumf>, %48, %cst_23 [1] : vector<10x10xf32> to vector<10xf32>
    %50 = vector.shape_cast %49 : vector<10xf32> to vector<10x1xf32>
    %51 = vector.broadcast %50 : vector<10x1xf32> to vector<10x10xf32>
    %52 = arith.subf %48, %51 : vector<10x10xf32>
    %53 = math.exp %52 : vector<10x10xf32>
    %cst_24 = arith.constant dense<0.000000e+00> : vector<10xf32>
    %54 = vector.multi_reduction <add>, %53, %cst_24 [1] : vector<10x10xf32> to vector<10xf32>
    %55 = vector.shape_cast %54 : vector<10xf32> to vector<10x1xf32>
    %56 = tpu.reciprocal %55 {approx = true} : vector<10x1xf32> -> vector<10x1xf32>
    %57 = vector.broadcast %56 : vector<10x1xf32> to vector<10x10xf32>
    %58 = arith.mulf %53, %57 : vector<10x10xf32>
    %59 = arith.truncf %58 : vector<10x10xf32> to vector<10x10xbf16>
    %cst_25 = arith.constant dense<0.000000e+00> : vector<10x8xf32>
    %60 = tpu.matmul %59, %44, %cst_25 {dimension_numbers = #tpu.dot_dimension_numbers<[1], [0], [0], [1], [0, 0, 1, 1], [], []>} : vector<10x10xbf16>, vector<10x8xbf16>, vector<10x8xf32> -> vector<10x8xf32>
    %61 = vector.extract_strided_slice %37 {offsets = [0, 8], sizes = [10, 8], strides = [1, 1]} : vector<10x96xf32> to vector<10x8xf32>
    %62 = arith.truncf %61 : vector<10x8xf32> to vector<10x8xbf16>
    %63 = vector.extract_strided_slice %37 {offsets = [0, 40], sizes = [10, 8], strides = [1, 1]} : vector<10x96xf32> to vector<10x8xf32>
    %64 = arith.truncf %63 : vector<10x8xf32> to vector<10x8xbf16>
    %65 = vector.extract_strided_slice %37 {offsets = [0, 72], sizes = [10, 8], strides = [1, 1]} : vector<10x96xf32> to vector<10x8xf32>
    %66 = arith.truncf %65 : vector<10x8xf32> to vector<10x8xbf16>
    %cst_26 = arith.constant dense<0.000000e+00> : vector<10x10xf32>
    %67 = tpu.matmul %62, %64, %cst_26 {dimension_numbers = #tpu.dot_dimension_numbers<[1], [1], [0], [0], [0, 0, 1, 0], [], []>} : vector<10x8xbf16>, vector<10x8xbf16>, vector<10x10xf32> -> vector<10x10xf32>
    %cst_27 = arith.constant 0.353553385 : f32
    %68 = vector.broadcast %cst_27 : f32 to vector<10x10xf32>
    %69 = arith.mulf %67, %68 : vector<10x10xf32>
    %70 = arith.addf %69, %38 : vector<10x10xf32>
    %cst_28 = arith.constant dense<0xFF800000> : vector<10xf32>
    %71 = vector.multi_reduction <maximumf>, %70, %cst_28 [1] : vector<10x10xf32> to vector<10xf32>
    %72 = vector.shape_cast %71 : vector<10xf32> to vector<10x1xf32>
    %73 = vector.broadcast %72 : vector<10x1xf32> to vector<10x10xf32>
    %74 = arith.subf %70, %73 : vector<10x10xf32>
    %75 = math.exp %74 : vector<10x10xf32>
    %cst_29 = arith.constant dense<0.000000e+00> : vector<10xf32>
    %76 = vector.multi_reduction <add>, %75, %cst_29 [1] : vector<10x10xf32> to vector<10xf32>
    %77 = vector.shape_cast %76 : vector<10xf32> to vector<10x1xf32>
    %78 = tpu.reciprocal %77 {approx = true} : vector<10x1xf32> -> vector<10x1xf32>
    %79 = vector.broadcast %78 : vector<10x1xf32> to vector<10x10xf32>
    %80 = arith.mulf %75, %79 : vector<10x10xf32>
    %81 = arith.truncf %80 : vector<10x10xf32> to vector<10x10xbf16>
    %cst_30 = arith.constant dense<0.000000e+00> : vector<10x8xf32>
    %82 = tpu.matmul %81, %66, %cst_30 {dimension_numbers = #tpu.dot_dimension_numbers<[1], [0], [0], [1], [0, 0, 1, 1], [], []>} : vector<10x10xbf16>, vector<10x8xbf16>, vector<10x8xf32> -> vector<10x8xf32>
    %83 = vector.extract_strided_slice %37 {offsets = [0, 16], sizes = [10, 8], strides = [1, 1]} : vector<10x96xf32> to vector<10x8xf32>
    %84 = arith.truncf %83 : vector<10x8xf32> to vector<10x8xbf16>
    %85 = vector.extract_strided_slice %37 {offsets = [0, 48], sizes = [10, 8], strides = [1, 1]} : vector<10x96xf32> to vector<10x8xf32>
    %86 = arith.truncf %85 : vector<10x8xf32> to vector<10x8xbf16>
    %87 = vector.extract_strided_slice %37 {offsets = [0, 80], sizes = [10, 8], strides = [1, 1]} : vector<10x96xf32> to vector<10x8xf32>
    %88 = arith.truncf %87 : vector<10x8xf32> to vector<10x8xbf16>
    %cst_31 = arith.constant dense<0.000000e+00> : vector<10x10xf32>
    %89 = tpu.matmul %84, %86, %cst_31 {dimension_numbers = #tpu.dot_dimension_numbers<[1], [1], [0], [0], [0, 0, 1, 0], [], []>} : vector<10x8xbf16>, vector<10x8xbf16>, vector<10x10xf32> -> vector<10x10xf32>
    %cst_32 = arith.constant 0.353553385 : f32
    %90 = vector.broadcast %cst_32 : f32 to vector<10x10xf32>
    %91 = arith.mulf %89, %90 : vector<10x10xf32>
    %92 = arith.addf %91, %38 : vector<10x10xf32>
    %cst_33 = arith.constant dense<0xFF800000> : vector<10xf32>
    %93 = vector.multi_reduction <maximumf>, %92, %cst_33 [1] : vector<10x10xf32> to vector<10xf32>
    %94 = vector.shape_cast %93 : vector<10xf32> to vector<10x1xf32>
    %95 = vector.broadcast %94 : vector<10x1xf32> to vector<10x10xf32>
    %96 = arith.subf %92, %95 : vector<10x10xf32>
    %97 = math.exp %96 : vector<10x10xf32>
    %cst_34 = arith.constant dense<0.000000e+00> : vector<10xf32>
    %98 = vector.multi_reduction <add>, %97, %cst_34 [1] : vector<10x10xf32> to vector<10xf32>
    %99 = vector.shape_cast %98 : vector<10xf32> to vector<10x1xf32>
    %100 = tpu.reciprocal %99 {approx = true} : vector<10x1xf32> -> vector<10x1xf32>
    %101 = vector.broadcast %100 : vector<10x1xf32> to vector<10x10xf32>
    %102 = arith.mulf %97, %101 : vector<10x10xf32>
    %103 = arith.truncf %102 : vector<10x10xf32> to vector<10x10xbf16>
    %cst_35 = arith.constant dense<0.000000e+00> : vector<10x8xf32>
    %104 = tpu.matmul %103, %88, %cst_35 {dimension_numbers = #tpu.dot_dimension_numbers<[1], [0], [0], [1], [0, 0, 1, 1], [], []>} : vector<10x10xbf16>, vector<10x8xbf16>, vector<10x8xf32> -> vector<10x8xf32>
    %105 = vector.extract_strided_slice %37 {offsets = [0, 24], sizes = [10, 8], strides = [1, 1]} : vector<10x96xf32> to vector<10x8xf32>
    %106 = arith.truncf %105 : vector<10x8xf32> to vector<10x8xbf16>
    %107 = vector.extract_strided_slice %37 {offsets = [0, 56], sizes = [10, 8], strides = [1, 1]} : vector<10x96xf32> to vector<10x8xf32>
    %108 = arith.truncf %107 : vector<10x8xf32> to vector<10x8xbf16>
    %109 = vector.extract_strided_slice %37 {offsets = [0, 88], sizes = [10, 8], strides = [1, 1]} : vector<10x96xf32> to vector<10x8xf32>
    %110 = arith.truncf %109 : vector<10x8xf32> to vector<10x8xbf16>
    %cst_36 = arith.constant dense<0.000000e+00> : vector<10x10xf32>
    %111 = tpu.matmul %106, %108, %cst_36 {dimension_numbers = #tpu.dot_dimension_numbers<[1], [1], [0], [0], [0, 0, 1, 0], [], []>} : vector<10x8xbf16>, vector<10x8xbf16>, vector<10x10xf32> -> vector<10x10xf32>
    %cst_37 = arith.constant 0.353553385 : f32
    %112 = vector.broadcast %cst_37 : f32 to vector<10x10xf32>
    %113 = arith.mulf %111, %112 : vector<10x10xf32>
    %114 = arith.addf %113, %38 : vector<10x10xf32>
    %cst_38 = arith.constant dense<0xFF800000> : vector<10xf32>
    %115 = vector.multi_reduction <maximumf>, %114, %cst_38 [1] : vector<10x10xf32> to vector<10xf32>
    %116 = vector.shape_cast %115 : vector<10xf32> to vector<10x1xf32>
    %117 = vector.broadcast %116 : vector<10x1xf32> to vector<10x10xf32>
    %118 = arith.subf %114, %117 : vector<10x10xf32>
    %119 = math.exp %118 : vector<10x10xf32>
    %cst_39 = arith.constant dense<0.000000e+00> : vector<10xf32>
    %120 = vector.multi_reduction <add>, %119, %cst_39 [1] : vector<10x10xf32> to vector<10xf32>
    %121 = vector.shape_cast %120 : vector<10xf32> to vector<10x1xf32>
    %122 = tpu.reciprocal %121 {approx = true} : vector<10x1xf32> -> vector<10x1xf32>
    %123 = vector.broadcast %122 : vector<10x1xf32> to vector<10x10xf32>
    %124 = arith.mulf %119, %123 : vector<10x10xf32>
    %125 = arith.truncf %124 : vector<10x10xf32> to vector<10x10xbf16>
    %cst_40 = arith.constant dense<0.000000e+00> : vector<10x8xf32>
    %126 = tpu.matmul %125, %110, %cst_40 {dimension_numbers = #tpu.dot_dimension_numbers<[1], [0], [0], [1], [0, 0, 1, 1], [], []>} : vector<10x10xbf16>, vector<10x8xbf16>, vector<10x8xf32> -> vector<10x8xf32>
    %127 = tpu.concatenate %60, %82, %104, %126 in 1 : vector<10x8xf32>, vector<10x8xf32>, vector<10x8xf32>, vector<10x8xf32> -> vector<10x32xf32>
    %128 = arith.truncf %127 : vector<10x32xf32> to vector<10x32xbf16>
    %c0_41 = arith.constant 0 : index
    %c0_42 = arith.constant 0 : index
    %c0_43 = arith.constant 0 : index
    %129 = vector.load %arg12[%c0_41, %c0_42, %c0_43] : memref<1x32x32xbf16, #tpu.memory_space<vmem>>, vector<1x32x32xbf16>
    %130 = vector.shape_cast %129 : vector<1x32x32xbf16> to vector<32x32xbf16>
    %cst_44 = arith.constant dense<0.000000e+00> : vector<10x32xf32>
    %131 = tpu.matmul %128, %130, %cst_44 {dimension_numbers = #tpu.dot_dimension_numbers<[1], [0], [0], [1], [0, 0, 1, 1], [], []>} : vector<10x32xbf16>, vector<32x32xbf16>, vector<10x32xf32> -> vector<10x32xf32>
    %132 = arith.addf %3, %131 : vector<10x32xf32>
    %c0_45 = arith.constant 0 : index
    %c0_46 = arith.constant 0 : index
    %c0_47 = arith.constant 0 : index
    %133 = vector.load %arg13[%c0_45, %c0_46, %c0_47] : memref<1x1x32xf32, #tpu.memory_space<vmem>>, vector<1x1x32xf32>
    %134 = vector.shape_cast %133 : vector<1x1x32xf32> to vector<1x32xf32>
    %135 = vector.broadcast %134 : vector<1x32xf32> to vector<10x32xf32>
    %136 = arith.addf %132, %135 : vector<10x32xf32>
    %c0_48 = arith.constant 0 : index
    %c0_49 = arith.constant 0 : index
    %c0_50 = arith.constant 0 : index
    %137 = vector.load %arg14[%c0_48, %c0_49, %c0_50] : memref<1x1x32xf32, #tpu.memory_space<vmem>>, vector<1x1x32xf32>
    %138 = vector.shape_cast %137 : vector<1x1x32xf32> to vector<1x32xf32>
    %c0_51 = arith.constant 0 : index
    %c0_52 = arith.constant 0 : index
    %c0_53 = arith.constant 0 : index
    %139 = vector.load %arg15[%c0_51, %c0_52, %c0_53] : memref<1x1x32xf32, #tpu.memory_space<vmem>>, vector<1x1x32xf32>
    %140 = vector.shape_cast %139 : vector<1x1x32xf32> to vector<1x32xf32>
    %cst_54 = arith.constant dense<0.000000e+00> : vector<10xf32>
    %141 = vector.multi_reduction <add>, %136, %cst_54 [1] : vector<10x32xf32> to vector<10xf32>
    %142 = vector.shape_cast %141 : vector<10xf32> to vector<10x1xf32>
    %cst_55 = arith.constant 3.200000e+01 : f32
    %143 = vector.broadcast %cst_55 : f32 to vector<10x1xf32>
    %144 = arith.divf %142, %143 : vector<10x1xf32>
    %145 = vector.broadcast %144 : vector<10x1xf32> to vector<10x32xf32>
    %146 = arith.subf %136, %145 : vector<10x32xf32>
    %147 = arith.mulf %146, %146 : vector<10x32xf32>
    %cst_56 = arith.constant dense<0.000000e+00> : vector<10xf32>
    %148 = vector.multi_reduction <add>, %147, %cst_56 [1] : vector<10x32xf32> to vector<10xf32>
    %149 = vector.shape_cast %148 : vector<10xf32> to vector<10x1xf32>
    %cst_57 = arith.constant 3.200000e+01 : f32
    %150 = vector.broadcast %cst_57 : f32 to vector<10x1xf32>
    %151 = arith.divf %149, %150 : vector<10x1xf32>
    %152 = vector.broadcast %144 : vector<10x1xf32> to vector<10x32xf32>
    %153 = arith.subf %136, %152 : vector<10x32xf32>
    %cst_58 = arith.constant 9.99999974E-6 : f32
    %154 = vector.broadcast %cst_58 : f32 to vector<10x1xf32>
    %155 = arith.addf %151, %154 : vector<10x1xf32>
    %156 = math.rsqrt %155 : vector<10x1xf32>
    %157 = vector.broadcast %156 : vector<10x1xf32> to vector<10x32xf32>
    %158 = arith.mulf %153, %157 : vector<10x32xf32>
    %159 = vector.broadcast %138 : vector<1x32xf32> to vector<10x32xf32>
    %160 = arith.mulf %158, %159 : vector<10x32xf32>
    %161 = vector.broadcast %140 : vector<1x32xf32> to vector<10x32xf32>
    %162 = arith.addf %160, %161 : vector<10x32xf32>
    %163 = arith.truncf %162 : vector<10x32xf32> to vector<10x32xbf16>
    %c0_59 = arith.constant 0 : index
    %c0_60 = arith.constant 0 : index
    %c0_61 = arith.constant 0 : index
    %164 = vector.load %arg16[%c0_59, %c0_60, %c0_61] : memref<1x32x128xbf16, #tpu.memory_space<vmem>>, vector<1x32x128xbf16>
    %165 = vector.shape_cast %164 : vector<1x32x128xbf16> to vector<32x128xbf16>
    %cst_62 = arith.constant dense<0.000000e+00> : vector<10x128xf32>
    %166 = tpu.matmul %163, %165, %cst_62 {dimension_numbers = #tpu.dot_dimension_numbers<[1], [0], [0], [1], [0, 0, 1, 1], [], []>} : vector<10x32xbf16>, vector<32x128xbf16>, vector<10x128xf32> -> vector<10x128xf32>
    %c0_63 = arith.constant 0 : index
    %c0_64 = arith.constant 0 : index
    %c0_65 = arith.constant 0 : index
    %167 = vector.load %arg17[%c0_63, %c0_64, %c0_65] : memref<1x1x128xf32, #tpu.memory_space<vmem>>, vector<1x1x128xf32>
    %168 = vector.shape_cast %167 : vector<1x1x128xf32> to vector<1x128xf32>
    %169 = vector.broadcast %168 : vector<1x128xf32> to vector<10x128xf32>
    %170 = arith.addf %166, %169 : vector<10x128xf32>
    %cst_66 = arith.constant -1.702000e+00 : f32
    %171 = vector.broadcast %cst_66 : f32 to vector<10x128xf32>
    %172 = arith.mulf %171, %170 : vector<10x128xf32>
    %173 = math.exp %172 : vector<10x128xf32>
    %cst_67 = arith.constant 1.000000e+00 : f32
    %174 = vector.broadcast %cst_67 : f32 to vector<10x128xf32>
    %175 = arith.addf %174, %173 : vector<10x128xf32>
    %cst_68 = arith.constant 1.000000e+00 : f32
    %176 = vector.broadcast %cst_68 : f32 to vector<10x128xf32>
    %177 = arith.divf %176, %175 : vector<10x128xf32>
    %178 = arith.mulf %170, %177 : vector<10x128xf32>
    %179 = arith.truncf %178 : vector<10x128xf32> to vector<10x128xbf16>
    %c0_69 = arith.constant 0 : index
    %c0_70 = arith.constant 0 : index
    %c0_71 = arith.constant 0 : index
    %180 = vector.load %arg18[%c0_69, %c0_70, %c0_71] : memref<1x128x32xbf16, #tpu.memory_space<vmem>>, vector<1x128x32xbf16>
    %181 = vector.shape_cast %180 : vector<1x128x32xbf16> to vector<128x32xbf16>
    %cst_72 = arith.constant dense<0.000000e+00> : vector<10x32xf32>
    %182 = tpu.matmul %179, %181, %cst_72 {dimension_numbers = #tpu.dot_dimension_numbers<[1], [0], [0], [1], [0, 0, 1, 1], [], []>} : vector<10x128xbf16>, vector<128x32xbf16>, vector<10x32xf32> -> vector<10x32xf32>
    %183 = arith.addf %136, %182 : vector<10x32xf32>
    %c0_73 = arith.constant 0 : index
    %c0_74 = arith.constant 0 : index
    %c0_75 = arith.constant 0 : index
    %184 = vector.load %arg19[%c0_73, %c0_74, %c0_75] : memref<1x1x32xf32, #tpu.memory_space<vmem>>, vector<1x1x32xf32>
    %185 = vector.shape_cast %184 : vector<1x1x32xf32> to vector<1x32xf32>
    %186 = vector.broadcast %185 : vector<1x32xf32> to vector<10x32xf32>
    %187 = arith.addf %183, %186 : vector<10x32xf32>
    %c0_76 = arith.constant 0 : index
    %c0_77 = arith.constant 0 : index
    %188 = vector.load %arg26[%c0_76, %c0_77] : memref<10x32xf32, #tpu.memory_space<vmem>>, vector<10x32xf32>
    tpu.vector_store %arg26[%c0_76, %c0_77], %187 {strides = array<i32>} : memref<10x32xf32, #tpu.memory_space<vmem>>, vector<10x32xf32>,
    %c1_i32 = arith.constant 1 : i32
    %189 = arith.cmpi eq, %arg0, %c1_i32 : i32
    %190 = arith.extui %189 : i1 to i32
    %c0_i32_78 = arith.constant 0 : i32
    %191 = arith.cmpi ne, %190, %c0_i32_78 : i32
    scf.if %191 {
      %c0_79 = arith.constant 0 : index
      %c0_80 = arith.constant 0 : index
      %192 = vector.load %arg26[%c0_79, %c0_80] : memref<10x32xf32, #tpu.memory_space<vmem>>, vector<1x32xf32>
      %c0_81 = arith.constant 0 : index
      %c0_82 = arith.constant 0 : index
      %193 = vector.load %arg27[%c0_81, %c0_82] : memref<2x32xf32, #tpu.memory_space<vmem>>, vector<1x32xf32>
      tpu.vector_store %arg27[%c0_81, %c0_82], %192 {strides = array<i32>} : memref<2x32xf32, #tpu.memory_space<vmem>>, vector<1x32xf32>,
      %c5 = arith.constant 5 : index
      %c0_83 = arith.constant 0 : index
      %194 = vector.load %arg26[%c5, %c0_83] : memref<10x32xf32, #tpu.memory_space<vmem>>, vector<1x32xf32>
      %c1 = arith.constant 1 : index
      %c0_84 = arith.constant 0 : index
      %195 = vector.load %arg27[%c1, %c0_84] : memref<2x32xf32, #tpu.memory_space<vmem>>, vector<1x32xf32>
      tpu.vector_store %arg27[%c1, %c0_84], %194 {strides = array<i32>} : memref<2x32xf32, #tpu.memory_space<vmem>>, vector<1x32xf32>,
      %c0_85 = arith.constant 0 : index
      %c0_86 = arith.constant 0 : index
      %196 = vector.load %arg27[%c0_85, %c0_86] : memref<2x32xf32, #tpu.memory_space<vmem>>, vector<2x32xf32>
      %c0_87 = arith.constant 0 : index
      %c0_88 = arith.constant 0 : index
      %197 = vector.load %arg20[%c0_87, %c0_88] : memref<1x32xf32, #tpu.memory_space<vmem>>, vector<1x32xf32>
      %c0_89 = arith.constant 0 : index
      %c0_90 = arith.constant 0 : index
      %198 = vector.load %arg21[%c0_89, %c0_90] : memref<1x32xf32, #tpu.memory_space<vmem>>, vector<1x32xf32>
      %cst_91 = arith.constant dense<0.000000e+00> : vector<2xf32>
      %199 = vector.multi_reduction <add>, %196, %cst_91 [1] : vector<2x32xf32> to vector<2xf32>
      %200 = vector.shape_cast %199 : vector<2xf32> to vector<2x1xf32>
      %cst_92 = arith.constant 3.200000e+01 : f32
      %201 = vector.broadcast %cst_92 : f32 to vector<2x1xf32>
      %202 = arith.divf %200, %201 : vector<2x1xf32>
      %203 = vector.broadcast %202 : vector<2x1xf32> to vector<2x32xf32>
      %204 = arith.subf %196, %203 : vector<2x32xf32>
      %205 = arith.mulf %204, %204 : vector<2x32xf32>
      %cst_93 = arith.constant dense<0.000000e+00> : vector<2xf32>
      %206 = vector.multi_reduction <add>, %205, %cst_93 [1] : vector<2x32xf32> to vector<2xf32>
      %207 = vector.shape_cast %206 : vector<2xf32> to vector<2x1xf32>
      %cst_94 = arith.constant 3.200000e+01 : f32
      %208 = vector.broadcast %cst_94 : f32 to vector<2x1xf32>
      %209 = arith.divf %207, %208 : vector<2x1xf32>
      %210 = vector.broadcast %202 : vector<2x1xf32> to vector<2x32xf32>
      %211 = arith.subf %196, %210 : vector<2x32xf32>
      %cst_95 = arith.constant 9.99999974E-6 : f32
      %212 = vector.broadcast %cst_95 : f32 to vector<2x1xf32>
      %213 = arith.addf %209, %212 : vector<2x1xf32>
      %214 = math.rsqrt %213 : vector<2x1xf32>
      %215 = vector.broadcast %214 : vector<2x1xf32> to vector<2x32xf32>
      %216 = arith.mulf %211, %215 : vector<2x32xf32>
      %217 = vector.broadcast %197 : vector<1x32xf32> to vector<2x32xf32>
      %218 = arith.mulf %216, %217 : vector<2x32xf32>
      %219 = vector.broadcast %198 : vector<1x32xf32> to vector<2x32xf32>
      %220 = arith.addf %218, %219 : vector<2x32xf32>
      %221 = arith.truncf %220 : vector<2x32xf32> to vector<2x32xbf16>
      %c0_96 = arith.constant 0 : index
      %c0_97 = arith.constant 0 : index
      %222 = vector.load %arg22[%c0_96, %c0_97] : memref<32x16xbf16, #tpu.memory_space<vmem>>, vector<32x16xbf16>
      %cst_98 = arith.constant dense<0.000000e+00> : vector<2x16xf32>
      %223 = tpu.matmul %221, %222, %cst_98 {dimension_numbers = #tpu.dot_dimension_numbers<[1], [0], [0], [1], [0, 0, 1, 1], [], []>} : vector<2x32xbf16>, vector<32x16xbf16>, vector<2x16xf32> -> vector<2x16xf32>
      %224 = arith.mulf %223, %223 : vector<2x16xf32>
      %cst_99 = arith.constant dense<0.000000e+00> : vector<2xf32>
      %225 = vector.multi_reduction <add>, %224, %cst_99 [1] : vector<2x16xf32> to vector<2xf32>
      %226 = vector.shape_cast %225 : vector<2xf32> to vector<2x1xf32>
      %227 = math.rsqrt %226 : vector<2x1xf32>
      %228 = vector.broadcast %227 : vector<2x1xf32> to vector<2x16xf32>
      %229 = arith.mulf %223, %228 : vector<2x16xf32>
      %c0_100 = arith.constant 0 : index
      %c0_101 = arith.constant 0 : index
      %230 = vector.load %arg23[%c0_100, %c0_101] : memref<6x16xf32, #tpu.memory_space<vmem>>, vector<6x16xf32>
      %231 = arith.mulf %230, %230 : vector<6x16xf32>
      %cst_102 = arith.constant dense<0.000000e+00> : vector<6xf32>
      %232 = vector.multi_reduction <add>, %231, %cst_102 [1] : vector<6x16xf32> to vector<6xf32>
      %233 = vector.shape_cast %232 : vector<6xf32> to vector<6x1xf32>
      %234 = math.rsqrt %233 : vector<6x1xf32>
      %235 = vector.broadcast %234 : vector<6x1xf32> to vector<6x16xf32>
      %236 = arith.mulf %230, %235 : vector<6x16xf32>
      %237 = arith.truncf %229 : vector<2x16xf32> to vector<2x16xbf16>
      %238 = arith.truncf %236 : vector<6x16xf32> to vector<6x16xbf16>
      %cst_103 = arith.constant dense<0.000000e+00> : vector<2x6xf32>
      %239 = tpu.matmul %237, %238, %cst_103 {dimension_numbers = #tpu.dot_dimension_numbers<[1], [1], [0], [0], [0, 0, 1, 0], [], []>} : vector<2x16xbf16>, vector<6x16xbf16>, vector<2x6xf32> -> vector<2x6xf32>
      %c0_104 = arith.constant 0 : index
      %c0_105 = arith.constant 0 : index
      %240 = memref.load %arg24[%c0_104, %c0_105] : memref<1x1xf32, #tpu.memory_space<smem>>
      %241 = math.exp %240 : f32
      %242 = vector.broadcast %241 : f32 to vector<2x6xf32>
      %243 = arith.mulf %242, %239 : vector<2x6xf32>
      %c0_106 = arith.constant 0 : index
      %c0_107 = arith.constant 0 : index
      %244 = vector.load %arg25[%c0_106, %c0_107] : memref<2x6xf32, #tpu.memory_space<vmem>>, vector<2x6xf32>
      tpu.vector_store %arg25[%c0_106, %c0_107], %243 {strides = array<i32>} : memref<2x6xf32, #tpu.memory_space<vmem>>, vector<2x6xf32>,
    } else {
    }
    return
  }
  func.func @transform_0(%arg0: i32) -> (i32, i32) {
    %c0_i32 = arith.constant 0 : i32
    %c0_i32_0 = arith.constant 0 : i32
    %c0_i32_1 = arith.constant 0 : i32
    return %c0_i32, %c0_i32_0 : i32, i32
  }
  func.func @transform_1(%arg0: i32) -> (i32, i32) {
    %c0_i32 = arith.constant 0 : i32
    %c0_i32_0 = arith.constant 0 : i32
    %c0_i32_1 = arith.constant 0 : i32
    return %c0_i32, %c0_i32_0 : i32, i32
  }
  func.func @transform_2(%arg0: i32) -> (i32, i32) {
    %c0_i32 = arith.constant 0 : i32
    %c0_i32_0 = arith.constant 0 : i32
    %c0_i32_1 = arith.constant 0 : i32
    return %c0_i32, %c0_i32_0 : i32, i32
  }
  func.func @transform_3(%arg0: i32) -> (i32, i32) {
    %c0_i32 = arith.constant 0 : i32
    %c0_i32_0 = arith.constant 0 : i32
    %c0_i32_1 = arith.constant 0 : i32
    return %c0_i32, %c0_i32_0 : i32, i32
  }
  func.func @transform_4(%arg0: i32) -> (i32, i32) {
    %c0_i32 = arith.constant 0 : i32
    %c0_i32_0 = arith.constant 0 : i32
    %c0_i32_1 = arith.constant 0 : i32
    return %c0_i32, %c0_i32_0 : i32, i32
  }
  func.func @transform_5(%arg0: i32) -> (i32, i32) {
    %c0_i32 = arith.constant 0 : i32
    %c0_i32_0 = arith.constant 0 : i32
    %c0_i32_1 = arith.constant 0 : i32
    return %c0_i32, %c0_i32_0 : i32, i32
  }
  func.func @transform_6(%arg0: i32) -> (i32, i32) {
    %c0_i32 = arith.constant 0 : i32
    %c0_i32_0 = arith.constant 0 : i32
    %c0_i32_1 = arith.constant 0 : i32
    return %c0_i32, %c0_i32_0 : i32, i32
  }
  func.func @transform_7(%arg0: i32) -> (i32, i32, i32) {
    %c0_i32 = arith.constant 0 : i32
    %c0_i32_0 = arith.constant 0 : i32
    %c0_i32_1 = arith.constant 0 : i32
    return %arg0, %c0_i32, %c0_i32_0 : i32, i32, i32
  }
  func.func @transform_8(%arg0: i32) -> (i32, i32, i32) {
    %c0_i32 = arith.constant 0 : i32
    %c0_i32_0 = arith.constant 0 : i32
    %c0_i32_1 = arith.constant 0 : i32
    return %arg0, %c0_i32, %c0_i32_0 : i32, i32, i32
  }
  func.func @transform_9(%arg0: i32) -> (i32, i32, i32) {
    %c0_i32 = arith.constant 0 : i32
    %c0_i32_0 = arith.constant 0 : i32
    %c0_i32_1 = arith.constant 0 : i32
    return %arg0, %c0_i32, %c0_i32_0 : i32, i32, i32
  }
  func.func @transform_10(%arg0: i32) -> (i32, i32, i32) {
    %c0_i32 = arith.constant 0 : i32
    %c0_i32_0 = arith.constant 0 : i32
    %c0_i32_1 = arith.constant 0 : i32
    return %arg0, %c0_i32, %c0_i32_0 : i32, i32, i32
  }
  func.func @transform_11(%arg0: i32) -> (i32, i32, i32) {
    %c0_i32 = arith.constant 0 : i32
    %c0_i32_0 = arith.constant 0 : i32
    %c0_i32_1 = arith.constant 0 : i32
    return %arg0, %c0_i32, %c0_i32_0 : i32, i32, i32
  }
  func.func @transform_12(%arg0: i32) -> (i32, i32, i32) {
    %c0_i32 = arith.constant 0 : i32
    %c0_i32_0 = arith.constant 0 : i32
    %c0_i32_1 = arith.constant 0 : i32
    return %arg0, %c0_i32, %c0_i32_0 : i32, i32, i32
  }
  func.func @transform_13(%arg0: i32) -> (i32, i32, i32) {
    %c0_i32 = arith.constant 0 : i32
    %c0_i32_0 = arith.constant 0 : i32
    %c0_i32_1 = arith.constant 0 : i32
    return %arg0, %c0_i32, %c0_i32_0 : i32, i32, i32
  }
  func.func @transform_14(%arg0: i32) -> (i32, i32, i32) {
    %c0_i32 = arith.constant 0 : i32
    %c0_i32_0 = arith.constant 0 : i32
    %c0_i32_1 = arith.constant 0 : i32
    return %arg0, %c0_i32, %c0_i32_0 : i32, i32, i32
  }
  func.func @transform_15(%arg0: i32) -> (i32, i32, i32) {
    %c0_i32 = arith.constant 0 : i32
    %c0_i32_0 = arith.constant 0 : i32
    %c0_i32_1 = arith.constant 0 : i32
    return %arg0, %c0_i32, %c0_i32_0 : i32, i32, i32
  }
  func.func @transform_16(%arg0: i32) -> (i32, i32, i32) {
    %c0_i32 = arith.constant 0 : i32
    %c0_i32_0 = arith.constant 0 : i32
    %c0_i32_1 = arith.constant 0 : i32
    return %arg0, %c0_i32, %c0_i32_0 : i32, i32, i32
  }
  func.func @transform_17(%arg0: i32) -> (i32, i32, i32) {
    %c0_i32 = arith.constant 0 : i32
    %c0_i32_0 = arith.constant 0 : i32
    %c0_i32_1 = arith.constant 0 : i32
    return %arg0, %c0_i32, %c0_i32_0 : i32, i32, i32
  }
  func.func @transform_18(%arg0: i32) -> (i32, i32, i32) {
    %c0_i32 = arith.constant 0 : i32
    %c0_i32_0 = arith.constant 0 : i32
    %c0_i32_1 = arith.constant 0 : i32
    return %arg0, %c0_i32, %c0_i32_0 : i32, i32, i32
  }
  func.func @transform_19(%arg0: i32) -> (i32, i32) {
    %c0_i32 = arith.constant 0 : i32
    %c0_i32_0 = arith.constant 0 : i32
    %c0_i32_1 = arith.constant 0 : i32
    return %c0_i32, %c0_i32_0 : i32, i32
  }
  func.func @transform_20(%arg0: i32) -> (i32, i32) {
    %c0_i32 = arith.constant 0 : i32
    %c0_i32_0 = arith.constant 0 : i32
    %c0_i32_1 = arith.constant 0 : i32
    return %c0_i32, %c0_i32_0 : i32, i32
  }
  func.func @transform_21(%arg0: i32) -> (i32, i32) {
    %c0_i32 = arith.constant 0 : i32
    %c0_i32_0 = arith.constant 0 : i32
    %c0_i32_1 = arith.constant 0 : i32
    return %c0_i32, %c0_i32_0 : i32, i32
  }
  func.func @transform_22(%arg0: i32) -> (i32, i32) {
    %c0_i32 = arith.constant 0 : i32
    %c0_i32_0 = arith.constant 0 : i32
    %c0_i32_1 = arith.constant 0 : i32
    return %c0_i32, %c0_i32_0 : i32, i32
  }
  func.func @transform_23(%arg0: i32) -> (i32, i32) {
    %c0_i32 = arith.constant 0 : i32
    %c0_i32_0 = arith.constant 0 : i32
    %c0_i32_1 = arith.constant 0 : i32
    return %c0_i32, %c0_i32_0 : i32, i32
  }
  func.func @transform_24(%arg0: i32) -> (i32, i32) {
    %c0_i32 = arith.constant 0 : i32
    %c0_i32_0 = arith.constant 0 : i32
    %c0_i32_1 = arith.constant 0 : i32
    return %c0_i32, %c0_i32_0 : i32, i32
  }
}

</mosaic_0001>

<llo_original>
// kernel: vision_clip_forward.1
$region0: #{vision_clip_forward.1}
  #allocation0 [shape = 'u32[]', space=smem, size = 0x4, offset = 0x4, fixed_abs, tag = 'smem constant byte address 0x4 - core index']
  #allocation1 [shape = 'u32[144,128]{1,0:T(1,128)}', space=vmem, size = 0x12000, scoped, tag = 'internal scratch']
  #allocation2 [shape = 'f32[10,32]{1,0:T(8,128)}', space=vmem, size = 0x2000, scoped, tag = 'scratch operand']
  #allocation3 [shape = 'f32[2,32]{1,0:T(2,128)}', space=vmem, size = 0x400, scoped, tag = 'scratch operand']
  #allocation4 [shape = 'f32[1,1]{1,0:T(1,128)S(6)}', space=smem, size = 0x200, scoped, tag = 'scoped memory for vision_clip_forward.1']
  %s0 = inlined_call_operand.vmem [shape: bf16[8,768], index: 0, kind: input, shape index: {}]
  %s1 = inlined_call_operand.vmem [shape: bf16[768,32], index: 1, kind: input, shape index: {}]
  %s2 = inlined_call_operand.vmem [shape: f32[1,32], index: 2, kind: input, shape index: {}]
  %s3 = inlined_call_operand.vmem [shape: f32[5,32], index: 3, kind: input, shape index: {}]
  %s4 = inlined_call_operand.vmem [shape: f32[1,32], index: 4, kind: input, shape index: {}]
  %s5 = inlined_call_operand.vmem [shape: f32[1,32], index: 5, kind: input, shape index: {}]
  %s6 = inlined_call_operand.vmem [shape: f32[10,10], index: 6, kind: input, shape index: {}]
  %s7 = inlined_call_operand.vmem [shape: f32[2,1,32], index: 7, kind: input, shape index: {}]
  %s8 = inlined_call_operand.vmem [shape: f32[2,1,32], index: 8, kind: input, shape index: {}]
  %s9 = inlined_call_operand.vmem [shape: bf16[2,32,96], index: 9, kind: input, shape index: {}]
  %s10 = inlined_call_operand.vmem [shape: f32[2,1,96], index: 10, kind: input, shape index: {}]
  %s11 = inlined_call_operand.vmem [shape: bf16[2,32,32], index: 11, kind: input, shape index: {}]
  %s12 = inlined_call_operand.vmem [shape: f32[2,1,32], index: 12, kind: input, shape index: {}]
  %s13 = inlined_call_operand.vmem [shape: f32[2,1,32], index: 13, kind: input, shape index: {}]
  %s14 = inlined_call_operand.vmem [shape: f32[2,1,32], index: 14, kind: input, shape index: {}]
  %s15 = inlined_call_operand.vmem [shape: bf16[2,32,128], index: 15, kind: input, shape index: {}]
  %s16 = inlined_call_operand.vmem [shape: f32[2,1,128], index: 16, kind: input, shape index: {}]
  %s17 = inlined_call_operand.vmem [shape: bf16[2,128,32], index: 17, kind: input, shape index: {}]
  %s18 = inlined_call_operand.vmem [shape: f32[2,1,32], index: 18, kind: input, shape index: {}]
  %s19 = inlined_call_operand.vmem [shape: f32[1,32], index: 19, kind: input, shape index: {}]
  %s20 = inlined_call_operand.vmem [shape: f32[1,32], index: 20, kind: input, shape index: {}]
  %s21 = inlined_call_operand.vmem [shape: bf16[32,16], index: 21, kind: input, shape index: {}]
  %s22 = inlined_call_operand.vmem [shape: f32[6,16], index: 22, kind: input, shape index: {}]
  %s23 = inlined_call_operand.<no memory space> [shape: f32[1,1], index: 23, kind: input, shape index: {}]
  %s24 = inlined_call_operand.hbm [shape: f32[2,6], index: 24, kind: output, shape index: {}]
  %s25 = sld [smem:[#allocation0]]
  $region137: #{vision_clip_forward.1} parent=0
    _
  %s27 = ssub.s32 1, %s25
  %s28 = scalar_select 0, %s27, %s25
  %29 = sst [smem:[#allocation4]] %s23
  $region1: #{vision_clip_forward.1} parent=0
    #allocation5 [shape = 'u8[1024]{0}', space=vmem, size = 0x400, scoped, tag = 'output window, operand 0, single buffered']
    #allocation6 [shape = 's32[2]{0}', space=sflag, size = 0x8, scoped, tag = 'scoped memory for vision_clip_forward.1']
    %30 = vsyncpa [#allocation6], 0
    loop: start=0, step=1, limit=4
    $region2: #{vision_clip_forward.1} parent=1 // loop_pre_header
      _
    $region3: #{vision_clip_forward.1} parent=1 // loop_header
      %s32 = sphi 0, %s36
      %p33 = scmp.ge.s32.totalorder %s32, 4
      %s40 = sphi 0, %s40
      %s42 = sphi 0, %s40
      %s43 = sphi 0, %s42
      %s57 = sphi 0, %s43
      %s61 = sphi 0, %s61
      %s63 = sphi 0, %s61
      %s64 = sphi 0, %s63
      %s78 = sphi 0, %s64
      %s82 = sphi 0, %s82
      %s84 = sphi 0, %s82
      %s85 = sphi 0, %s84
      %s99 = sphi 0, %s85
      %s103 = sphi 0, %s103
      %s105 = sphi 0, %s103
      %s106 = sphi 0, %s105
      %s120 = sphi 0, %s106
      %s124 = sphi 0, %s124
      %s126 = sphi 0, %s124
      %s127 = sphi 0, %s126
      %s141 = sphi 0, %s127
      %s145 = sphi 0, %s145
      %s147 = sphi 0, %s145
      %s148 = sphi 0, %s147
      %s162 = sphi 0, %s148
      %s166 = sphi 0, %s166
      %s168 = sphi 0, %s166
      %s169 = sphi 0, %s168
      %s183 = sphi 0, %s169
      %s189 = sphi 0, %s191
      %s192 = sphi 0, %s189
      %s193 = sphi 0, %s192
      %s209 = sphi 0, %s193
      %s215 = sphi 0, %s217
      %s218 = sphi 0, %s215
      %s219 = sphi 0, %s218
      %s235 = sphi 0, %s219
      %s241 = sphi 0, %s243
      %s244 = sphi 0, %s241
      %s245 = sphi 0, %s244
      %s261 = sphi 0, %s245
      %s267 = sphi 0, %s269
      %s270 = sphi 0, %s267
      %s271 = sphi 0, %s270
      %s287 = sphi 0, %s271
      %s293 = sphi 0, %s295
      %s296 = sphi 0, %s293
      %s297 = sphi 0, %s296
      %s313 = sphi 0, %s297
      %s319 = sphi 0, %s321
      %s322 = sphi 0, %s319
      %s323 = sphi 0, %s322
      %s339 = sphi 0, %s323
      %s345 = sphi 0, %s347
      %s348 = sphi 0, %s345
      %s349 = sphi 0, %s348
      %s365 = sphi 0, %s349
      %s371 = sphi 0, %s373
      %s374 = sphi 0, %s371
      %s375 = sphi 0, %s374
      %s391 = sphi 0, %s375
      %s397 = sphi 0, %s399
      %s400 = sphi 0, %s397
      %s401 = sphi 0, %s400
      %s417 = sphi 0, %s401
      %s423 = sphi 0, %s425
      %s426 = sphi 0, %s423
      %s427 = sphi 0, %s426
      %s443 = sphi 0, %s427
      %s449 = sphi 0, %s451
      %s452 = sphi 0, %s449
      %s453 = sphi 0, %s452
      %s469 = sphi 0, %s453
      %s475 = sphi 0, %s477
      %s478 = sphi 0, %s475
      %s479 = sphi 0, %s478
      %s495 = sphi 0, %s479
      %s499 = sphi 0, %s499
      %s501 = sphi 0, %s499
      %s502 = sphi 0, %s501
      %s516 = sphi 0, %s502
      %s520 = sphi 0, %s520
      %s522 = sphi 0, %s520
      %s523 = sphi 0, %s522
      %s537 = sphi 0, %s523
      %s541 = sphi 0, %s541
      %s543 = sphi 0, %s541
      %s544 = sphi 0, %s543
      %s558 = sphi 0, %s544
      %s562 = sphi 0, %s562
      %s564 = sphi 0, %s562
      %s565 = sphi 0, %s564
      %s579 = sphi 0, %s565
      %s583 = sphi 0, %s583
      %s585 = sphi 0, %s583
      %s586 = sphi 0, %s585
      %s600 = sphi 0, %s586
      %s604 = sphi 0, %s604
      %s606 = sphi 0, %s604
      %s607 = sphi 0, %s606
      %s621 = sphi 0, %s607
    $region4: #{vision_clip_forward.1} parent=1 // loop_header_branch
      %35 = sbr.rel (%p33) target = $region8
    $region5: #{vision_clip_forward.1} parent=1 // loop_body
      %s37 = ssub.s32 %s32, 1
      %s38 = ssub.s32 %s32, 2
      %s39 = sadd.s32 %s32, 1
      %s41 = sadd.s32 %s40, 1
      %p44 = scmp.eq.s32.totalorder %s32, 1
      %p45 = scmp.ne.s32.totalorder %s40, %s42
      %p46 = scmp.eq.s32.totalorder %s32, 0
      %p47 = por %p45, %p46
      %p48 = scmp.ne.s32.totalorder %s40, %s42
      %p49 = scmp.eq.s32.totalorder %s37, 1
      %p50 = por %p48, %p49
      %p51 = scmp.ne.s32.totalorder %s42, %s43
      %p52 = scmp.eq.s32.totalorder %s37, 0
      %p53 = por %p51, %p52
      %p54 = scmp.ne.s32.totalorder %s42, %s43
      %p55 = scmp.eq.s32.totalorder %s38, 1
      %p56 = por %p54, %p55
      %p58 = scmp.ne.s32.totalorder %s43, %s57
      %p59 = scmp.eq.s32.totalorder %s38, 0
      %p60 = por %p58, %p59
      %s62 = sadd.s32 %s61, 1
      %p65 = scmp.eq.s32.totalorder %s32, 1
      %p66 = scmp.ne.s32.totalorder %s61, %s63
      %p67 = scmp.eq.s32.totalorder %s32, 0
      %p68 = por %p66, %p67
      %p69 = scmp.ne.s32.totalorder %s61, %s63
      %p70 = scmp.eq.s32.totalorder %s37, 1
      %p71 = por %p69, %p70
      %p72 = scmp.ne.s32.totalorder %s63, %s64
      %p73 = scmp.eq.s32.totalorder %s37, 0
      %p74 = por %p72, %p73
      %p75 = scmp.ne.s32.totalorder %s63, %s64
      %p76 = scmp.eq.s32.totalorder %s38, 1
      %p77 = por %p75, %p76
      %p79 = scmp.ne.s32.totalorder %s64, %s78
      %p80 = scmp.eq.s32.totalorder %s38, 0
      %p81 = por %p79, %p80
      %s83 = sadd.s32 %s82, 1
      %p86 = scmp.eq.s32.totalorder %s32, 1
      %p87 = scmp.ne.s32.totalorder %s82, %s84
      %p88 = scmp.eq.s32.totalorder %s32, 0
      %p89 = por %p87, %p88
      %p90 = scmp.ne.s32.totalorder %s82, %s84
      %p91 = scmp.eq.s32.totalorder %s37, 1
      %p92 = por %p90, %p91
      %p93 = scmp.ne.s32.totalorder %s84, %s85
      %p94 = scmp.eq.s32.totalorder %s37, 0
      %p95 = por %p93, %p94
      %p96 = scmp.ne.s32.totalorder %s84, %s85
      %p97 = scmp.eq.s32.totalorder %s38, 1
      %p98 = por %p96, %p97
      %p100 = scmp.ne.s32.totalorder %s85, %s99
      %p101 = scmp.eq.s32.totalorder %s38, 0
      %p102 = por %p100, %p101
      %s104 = sadd.s32 %s103, 1
      %p107 = scmp.eq.s32.totalorder %s32, 1
      %p108 = scmp.ne.s32.totalorder %s103, %s105
      %p109 = scmp.eq.s32.totalorder %s32, 0
      %p110 = por %p108, %p109
      %p111 = scmp.ne.s32.totalorder %s103, %s105
      %p112 = scmp.eq.s32.totalorder %s37, 1
      %p113 = por %p111, %p112
      %p114 = scmp.ne.s32.totalorder %s105, %s106
      %p115 = scmp.eq.s32.totalorder %s37, 0
      %p116 = por %p114, %p115
      %p117 = scmp.ne.s32.totalorder %s105, %s106
      %p118 = scmp.eq.s32.totalorder %s38, 1
      %p119 = por %p117, %p118
      %p121 = scmp.ne.s32.totalorder %s106, %s120
      %p122 = scmp.eq.s32.totalorder %s38, 0
      %p123 = por %p121, %p122
      %s125 = sadd.s32 %s124, 1
      %p128 = scmp.eq.s32.totalorder %s32, 1
      %p129 = scmp.ne.s32.totalorder %s124, %s126
      %p130 = scmp.eq.s32.totalorder %s32, 0
      %p131 = por %p129, %p130
      %p132 = scmp.ne.s32.totalorder %s124, %s126
      %p133 = scmp.eq.s32.totalorder %s37, 1
      %p134 = por %p132, %p133
      %p135 = scmp.ne.s32.totalorder %s126, %s127
      %p136 = scmp.eq.s32.totalorder %s37, 0
      %p137 = por %p135, %p136
      %p138 = scmp.ne.s32.totalorder %s126, %s127
      %p139 = scmp.eq.s32.totalorder %s38, 1
      %p140 = por %p138, %p139
      %p142 = scmp.ne.s32.totalorder %s127, %s141
      %p143 = scmp.eq.s32.totalorder %s38, 0
      %p144 = por %p142, %p143
      %s146 = sadd.s32 %s145, 1
      %p149 = scmp.eq.s32.totalorder %s32, 1
      %p150 = scmp.ne.s32.totalorder %s145, %s147
      %p151 = scmp.eq.s32.totalorder %s32, 0
      %p152 = por %p150, %p151
      %p153 = scmp.ne.s32.totalorder %s145, %s147
      %p154 = scmp.eq.s32.totalorder %s37, 1
      %p155 = por %p153, %p154
      %p156 = scmp.ne.s32.totalorder %s147, %s148
      %p157 = scmp.eq.s32.totalorder %s37, 0
      %p158 = por %p156, %p157
      %p159 = scmp.ne.s32.totalorder %s147, %s148
      %p160 = scmp.eq.s32.totalorder %s38, 1
      %p161 = por %p159, %p160
      %p163 = scmp.ne.s32.totalorder %s148, %s162
      %p164 = scmp.eq.s32.totalorder %s38, 0
      %p165 = por %p163, %p164
      %s167 = sadd.s32 %s166, 1
      %p170 = scmp.eq.s32.totalorder %s32, 1
      %p171 = scmp.ne.s32.totalorder %s166, %s168
      %p172 = scmp.eq.s32.totalorder %s32, 0
      %p173 = por %p171, %p172
      %p174 = scmp.ne.s32.totalorder %s166, %s168
      %p175 = scmp.eq.s32.totalorder %s37, 1
      %p176 = por %p174, %p175
      %p177 = scmp.ne.s32.totalorder %s168, %s169
      %p178 = scmp.eq.s32.totalorder %s37, 0
      %p179 = por %p177, %p178
      %p180 = scmp.ne.s32.totalorder %s168, %s169
      %p181 = scmp.eq.s32.totalorder %s38, 1
      %p182 = por %p180, %p181
      %p184 = scmp.ne.s32.totalorder %s169, %s183
      %p185 = scmp.eq.s32.totalorder %s38, 0
      %p186 = por %p184, %p185
      %s187 = ssub.s32 %s32, %s39
      %p188 = scmp.eq.s32.totalorder %s187, 0
      %s190 = sadd.s32 %s189, 1
      %s191 = scalar_select %p188, %s189, %s190
      %p194 = pneg %p188
      %p195 = scmp.eq.s32.totalorder %s32, 1
      %p196 = por %p194, %p195
      %p197 = scmp.ne.s32.totalorder %s189, %s192
      %p198 = scmp.eq.s32.totalorder %s32, 0
      %p199 = por %p197, %p198
      %p200 = scmp.ne.s32.totalorder %s189, %s192
      %p201 = scmp.eq.s32.totalorder %s37, 1
      %p202 = por %p200, %p201
      %p203 = scmp.ne.s32.totalorder %s192, %s193
      %p204 = scmp.eq.s32.totalorder %s37, 0
      %p205 = por %p203, %p204
      %p206 = scmp.ne.s32.totalorder %s192, %s193
      %p207 = scmp.eq.s32.totalorder %s38, 1
      %p208 = por %p206, %p207
      %p210 = scmp.ne.s32.totalorder %s193, %s209
      %p211 = scmp.eq.s32.totalorder %s38, 0
      %p212 = por %p210, %p211
      %s213 = ssub.s32 %s32, %s39
      %p214 = scmp.eq.s32.totalorder %s213, 0
      %s216 = sadd.s32 %s215, 1
      %s217 = scalar_select %p214, %s215, %s216
      %p220 = pneg %p214
      %p221 = scmp.eq.s32.totalorder %s32, 1
      %p222 = por %p220, %p221
      %p223 = scmp.ne.s32.totalorder %s215, %s218
      %p224 = scmp.eq.s32.totalorder %s32, 0
      %p225 = por %p223, %p224
      %p226 = scmp.ne.s32.totalorder %s215, %s218
      %p227 = scmp.eq.s32.totalorder %s37, 1
      %p228 = por %p226, %p227
      %p229 = scmp.ne.s32.totalorder %s218, %s219
      %p230 = scmp.eq.s32.totalorder %s37, 0
      %p231 = por %p229, %p230
      %p232 = scmp.ne.s32.totalorder %s218, %s219
      %p233 = scmp.eq.s32.totalorder %s38, 1
      %p234 = por %p232, %p233
      %p236 = scmp.ne.s32.totalorder %s219, %s235
      %p237 = scmp.eq.s32.totalorder %s38, 0
      %p238 = por %p236, %p237
      %s239 = ssub.s32 %s32, %s39
      %p240 = scmp.eq.s32.totalorder %s239, 0
      %s242 = sadd.s32 %s241, 1
      %s243 = scalar_select %p240, %s241, %s242
      %p246 = pneg %p240
      %p247 = scmp.eq.s32.totalorder %s32, 1
      %p248 = por %p246, %p247
      %p249 = scmp.ne.s32.totalorder %s241, %s244
      %p250 = scmp.eq.s32.totalorder %s32, 0
      %p251 = por %p249, %p250
      %p252 = scmp.ne.s32.totalorder %s241, %s244
      %p253 = scmp.eq.s32.totalorder %s37, 1
      %p254 = por %p252, %p253
      %p255 = scmp.ne.s32.totalorder %s244, %s245
      %p256 = scmp.eq.s32.totalorder %s37, 0
      %p257 = por %p255, %p256
      %p258 = scmp.ne.s32.totalorder %s244, %s245
      %p259 = scmp.eq.s32.totalorder %s38, 1
      %p260 = por %p258, %p259
      %p262 = scmp.ne.s32.totalorder %s245, %s261
      %p263 = scmp.eq.s32.totalorder %s38, 0
      %p264 = por %p262, %p263
      %s265 = ssub.s32 %s32, %s39
      %p266 = scmp.eq.s32.totalorder %s265, 0
      %s268 = sadd.s32 %s267, 1
      %s269 = scalar_select %p266, %s267, %s268
      %p272 = pneg %p266
      %p273 = scmp.eq.s32.totalorder %s32, 1
      %p274 = por %p272, %p273
      %p275 = scmp.ne.s32.totalorder %s267, %s270
      %p276 = scmp.eq.s32.totalorder %s32, 0
      %p277 = por %p275, %p276
      %p278 = scmp.ne.s32.totalorder %s267, %s270
      %p279 = scmp.eq.s32.totalorder %s37, 1
      %p280 = por %p278, %p279
      %p281 = scmp.ne.s32.totalorder %s270, %s271
      %p282 = scmp.eq.s32.totalorder %s37, 0
      %p283 = por %p281, %p282
      %p284 = scmp.ne.s32.totalorder %s270, %s271
      %p285 = scmp.eq.s32.totalorder %s38, 1
      %p286 = por %p284, %p285
      %p288 = scmp.ne.s32.totalorder %s271, %s287
      %p289 = scmp.eq.s32.totalorder %s38, 0
      %p290 = por %p288, %p289
      %s291 = ssub.s32 %s32, %s39
      %p292 = scmp.eq.s32.totalorder %s291, 0
      %s294 = sadd.s32 %s293, 1
      %s295 = scalar_select %p292, %s293, %s294
      %p298 = pneg %p292
      %p299 = scmp.eq.s32.totalorder %s32, 1
      %p300 = por %p298, %p299
      %p301 = scmp.ne.s32.totalorder %s293, %s296
      %p302 = scmp.eq.s32.totalorder %s32, 0
      %p303 = por %p301, %p302
      %p304 = scmp.ne.s32.totalorder %s293, %s296
      %p305 = scmp.eq.s32.totalorder %s37, 1
      %p306 = por %p304, %p305
      %p307 = scmp.ne.s32.totalorder %s296, %s297
      %p308 = scmp.eq.s32.totalorder %s37, 0
      %p309 = por %p307, %p308
      %p310 = scmp.ne.s32.totalorder %s296, %s297
      %p311 = scmp.eq.s32.totalorder %s38, 1
      %p312 = por %p310, %p311
      %p314 = scmp.ne.s32.totalorder %s297, %s313
      %p315 = scmp.eq.s32.totalorder %s38, 0
      %p316 = por %p314, %p315
      %s317 = ssub.s32 %s32, %s39
      %p318 = scmp.eq.s32.totalorder %s317, 0
      %s320 = sadd.s32 %s319, 1
      %s321 = scalar_select %p318, %s319, %s320
      %p324 = pneg %p318
      %p325 = scmp.eq.s32.totalorder %s32, 1
      %p326 = por %p324, %p325
      %p327 = scmp.ne.s32.totalorder %s319, %s322
      %p328 = scmp.eq.s32.totalorder %s32, 0
      %p329 = por %p327, %p328
      %p330 = scmp.ne.s32.totalorder %s319, %s322
      %p331 = scmp.eq.s32.totalorder %s37, 1
      %p332 = por %p330, %p331
      %p333 = scmp.ne.s32.totalorder %s322, %s323
      %p334 = scmp.eq.s32.totalorder %s37, 0
      %p335 = por %p333, %p334
      %p336 = scmp.ne.s32.totalorder %s322, %s323
      %p337 = scmp.eq.s32.totalorder %s38, 1
      %p338 = por %p336, %p337
      %p340 = scmp.ne.s32.totalorder %s323, %s339
      %p341 = scmp.eq.s32.totalorder %s38, 0
      %p342 = por %p340, %p341
      %s343 = ssub.s32 %s32, %s39
      %p344 = scmp.eq.s32.totalorder %s343, 0
      %s346 = sadd.s32 %s345, 1
      %s347 = scalar_select %p344, %s345, %s346
      %p350 = pneg %p344
      %p351 = scmp.eq.s32.totalorder %s32, 1
      %p352 = por %p350, %p351
      %p353 = scmp.ne.s32.totalorder %s345, %s348
      %p354 = scmp.eq.s32.totalorder %s32, 0
      %p355 = por %p353, %p354
      %p356 = scmp.ne.s32.totalorder %s345, %s348
      %p357 = scmp.eq.s32.totalorder %s37, 1
      %p358 = por %p356, %p357
      %p359 = scmp.ne.s32.totalorder %s348, %s349
      %p360 = scmp.eq.s32.totalorder %s37, 0
      %p361 = por %p359, %p360
      %p362 = scmp.ne.s32.totalorder %s348, %s349
      %p363 = scmp.eq.s32.totalorder %s38, 1
      %p364 = por %p362, %p363
      %p366 = scmp.ne.s32.totalorder %s349, %s365
      %p367 = scmp.eq.s32.totalorder %s38, 0
      %p368 = por %p366, %p367
      %s369 = ssub.s32 %s32, %s39
      %p370 = scmp.eq.s32.totalorder %s369, 0
      %s372 = sadd.s32 %s371, 1
      %s373 = scalar_select %p370, %s371, %s372
      %p376 = pneg %p370
      %p377 = scmp.eq.s32.totalorder %s32, 1
      %p378 = por %p376, %p377
      %p379 = scmp.ne.s32.totalorder %s371, %s374
      %p380 = scmp.eq.s32.totalorder %s32, 0
      %p381 = por %p379, %p380
      %p382 = scmp.ne.s32.totalorder %s371, %s374
      %p383 = scmp.eq.s32.totalorder %s37, 1
      %p384 = por %p382, %p383
      %p385 = scmp.ne.s32.totalorder %s374, %s375
      %p386 = scmp.eq.s32.totalorder %s37, 0
      %p387 = por %p385, %p386
      %p388 = scmp.ne.s32.totalorder %s374, %s375
      %p389 = scmp.eq.s32.totalorder %s38, 1
      %p390 = por %p388, %p389
      %p392 = scmp.ne.s32.totalorder %s375, %s391
      %p393 = scmp.eq.s32.totalorder %s38, 0
      %p394 = por %p392, %p393
      %s395 = ssub.s32 %s32, %s39
      %p396 = scmp.eq.s32.totalorder %s395, 0
      %s398 = sadd.s32 %s397, 1
      %s399 = scalar_select %p396, %s397, %s398
      %p402 = pneg %p396
      %p403 = scmp.eq.s32.totalorder %s32, 1
      %p404 = por %p402, %p403
      %p405 = scmp.ne.s32.totalorder %s397, %s400
      %p406 = scmp.eq.s32.totalorder %s32, 0
      %p407 = por %p405, %p406
      %p408 = scmp.ne.s32.totalorder %s397, %s400
      %p409 = scmp.eq.s32.totalorder %s37, 1
      %p410 = por %p408, %p409
      %p411 = scmp.ne.s32.totalorder %s400, %s401
      %p412 = scmp.eq.s32.totalorder %s37, 0
      %p413 = por %p411, %p412
      %p414 = scmp.ne.s32.totalorder %s400, %s401
      %p415 = scmp.eq.s32.totalorder %s38, 1
      %p416 = por %p414, %p415
      %p418 = scmp.ne.s32.totalorder %s401, %s417
      %p419 = scmp.eq.s32.totalorder %s38, 0
      %p420 = por %p418, %p419
      %s421 = ssub.s32 %s32, %s39
      %p422 = scmp.eq.s32.totalorder %s421, 0
      %s424 = sadd.s32 %s423, 1
      %s425 = scalar_select %p422, %s423, %s424
      %p428 = pneg %p422
      %p429 = scmp.eq.s32.totalorder %s32, 1
      %p430 = por %p428, %p429
      %p431 = scmp.ne.s32.totalorder %s423, %s426
      %p432 = scmp.eq.s32.totalorder %s32, 0
      %p433 = por %p431, %p432
      %p434 = scmp.ne.s32.totalorder %s423, %s426
      %p435 = scmp.eq.s32.totalorder %s37, 1
      %p436 = por %p434, %p435
      %p437 = scmp.ne.s32.totalorder %s426, %s427
      %p438 = scmp.eq.s32.totalorder %s37, 0
      %p439 = por %p437, %p438
      %p440 = scmp.ne.s32.totalorder %s426, %s427
      %p441 = scmp.eq.s32.totalorder %s38, 1
      %p442 = por %p440, %p441
      %p444 = scmp.ne.s32.totalorder %s427, %s443
      %p445 = scmp.eq.s32.totalorder %s38, 0
      %p446 = por %p444, %p445
      %s447 = ssub.s32 %s32, %s39
      %p448 = scmp.eq.s32.totalorder %s447, 0
      %s450 = sadd.s32 %s449, 1
      %s451 = scalar_select %p448, %s449, %s450
      %p454 = pneg %p448
      %p455 = scmp.eq.s32.totalorder %s32, 1
      %p456 = por %p454, %p455
      %p457 = scmp.ne.s32.totalorder %s449, %s452
      %p458 = scmp.eq.s32.totalorder %s32, 0
      %p459 = por %p457, %p458
      %p460 = scmp.ne.s32.totalorder %s449, %s452
      %p461 = scmp.eq.s32.totalorder %s37, 1
      %p462 = por %p460, %p461
      %p463 = scmp.ne.s32.totalorder %s452, %s453
      %p464 = scmp.eq.s32.totalorder %s37, 0
      %p465 = por %p463, %p464
      %p466 = scmp.ne.s32.totalorder %s452, %s453
      %p467 = scmp.eq.s32.totalorder %s38, 1
      %p468 = por %p466, %p467
      %p470 = scmp.ne.s32.totalorder %s453, %s469
      %p471 = scmp.eq.s32.totalorder %s38, 0
      %p472 = por %p470, %p471
      %s473 = ssub.s32 %s32, %s39
      %p474 = scmp.eq.s32.totalorder %s473, 0
      %s476 = sadd.s32 %s475, 1
      %s477 = scalar_select %p474, %s475, %s476
      %p480 = pneg %p474
      %p481 = scmp.eq.s32.totalorder %s32, 1
      %p482 = por %p480, %p481
      %p483 = scmp.ne.s32.totalorder %s475, %s478
      %p484 = scmp.eq.s32.totalorder %s32, 0
      %p485 = por %p483, %p484
      %p486 = scmp.ne.s32.totalorder %s475, %s478
      %p487 = scmp.eq.s32.totalorder %s37, 1
      %p488 = por %p486, %p487
      %p489 = scmp.ne.s32.totalorder %s478, %s479
      %p490 = scmp.eq.s32.totalorder %s37, 0
      %p491 = por %p489, %p490
      %p492 = scmp.ne.s32.totalorder %s478, %s479
      %p493 = scmp.eq.s32.totalorder %s38, 1
      %p494 = por %p492, %p493
      %p496 = scmp.ne.s32.totalorder %s479, %s495
      %p497 = scmp.eq.s32.totalorder %s38, 0
      %p498 = por %p496, %p497
      %s500 = sadd.s32 %s499, 1
      %p503 = scmp.eq.s32.totalorder %s32, 1
      %p504 = scmp.ne.s32.totalorder %s499, %s501
      %p505 = scmp.eq.s32.totalorder %s32, 0
      %p506 = por %p504, %p505
      %p507 = scmp.ne.s32.totalorder %s499, %s501
      %p508 = scmp.eq.s32.totalorder %s37, 1
      %p509 = por %p507, %p508
      %p510 = scmp.ne.s32.totalorder %s501, %s502
      %p511 = scmp.eq.s32.totalorder %s37, 0
      %p512 = por %p510, %p511
      %p513 = scmp.ne.s32.totalorder %s501, %s502
      %p514 = scmp.eq.s32.totalorder %s38, 1
      %p515 = por %p513, %p514
      %p517 = scmp.ne.s32.totalorder %s502, %s516
      %p518 = scmp.eq.s32.totalorder %s38, 0
      %p519 = por %p517, %p518
      %s521 = sadd.s32 %s520, 1
      %p524 = scmp.eq.s32.totalorder %s32, 1
      %p525 = scmp.ne.s32.totalorder %s520, %s522
      %p526 = scmp.eq.s32.totalorder %s32, 0
      %p527 = por %p525, %p526
      %p528 = scmp.ne.s32.totalorder %s520, %s522
      %p529 = scmp.eq.s32.totalorder %s37, 1
      %p530 = por %p528, %p529
      %p531 = scmp.ne.s32.totalorder %s522, %s523
      %p532 = scmp.eq.s32.totalorder %s37, 0
      %p533 = por %p531, %p532
      %p534 = scmp.ne.s32.totalorder %s522, %s523
      %p535 = scmp.eq.s32.totalorder %s38, 1
      %p536 = por %p534, %p535
      %p538 = scmp.ne.s32.totalorder %s523, %s537
      %p539 = scmp.eq.s32.totalorder %s38, 0
      %p540 = por %p538, %p539
      %s542 = sadd.s32 %s541, 1
      %p545 = scmp.eq.s32.totalorder %s32, 1
      %p546 = scmp.ne.s32.totalorder %s541, %s543
      %p547 = scmp.eq.s32.totalorder %s32, 0
      %p548 = por %p546, %p547
      %p549 = scmp.ne.s32.totalorder %s541, %s543
      %p550 = scmp.eq.s32.totalorder %s37, 1
      %p551 = por %p549, %p550
      %p552 = scmp.ne.s32.totalorder %s543, %s544
      %p553 = scmp.eq.s32.totalorder %s37, 0
      %p554 = por %p552, %p553
      %p555 = scmp.ne.s32.totalorder %s543, %s544
      %p556 = scmp.eq.s32.totalorder %s38, 1
      %p557 = por %p555, %p556
      %p559 = scmp.ne.s32.totalorder %s544, %s558
      %p560 = scmp.eq.s32.totalorder %s38, 0
      %p561 = por %p559, %p560
      %s563 = sadd.s32 %s562, 1
      %p566 = scmp.eq.s32.totalorder %s32, 1
      %p567 = scmp.ne.s32.totalorder %s562, %s564
      %p568 = scmp.eq.s32.totalorder %s32, 0
      %p569 = por %p567, %p568
      %p570 = scmp.ne.s32.totalorder %s562, %s564
      %p571 = scmp.eq.s32.totalorder %s37, 1
      %p572 = por %p570, %p571
      %p573 = scmp.ne.s32.totalorder %s564, %s565
      %p574 = scmp.eq.s32.totalorder %s37, 0
      %p575 = por %p573, %p574
      %p576 = scmp.ne.s32.totalorder %s564, %s565
      %p577 = scmp.eq.s32.totalorder %s38, 1
      %p578 = por %p576, %p577
      %p580 = scmp.ne.s32.totalorder %s565, %s579
      %p581 = scmp.eq.s32.totalorder %s38, 0
      %p582 = por %p580, %p581
      %s584 = sadd.s32 %s583, 1
      %p587 = scmp.eq.s32.totalorder %s32, 1
      %p588 = scmp.ne.s32.totalorder %s583, %s585
      %p589 = scmp.eq.s32.totalorder %s32, 0
      %p590 = por %p588, %p589
      %p591 = scmp.ne.s32.totalorder %s583, %s585
      %p592 = scmp.eq.s32.totalorder %s37, 1
      %p593 = por %p591, %p592
      %p594 = scmp.ne.s32.totalorder %s585, %s586
      %p595 = scmp.eq.s32.totalorder %s37, 0
      %p596 = por %p594, %p595
      %p597 = scmp.ne.s32.totalorder %s585, %s586
      %p598 = scmp.eq.s32.totalorder %s38, 1
      %p599 = por %p597, %p598
      %p601 = scmp.ne.s32.totalorder %s586, %s600
      %p602 = scmp.eq.s32.totalorder %s38, 0
      %p603 = por %p601, %p602
      %s605 = sadd.s32 %s604, 1
      %p608 = scmp.eq.s32.totalorder %s32, 1
      %p609 = scmp.ne.s32.totalorder %s604, %s606
      %p610 = scmp.eq.s32.totalorder %s32, 0
      %p611 = por %p609, %p610
      %p612 = scmp.ne.s32.totalorder %s604, %s606
      %p613 = scmp.eq.s32.totalorder %s37, 1
      %p614 = por %p612, %p613
      %p615 = scmp.ne.s32.totalorder %s606, %s607
      %p616 = scmp.eq.s32.totalorder %s37, 0
      %p617 = por %p615, %p616
      %p618 = scmp.ne.s32.totalorder %s606, %s607
      %p619 = scmp.eq.s32.totalorder %s38, 1
      %p620 = por %p618, %p619
      %p622 = scmp.ne.s32.totalorder %s607, %s621
      %p623 = scmp.eq.s32.totalorder %s38, 0
      %p624 = por %p622, %p623
      %p625 = scmp.le.s32.totalorder 1, %s32
      %p626 = scmp.lt.s32.totalorder %s32, 3
      %p627 = pnand %p625, %p626
      %p628 = pneg %p627
      // Predicated region
      $region9: #{vision_clip_forward.1} parent=5 // pred_check
        _
      $region10: #{vision_clip_forward.1} parent=5 // pred_check_branch
        %630 = sbr.rel (%p627) target = $region12
      $region11: #{vision_clip_forward.1} parent=5 // pred_region
        %s631 = ssub.s32 %s32, 1
        // Predicated region
        $region13: #{vision_clip_forward.1} parent=11 // pred_check
          %p632 = pneg %p53
        $region14: #{vision_clip_forward.1} parent=11 // pred_check_branch
          %634 = sbr.rel (%p632) target = $region16
        $region15: #{vision_clip_forward.1} parent=11 // pred_region
          _
        $region16: #{vision_clip_forward.1} parent=11 // pred_fallthru
          _
        // Predicated region
        $region17: #{vision_clip_forward.1} parent=11 // pred_check
          %p635 = pneg %p74
        $region18: #{vision_clip_forward.1} parent=11 // pred_check_branch
          %637 = sbr.rel (%p635) target = $region20
        $region19: #{vision_clip_forward.1} parent=11 // pred_region
          _
        $region20: #{vision_clip_forward.1} parent=11 // pred_fallthru
          _
        // Predicated region
        $region21: #{vision_clip_forward.1} parent=11 // pred_check
          %p638 = pneg %p95
        $region22: #{vision_clip_forward.1} parent=11 // pred_check_branch
          %640 = sbr.rel (%p638) target = $region24
        $region23: #{vision_clip_forward.1} parent=11 // pred_region
          _
        $region24: #{vision_clip_forward.1} parent=11 // pred_fallthru
          _
        // Predicated region
        $region25: #{vision_clip_forward.1} parent=11 // pred_check
          %p641 = pneg %p116
        $region26: #{vision_clip_forward.1} parent=11 // pred_check_branch
          %643 = sbr.rel (%p641) target = $region28
        $region27: #{vision_clip_forward.1} parent=11 // pred_region
          _
        $region28: #{vision_clip_forward.1} parent=11 // pred_fallthru
          _
        // Predicated region
        $region29: #{vision_clip_forward.1} parent=11 // pred_check
          %p644 = pneg %p137
        $region30: #{vision_clip_forward.1} parent=11 // pred_check_branch
          %646 = sbr.rel (%p644) target = $region32
        $region31: #{vision_clip_forward.1} parent=11 // pred_region
          _
        $region32: #{vision_clip_forward.1} parent=11 // pred_fallthru
          _
        // Predicated region
        $region33: #{vision_clip_forward.1} parent=11 // pred_check
          %p647 = pneg %p158
        $region34: #{vision_clip_forward.1} parent=11 // pred_check_branch
          %649 = sbr.rel (%p647) target = $region36
        $region35: #{vision_clip_forward.1} parent=11 // pred_region
          _
        $region36: #{vision_clip_forward.1} parent=11 // pred_fallthru
          _
        // Predicated region
        $region37: #{vision_clip_forward.1} parent=11 // pred_check
          %p650 = pneg %p179
        $region38: #{vision_clip_forward.1} parent=11 // pred_check_branch
          %652 = sbr.rel (%p650) target = $region40
        $region39: #{vision_clip_forward.1} parent=11 // pred_region
          _
        $region40: #{vision_clip_forward.1} parent=11 // pred_fallthru
          _
        // Predicated region
        $region41: #{vision_clip_forward.1} parent=11 // pred_check
          %p653 = pneg %p512
        $region42: #{vision_clip_forward.1} parent=11 // pred_check_branch
          %655 = sbr.rel (%p653) target = $region44
        $region43: #{vision_clip_forward.1} parent=11 // pred_region
          _
        $region44: #{vision_clip_forward.1} parent=11 // pred_fallthru
          _
        // Predicated region
        $region45: #{vision_clip_forward.1} parent=11 // pred_check
          %p656 = pneg %p533
        $region46: #{vision_clip_forward.1} parent=11 // pred_check_branch
          %658 = sbr.rel (%p656) target = $region48
        $region47: #{vision_clip_forward.1} parent=11 // pred_region
          _
        $region48: #{vision_clip_forward.1} parent=11 // pred_fallthru
          _
        // Predicated region
        $region49: #{vision_clip_forward.1} parent=11 // pred_check
          %p659 = pneg %p554
        $region50: #{vision_clip_forward.1} parent=11 // pred_check_branch
          %661 = sbr.rel (%p659) target = $region52
        $region51: #{vision_clip_forward.1} parent=11 // pred_region
          _
        $region52: #{vision_clip_forward.1} parent=11 // pred_fallthru
          _
        // Predicated region
        $region53: #{vision_clip_forward.1} parent=11 // pred_check
          %p662 = pneg %p575
        $region54: #{vision_clip_forward.1} parent=11 // pred_check_branch
          %664 = sbr.rel (%p662) target = $region56
        $region55: #{vision_clip_forward.1} parent=11 // pred_region
          _
        $region56: #{vision_clip_forward.1} parent=11 // pred_fallthru
          _
        // Predicated region
        $region57: #{vision_clip_forward.1} parent=11 // pred_check
          %p665 = pneg %p596
        $region58: #{vision_clip_forward.1} parent=11 // pred_check_branch
          %667 = sbr.rel (%p665) target = $region60
        $region59: #{vision_clip_forward.1} parent=11 // pred_region
          _
        $region60: #{vision_clip_forward.1} parent=11 // pred_fallthru
          _
      $region12: #{vision_clip_forward.1} parent=5 // pred_fallthru
        _
      %p668 = scmp.lt.s32.totalorder %s32, 2
      // Predicated region
      $region61: #{vision_clip_forward.1} parent=5 // pred_check
        %p669 = pneg %p668
      $region62: #{vision_clip_forward.1} parent=5 // pred_check_branch
        %671 = sbr.rel (%p669) target = $region64
      $region63: #{vision_clip_forward.1} parent=5 // pred_region
        // Predicated region
        $region65: #{vision_clip_forward.1} parent=63 // pred_check
          %p672 = pneg %p199
        $region66: #{vision_clip_forward.1} parent=63 // pred_check_branch
          %674 = sbr.rel (%p672) target = $region68
        $region67: #{vision_clip_forward.1} parent=63 // pred_region
          %p675 = scmp.lt.s32.totalorder %s32, 1
          %s676 = scalar_select %p675, %s32, 1
          %s677 = scalar_lea.vmem %s7, %s676
        $region68: #{vision_clip_forward.1} parent=63 // pred_fallthru
          _
        // Predicated region
        $region69: #{vision_clip_forward.1} parent=63 // pred_check
          %p678 = pneg %p225
        $region70: #{vision_clip_forward.1} parent=63 // pred_check_branch
          %680 = sbr.rel (%p678) target = $region72
        $region71: #{vision_clip_forward.1} parent=63 // pred_region
          %p681 = scmp.lt.s32.totalorder %s32, 1
          %s682 = scalar_select %p681, %s32, 1
          %s683 = scalar_lea.vmem %s8, %s682
        $region72: #{vision_clip_forward.1} parent=63 // pred_fallthru
          _
        // Predicated region
        $region73: #{vision_clip_forward.1} parent=63 // pred_check
          %p684 = pneg %p251
        $region74: #{vision_clip_forward.1} parent=63 // pred_check_branch
          %686 = sbr.rel (%p684) target = $region76
        $region75: #{vision_clip_forward.1} parent=63 // pred_region
          %p687 = scmp.lt.s32.totalorder %s32, 1
          %s688 = scalar_select %p687, %s32, 1
          %s689 = smul.addr %s688, 4
          %s690 = smul.addr %s689, 4
          %s691 = scalar_lea.vmem %s9, %s690
        $region76: #{vision_clip_forward.1} parent=63 // pred_fallthru
          _
        // Predicated region
        $region77: #{vision_clip_forward.1} parent=63 // pred_check
          %p692 = pneg %p277
        $region78: #{vision_clip_forward.1} parent=63 // pred_check_branch
          %694 = sbr.rel (%p692) target = $region80
        $region79: #{vision_clip_forward.1} parent=63 // pred_region
          %p695 = scmp.lt.s32.totalorder %s32, 1
          %s696 = scalar_select %p695, %s32, 1
          %s697 = scalar_lea.vmem %s10, %s696
        $region80: #{vision_clip_forward.1} parent=63 // pred_fallthru
          _
        // Predicated region
        $region81: #{vision_clip_forward.1} parent=63 // pred_check
          %p698 = pneg %p303
        $region82: #{vision_clip_forward.1} parent=63 // pred_check_branch
          %700 = sbr.rel (%p698) target = $region84
        $region83: #{vision_clip_forward.1} parent=63 // pred_region
          %p701 = scmp.lt.s32.totalorder %s32, 1
          %s702 = scalar_select %p701, %s32, 1
          %s703 = smul.addr %s702, 4
          %s704 = smul.addr %s703, 4
          %s705 = scalar_lea.vmem %s11, %s704
        $region84: #{vision_clip_forward.1} parent=63 // pred_fallthru
          _
        // Predicated region
        $region85: #{vision_clip_forward.1} parent=63 // pred_check
          %p706 = pneg %p329
        $region86: #{vision_clip_forward.1} parent=63 // pred_check_branch
          %708 = sbr.rel (%p706) target = $region88
        $region87: #{vision_clip_forward.1} parent=63 // pred_region
          %p709 = scmp.lt.s32.totalorder %s32, 1
          %s710 = scalar_select %p709, %s32, 1
          %s711 = scalar_lea.vmem %s12, %s710
        $region88: #{vision_clip_forward.1} parent=63 // pred_fallthru
          _
        // Predicated region
        $region89: #{vision_clip_forward.1} parent=63 // pred_check
          %p712 = pneg %p355
        $region90: #{vision_clip_forward.1} parent=63 // pred_check_branch
          %714 = sbr.rel (%p712) target = $region92
        $region91: #{vision_clip_forward.1} parent=63 // pred_region
          %p715 = scmp.lt.s32.totalorder %s32, 1
          %s716 = scalar_select %p715, %s32, 1
          %s717 = scalar_lea.vmem %s13, %s716
        $region92: #{vision_clip_forward.1} parent=63 // pred_fallthru
          _
        // Predicated region
        $region93: #{vision_clip_forward.1} parent=63 // pred_check
          %p718 = pneg %p381
        $region94: #{vision_clip_forward.1} parent=63 // pred_check_branch
          %720 = sbr.rel (%p718) target = $region96
        $region95: #{vision_clip_forward.1} parent=63 // pred_region
          %p721 = scmp.lt.s32.totalorder %s32, 1
          %s722 = scalar_select %p721, %s32, 1
          %s723 = scalar_lea.vmem %s14, %s722
        $region96: #{vision_clip_forward.1} parent=63 // pred_fallthru
          _
        // Predicated region
        $region97: #{vision_clip_forward.1} parent=63 // pred_check
          %p724 = pneg %p407
        $region98: #{vision_clip_forward.1} parent=63 // pred_check_branch
          %726 = sbr.rel (%p724) target = $region100
        $region99: #{vision_clip_forward.1} parent=63 // pred_region
          %p727 = scmp.lt.s32.totalorder %s32, 1
          %s728 = scalar_select %p727, %s32, 1
          %s729 = smul.addr %s728, 4
          %s730 = smul.addr %s729, 4
          %s731 = scalar_lea.vmem %s15, %s730
        $region100: #{vision_clip_forward.1} parent=63 // pred_fallthru
          _
        // Predicated region
        $region101: #{vision_clip_forward.1} parent=63 // pred_check
          %p732 = pneg %p433
        $region102: #{vision_clip_forward.1} parent=63 // pred_check_branch
          %734 = sbr.rel (%p732) target = $region104
        $region103: #{vision_clip_forward.1} parent=63 // pred_region
          %p735 = scmp.lt.s32.totalorder %s32, 1
          %s736 = scalar_select %p735, %s32, 1
          %s737 = scalar_lea.vmem %s16, %s736
        $region104: #{vision_clip_forward.1} parent=63 // pred_fallthru
          _
        // Predicated region
        $region105: #{vision_clip_forward.1} parent=63 // pred_check
          %p738 = pneg %p459
        $region106: #{vision_clip_forward.1} parent=63 // pred_check_branch
          %740 = sbr.rel (%p738) target = $region108
        $region107: #{vision_clip_forward.1} parent=63 // pred_region
          %p741 = scmp.lt.s32.totalorder %s32, 1
          %s742 = scalar_select %p741, %s32, 1
          %s743 = smul.addr %s742, 16
          %s744 = smul.addr %s743, 4
          %s745 = scalar_lea.vmem %s17, %s744
        $region108: #{vision_clip_forward.1} parent=63 // pred_fallthru
          _
        // Predicated region
        $region109: #{vision_clip_forward.1} parent=63 // pred_check
          %p746 = pneg %p485
        $region110: #{vision_clip_forward.1} parent=63 // pred_check_branch
          %748 = sbr.rel (%p746) target = $region112
        $region111: #{vision_clip_forward.1} parent=63 // pred_region
          %p749 = scmp.lt.s32.totalorder %s32, 1
          %s750 = scalar_select %p749, %s32, 1
          %s751 = scalar_lea.vmem %s18, %s750
        $region112: #{vision_clip_forward.1} parent=63 // pred_fallthru
          _
      $region64: #{vision_clip_forward.1} parent=5 // pred_fallthru
        _
      %p752 = scmp.le.s32.totalorder 1, %s32
      %p753 = scmp.lt.s32.totalorder %s32, 3
      %p754 = pnand %p752, %p753
      %p755 = pneg %p754
      // Predicated region
      $region113: #{vision_clip_forward.1} parent=5 // pred_check
        _
      $region114: #{vision_clip_forward.1} parent=5 // pred_check_branch
        %757 = sbr.rel (%p754) target = $region116
      $region115: #{vision_clip_forward.1} parent=5 // pred_region
        %s758 = ssub.s32 %s32, 1
        %p759 = pneg %p53
        %p760 = pneg %p50
        %p761 = pneg %p74
        %p762 = pneg %p71
        %p763 = pneg %p95
        %p764 = pneg %p92
        %p765 = pneg %p116
        %p766 = pneg %p113
        %p767 = pneg %p137
        %p768 = pneg %p134
        %p769 = pneg %p158
        %p770 = pneg %p155
        %p771 = pneg %p179
        %p772 = pneg %p176
        %p773 = scmp.lt.s32.totalorder %s37, 1
        %s774 = scalar_select %p773, %s37, 1
        %s775 = scalar_lea.vmem %s7, %s774
        %p776 = pneg %p205
        %p777 = pneg %p202
        %p778 = scmp.lt.s32.totalorder %s37, 1
        %s779 = scalar_select %p778, %s37, 1
        %s780 = scalar_lea.vmem %s8, %s779
        %p781 = pneg %p231
        %p782 = pneg %p228
        %p783 = scmp.lt.s32.totalorder %s37, 1
        %s784 = scalar_select %p783, %s37, 1
        %s785 = smul.addr %s784, 4
        %s786 = smul.addr %s785, 4
        %s787 = scalar_lea.vmem %s9, %s786
        %p788 = pneg %p257
        %p789 = pneg %p254
        %p790 = scmp.lt.s32.totalorder %s37, 1
        %s791 = scalar_select %p790, %s37, 1
        %s792 = scalar_lea.vmem %s10, %s791
        %p793 = pneg %p283
        %p794 = pneg %p280
        %p795 = scmp.lt.s32.totalorder %s37, 1
        %s796 = scalar_select %p795, %s37, 1
        %s797 = smul.addr %s796, 4
        %s798 = smul.addr %s797, 4
        %s799 = scalar_lea.vmem %s11, %s798
        %p800 = pneg %p309
        %p801 = pneg %p306
        %p802 = scmp.lt.s32.totalorder %s37, 1
        %s803 = scalar_select %p802, %s37, 1
        %s804 = scalar_lea.vmem %s12, %s803
        %p805 = pneg %p335
        %p806 = pneg %p332
        %p807 = scmp.lt.s32.totalorder %s37, 1
        %s808 = scalar_select %p807, %s37, 1
        %s809 = scalar_lea.vmem %s13, %s808
        %p810 = pneg %p361
        %p811 = pneg %p358
        %p812 = scmp.lt.s32.totalorder %s37, 1
        %s813 = scalar_select %p812, %s37, 1
        %s814 = scalar_lea.vmem %s14, %s813
        %p815 = pneg %p387
        %p816 = pneg %p384
        %p817 = scmp.lt.s32.totalorder %s37, 1
        %s818 = scalar_select %p817, %s37, 1
        %s819 = smul.addr %s818, 4
        %s820 = smul.addr %s819, 4
        %s821 = scalar_lea.vmem %s15, %s820
        %p822 = pneg %p413
        %p823 = pneg %p410
        %p824 = scmp.lt.s32.totalorder %s37, 1
        %s825 = scalar_select %p824, %s37, 1
        %s826 = scalar_lea.vmem %s16, %s825
        %p827 = pneg %p439
        %p828 = pneg %p436
        %p829 = scmp.lt.s32.totalorder %s37, 1
        %s830 = scalar_select %p829, %s37, 1
        %s831 = smul.addr %s830, 16
        %s832 = smul.addr %s831, 4
        %s833 = scalar_lea.vmem %s17, %s832
        %p834 = pneg %p465
        %p835 = pneg %p462
        %p836 = scmp.lt.s32.totalorder %s37, 1
        %s837 = scalar_select %p836, %s37, 1
        %s838 = scalar_lea.vmem %s18, %s837
        %p839 = pneg %p491
        %p840 = pneg %p488
        %p841 = pneg %p512
        %p842 = pneg %p509
        %p843 = pneg %p533
        %p844 = pneg %p530
        %p845 = pneg %p554
        %p846 = pneg %p551
        %p847 = pneg %p575
        %p848 = pneg %p572
        %p849 = pneg %p596
        %p850 = pneg %p593
        %p851 = pneg %p617
        %p852 = pneg %p614
        %p853 = scmp.lt.s32.totalorder %s37, 1
        %s854 = scalar_select %p853, %s37, 1
        %s855 = scalar_lea.vmem %s7, %s854
        %p856 = scmp.lt.s32.totalorder %s37, 1
        %s857 = scalar_select %p856, %s37, 1
        %s858 = scalar_lea.vmem %s8, %s857
        %p859 = scmp.lt.s32.totalorder %s37, 1
        %s860 = scalar_select %p859, %s37, 1
        %s861 = smul.addr %s860, 4
        %s862 = smul.addr %s861, 4
        %s863 = scalar_lea.vmem %s9, %s862
        %p864 = scmp.lt.s32.totalorder %s37, 1
        %s865 = scalar_select %p864, %s37, 1
        %s866 = scalar_lea.vmem %s10, %s865
        %p867 = scmp.lt.s32.totalorder %s37, 1
        %s868 = scalar_select %p867, %s37, 1
        %s869 = smul.addr %s868, 4
        %s870 = smul.addr %s869, 4
        %s871 = scalar_lea.vmem %s11, %s870
        %p872 = scmp.lt.s32.totalorder %s37, 1
        %s873 = scalar_select %p872, %s37, 1
        %s874 = scalar_lea.vmem %s12, %s873
        %p875 = scmp.lt.s32.totalorder %s37, 1
        %s876 = scalar_select %p875, %s37, 1
        %s877 = scalar_lea.vmem %s13, %s876
        %p878 = scmp.lt.s32.totalorder %s37, 1
        %s879 = scalar_select %p878, %s37, 1
        %s880 = scalar_lea.vmem %s14, %s879
        %p881 = scmp.lt.s32.totalorder %s37, 1
        %s882 = scalar_select %p881, %s37, 1
        %s883 = smul.addr %s882, 4
        %s884 = smul.addr %s883, 4
        %s885 = scalar_lea.vmem %s15, %s884
        %p886 = scmp.lt.s32.totalorder %s37, 1
        %s887 = scalar_select %p886, %s37, 1
        %s888 = scalar_lea.vmem %s16, %s887
        %p889 = scmp.lt.s32.totalorder %s37, 1
        %s890 = scalar_select %p889, %s37, 1
        %s891 = smul.addr %s890, 16
        %s892 = smul.addr %s891, 4
        %s893 = scalar_lea.vmem %s17, %s892
        %p894 = scmp.lt.s32.totalorder %s37, 1
        %s895 = scalar_select %p894, %s37, 1
        %s896 = scalar_lea.vmem %s18, %s895
        %p898 = scmp.eq.s32.totalorder %s37, 0
        // Predicated region
        $region117: #{vision_clip_forward.1} parent=115 // pred_check
          %p899 = pneg %p898
        $region118: #{vision_clip_forward.1} parent=115 // pred_check_branch
          %901 = sbr.rel (%p899) target = $region120
        $region119: #{vision_clip_forward.1} parent=115 // pred_region
          %v902 = vld [vmem:[%s4] sm:$0x1]
          %v903 = vld [vmem:[%s5] sm:$0x1]
          %v904 = vld [vmem:[%s3 + $0x1] sm:$0xf]
          %v905 = vld [vmem:[%s2] sm:$0x1]
          %v906 = vld [vmem:[%s3] sm:$0x1]
          %v907 = vadd.f32 %v905, %v906
          %vm908 = vcmask 253952
          %v909 = vsel %vm908, %v907, 0.0
          %910 = vadd.xlane.f32.xlu0 %v909
          %v911 = vpop.xlane.xlu0 %910
          %v912 = vrcp.pop 32.0
          %v913 = vmul.f32 %v911, %v912
          %v914 = vsub.f32 %v907, %v913
          %v915 = vmul.f32 %v914, %v914
          %v916 = vsel %vm908, %v915, 0.0
          %917 = vadd.xlane.f32.xlu0 %v916
          %v918 = vpop.xlane.xlu0 %917
          %v919 = vmul.f32 %v918, %v912
          %v920 = vadd.f32 %v919, 1e-05
          %v921 = vrsqrt.pop %v920
          %v922 = vmul.f32 %v914, %v921
          %v923 = vmul.f32 %v922, %v902
          %v924 = vadd.f32 %v923, %v903
          %v925 = vld [vmem:[%s0] sm:$0x33]
          %v926 = vld [vmem:[%s0 + $0x8] sm:$0x33]
          %v927 = vld [vmem:[%s0 + $0x10] sm:$0x33]
          %v928 = vld [vmem:[%s1] sm:$0xf]
          %v929 = vld [vmem:[%s1 + $0x4] sm:$0xf]
          %v930 = vld [vmem:[%s1 + $0x8] sm:$0xf]
          %v931 = vld [vmem:[%s1 + $0xc] sm:$0xf]
          %v932 = vld [vmem:[%s1 + $0x10] sm:$0xf]
          %v933 = vld [vmem:[%s1 + $0x14] sm:$0xf]
          %v934 = vld [vmem:[%s1 + $0x18] sm:$0xf]
          %v935 = vld [vmem:[%s1 + $0x1c] sm:$0xf]
          %v936 = vld [vmem:[%s1 + $0x20] sm:$0xf]
          %v937 = vld [vmem:[%s1 + $0x24] sm:$0xf]
          %v938 = vld [vmem:[%s1 + $0x28] sm:$0xf]
          %v939 = vld [vmem:[%s1 + $0x2c] sm:$0xf]
          %v940 = vld [vmem:[%s1 + $0x30] sm:$0xf]
          %v941 = vld [vmem:[%s1 + $0x34] sm:$0xf]
          %v942 = vld [vmem:[%s1 + $0x38] sm:$0xf]
          %v943 = vld [vmem:[%s1 + $0x3c] sm:$0xf]
          %v944 = vld [vmem:[%s1 + $0x40] sm:$0xf]
          %v945 = vld [vmem:[%s1 + $0x44] sm:$0xf]
          %v946 = vld [vmem:[%s1 + $0x48] sm:$0xf]
          %v947 = vld [vmem:[%s1 + $0x4c] sm:$0xf]
          %v948 = vld [vmem:[%s1 + $0x50] sm:$0xf]
          %v949 = vld [vmem:[%s1 + $0x54] sm:$0xf]
          %v950 = vld [vmem:[%s1 + $0x58] sm:$0xf]
          %v951 = vld [vmem:[%s1 + $0x5c] sm:$0xf]
          %v952 = vld [vmem:[%s1 + $0x60] sm:$0xf]
          %v953 = vld [vmem:[%s1 + $0x64] sm:$0xf]
          %v954 = vld [vmem:[%s1 + $0x68] sm:$0xf]
          %v955 = vld [vmem:[%s1 + $0x6c] sm:$0xf]
          %v956 = vld [vmem:[%s1 + $0x70] sm:$0xf]
          %v957 = vld [vmem:[%s1 + $0x74] sm:$0xf]
          %v958 = vld [vmem:[%s1 + $0x78] sm:$0xf]
          %v959 = vld [vmem:[%s1 + $0x7c] sm:$0xf]
          %v960 = vld [vmem:[%s1 + $0x80] sm:$0xf]
          %v961 = vld [vmem:[%s1 + $0x84] sm:$0xf]
          %v962 = vld [vmem:[%s1 + $0x88] sm:$0xf]
          %v963 = vld [vmem:[%s1 + $0x8c] sm:$0xf]
          %v964 = vld [vmem:[%s1 + $0x90] sm:$0xf]
          %v965 = vld [vmem:[%s1 + $0x94] sm:$0xf]
          %v966 = vld [vmem:[%s1 + $0x98] sm:$0xf]
          %v967 = vld [vmem:[%s1 + $0x9c] sm:$0xf]
          %v968 = vld [vmem:[%s1 + $0xa0] sm:$0xf]
          %v969 = vld [vmem:[%s1 + $0xa4] sm:$0xf]
          %v970 = vld [vmem:[%s1 + $0xa8] sm:$0xf]
          %v971 = vld [vmem:[%s1 + $0xac] sm:$0xf]
          %v972 = vld [vmem:[%s1 + $0xb0] sm:$0xf]
          %v973 = vld [vmem:[%s1 + $0xb4] sm:$0xf]
          %v974 = vld [vmem:[%s1 + $0xb8] sm:$0xf]
          %v975 = vld [vmem:[%s1 + $0xbc] sm:$0xf]
          %v976 = vld [vmem:[%s1 + $0xc0] sm:$0xf]
          %v977 = vld [vmem:[%s1 + $0xc4] sm:$0xf]
          %v978 = vld [vmem:[%s1 + $0xc8] sm:$0xf]
          %v979 = vld [vmem:[%s1 + $0xcc] sm:$0xf]
          %v980 = vld [vmem:[%s1 + $0xd0] sm:$0xf]
          %v981 = vld [vmem:[%s1 + $0xd4] sm:$0xf]
          %v982 = vld [vmem:[%s1 + $0xd8] sm:$0xf]
          %v983 = vld [vmem:[%s1 + $0xdc] sm:$0xf]
          %v984 = vld [vmem:[%s1 + $0xe0] sm:$0xf]
          %v985 = vld [vmem:[%s1 + $0xe4] sm:$0xf]
          %v986 = vld [vmem:[%s1 + $0xe8] sm:$0xf]
          %v987 = vld [vmem:[%s1 + $0xec] sm:$0xf]
          %v988 = vld [vmem:[%s1 + $0xf0] sm:$0xf]
          %v989 = vld [vmem:[%s1 + $0xf4] sm:$0xf]
          %v990 = vld [vmem:[%s1 + $0xf8] sm:$0xf]
          %v991 = vld [vmem:[%s1 + $0xfc] sm:$0xf]
          %v992 = vld [vmem:[%s1 + $0x100] sm:$0xf]
          %v993 = vld [vmem:[%s1 + $0x104] sm:$0xf]
          %v994 = vld [vmem:[%s1 + $0x108] sm:$0xf]
          %v995 = vld [vmem:[%s1 + $0x10c] sm:$0xf]
          %v996 = vld [vmem:[%s1 + $0x110] sm:$0xf]
          %v997 = vld [vmem:[%s1 + $0x114] sm:$0xf]
          %v998 = vld [vmem:[%s1 + $0x118] sm:$0xf]
          %v999 = vld [vmem:[%s1 + $0x11c] sm:$0xf]
          %v1000 = vld [vmem:[%s1 + $0x120] sm:$0xf]
          %v1001 = vld [vmem:[%s1 + $0x124] sm:$0xf]
          %v1002 = vld [vmem:[%s1 + $0x128] sm:$0xf]
          %v1003 = vld [vmem:[%s1 + $0x12c] sm:$0xf]
          %v1004 = vld [vmem:[%s1 + $0x130] sm:$0xf]
          %v1005 = vld [vmem:[%s1 + $0x134] sm:$0xf]
          %v1006 = vld [vmem:[%s1 + $0x138] sm:$0xf]
          %v1007 = vld [vmem:[%s1 + $0x13c] sm:$0xf]
          %v1008 = vld [vmem:[%s1 + $0x140] sm:$0xf]
          %v1009 = vld [vmem:[%s1 + $0x144] sm:$0xf]
          %v1010 = vld [vmem:[%s1 + $0x148] sm:$0xf]
          %v1011 = vld [vmem:[%s1 + $0x14c] sm:$0xf]
          %v1012 = vld [vmem:[%s1 + $0x150] sm:$0xf]
          %v1013 = vld [vmem:[%s1 + $0x154] sm:$0xf]
          %v1014 = vld [vmem:[%s1 + $0x158] sm:$0xf]
          %v1015 = vld [vmem:[%s1 + $0x15c] sm:$0xf]
          %v1016 = vld [vmem:[%s1 + $0x160] sm:$0xf]
          %v1017 = vld [vmem:[%s1 + $0x164] sm:$0xf]
          %v1018 = vld [vmem:[%s1 + $0x168] sm:$0xf]
          %v1019 = vld [vmem:[%s1 + $0x16c] sm:$0xf]
          %v1020 = vld [vmem:[%s1 + $0x170] sm:$0xf]
          %v1021 = vld [vmem:[%s1 + $0x174] sm:$0xf]
          %v1022 = vld [vmem:[%s1 + $0x178] sm:$0xf]
          %v1023 = vld [vmem:[%s1 + $0x17c] sm:$0xf]
          %1024 = vst.msk [vmem:[#allocation2] sm:$0x1] %vm908, %v924
          %v1028 = vunpack.c.l.b16 %v925
          %v1029 = vunpack.c.h.b16 %v925
          %v1030 = vunpack.c.l.b16 %v926
          %v1031 = vunpack.c.h.b16 %v926
          %v1032 = vunpack.c.l.b16 %v927
          %v1033 = vunpack.c.h.b16 %v927
          %v1034 = vpack.c.b16 %v1028, %v1028
          %v1035 = vpack.c.b16 %v1029, %v1029
          %v1036 = vpack.c.b16 %v1030, %v1030
          %v1037 = vpack.c.b16 %v1031, %v1031
          %v1038 = vpack.c.b16 %v1032, %v1032
          %v1039 = vpack.c.b16 %v1033, %v1033
          %v1142 = vunpack.c.l.b16 %v928
          %v1143 = vunpack.c.l.b16 %v929
          %v1144 = vunpack.c.l.b16 %v930
          %v1145 = vunpack.c.l.b16 %v931
          %v1146 = vunpack.c.l.b16 %v932
          %v1147 = vunpack.c.l.b16 %v933
          %v1148 = vunpack.c.l.b16 %v934
          %v1149 = vunpack.c.l.b16 %v935
          %v1150 = vunpack.c.l.b16 %v936
          %v1151 = vunpack.c.l.b16 %v937
          %v1152 = vunpack.c.l.b16 %v938
          %v1153 = vunpack.c.l.b16 %v939
          %v1154 = vunpack.c.l.b16 %v940
          %v1155 = vunpack.c.l.b16 %v941
          %v1156 = vunpack.c.l.b16 %v942
          %v1157 = vunpack.c.l.b16 %v943
          %v1158 = vunpack.c.l.b16 %v944
          %v1159 = vunpack.c.l.b16 %v945
          %v1160 = vunpack.c.l.b16 %v946
          %v1161 = vunpack.c.l.b16 %v947
          %v1162 = vunpack.c.l.b16 %v948
          %v1163 = vunpack.c.l.b16 %v949
          %v1164 = vunpack.c.l.b16 %v950
          %v1165 = vunpack.c.l.b16 %v951
          %v1166 = vunpack.c.l.b16 %v952
          %v1167 = vunpack.c.l.b16 %v953
          %v1168 = vunpack.c.l.b16 %v954
          %v1169 = vunpack.c.l.b16 %v955
          %v1170 = vunpack.c.l.b16 %v956
          %v1171 = vunpack.c.l.b16 %v957
          %v1172 = vunpack.c.l.b16 %v958
          %v1173 = vunpack.c.l.b16 %v959
          %v1174 = vunpack.c.l.b16 %v960
          %v1175 = vunpack.c.l.b16 %v961
          %v1176 = vunpack.c.l.b16 %v962
          %v1177 = vunpack.c.l.b16 %v963
          %v1178 = vunpack.c.l.b16 %v964
          %v1179 = vunpack.c.l.b16 %v965
          %v1180 = vunpack.c.l.b16 %v966
          %v1181 = vunpack.c.l.b16 %v967
          %v1182 = vunpack.c.l.b16 %v968
          %v1183 = vunpack.c.l.b16 %v969
          %v1184 = vunpack.c.l.b16 %v970
          %v1185 = vunpack.c.l.b16 %v971
          %v1186 = vunpack.c.l.b16 %v972
          %v1187 = vunpack.c.l.b16 %v973
          %v1188 = vunpack.c.l.b16 %v974
          %v1189 = vunpack.c.l.b16 %v975
          %v1190 = vunpack.c.l.b16 %v976
          %v1191 = vunpack.c.l.b16 %v977
          %v1192 = vunpack.c.l.b16 %v978
          %v1193 = vunpack.c.l.b16 %v979
          %v1194 = vunpack.c.l.b16 %v980
          %v1195 = vunpack.c.l.b16 %v981
          %v1196 = vunpack.c.l.b16 %v982
          %v1197 = vunpack.c.l.b16 %v983
          %v1198 = vunpack.c.l.b16 %v984
          %v1199 = vunpack.c.l.b16 %v985
          %v1200 = vunpack.c.l.b16 %v986
          %v1201 = vunpack.c.l.b16 %v987
          %v1202 = vunpack.c.l.b16 %v988
          %v1203 = vunpack.c.l.b16 %v989
          %v1204 = vunpack.c.l.b16 %v990
          %v1205 = vunpack.c.l.b16 %v991
          %v1206 = vunpack.c.l.b16 %v992
          %v1207 = vunpack.c.l.b16 %v993
          %v1208 = vunpack.c.l.b16 %v994
          %v1209 = vunpack.c.l.b16 %v995
          %v1210 = vunpack.c.l.b16 %v996
          %v1211 = vunpack.c.l.b16 %v997
          %v1212 = vunpack.c.l.b16 %v998
          %v1213 = vunpack.c.l.b16 %v999
          %v1214 = vunpack.c.l.b16 %v1000
          %v1215 = vunpack.c.l.b16 %v1001
          %v1216 = vunpack.c.l.b16 %v1002
          %v1217 = vunpack.c.l.b16 %v1003
          %v1218 = vunpack.c.l.b16 %v1004
          %v1219 = vunpack.c.l.b16 %v1005
          %v1220 = vunpack.c.l.b16 %v1006
          %v1221 = vunpack.c.l.b16 %v1007
          %v1222 = vunpack.c.l.b16 %v1008
          %v1223 = vunpack.c.l.b16 %v1009
          %v1224 = vunpack.c.l.b16 %v1010
          %v1225 = vunpack.c.l.b16 %v1011
          %v1226 = vunpack.c.l.b16 %v1012
          %v1227 = vunpack.c.l.b16 %v1013
          %v1228 = vunpack.c.l.b16 %v1014
          %v1229 = vunpack.c.l.b16 %v1015
          %v1230 = vunpack.c.l.b16 %v1016
          %v1231 = vunpack.c.l.b16 %v1017
          %v1232 = vunpack.c.l.b16 %v1018
          %v1233 = vunpack.c.l.b16 %v1019
          %v1234 = vunpack.c.l.b16 %v1020
          %v1235 = vunpack.c.l.b16 %v1021
          %v1236 = vunpack.c.l.b16 %v1022
          %v1237 = vunpack.c.l.b16 %v1023
          %v1238 = vpack.c.b16 %v1143, %v1142
          %v1239 = vpack.c.b16 %v1145, %v1144
          %v1240 = vpack.c.b16 %v1147, %v1146
          %v1241 = vpack.c.b16 %v1149, %v1148
          %v1242 = vpack.c.b16 %v1151, %v1150
          %v1243 = vpack.c.b16 %v1153, %v1152
          %v1244 = vpack.c.b16 %v1155, %v1154
          %v1245 = vpack.c.b16 %v1157, %v1156
          %v1246 = vpack.c.b16 %v1159, %v1158
          %v1247 = vpack.c.b16 %v1161, %v1160
          %v1248 = vpack.c.b16 %v1163, %v1162
          %v1249 = vpack.c.b16 %v1165, %v1164
          %v1250 = vpack.c.b16 %v1167, %v1166
          %v1251 = vpack.c.b16 %v1169, %v1168
          %v1252 = vpack.c.b16 %v1171, %v1170
          %v1253 = vpack.c.b16 %v1173, %v1172
          %v1254 = vpack.c.b16 %v1175, %v1174
          %v1255 = vpack.c.b16 %v1177, %v1176
          %v1256 = vpack.c.b16 %v1179, %v1178
          %v1257 = vpack.c.b16 %v1181, %v1180
          %v1258 = vpack.c.b16 %v1183, %v1182
          %v1259 = vpack.c.b16 %v1185, %v1184
          %v1260 = vpack.c.b16 %v1187, %v1186
          %v1261 = vpack.c.b16 %v1189, %v1188
          %v1262 = vpack.c.b16 %v1191, %v1190
          %v1263 = vpack.c.b16 %v1193, %v1192
          %v1264 = vpack.c.b16 %v1195, %v1194
          %v1265 = vpack.c.b16 %v1197, %v1196
          %v1266 = vpack.c.b16 %v1199, %v1198
          %v1267 = vpack.c.b16 %v1201, %v1200
          %v1268 = vpack.c.b16 %v1203, %v1202
          %v1269 = vpack.c.b16 %v1205, %v1204
          %v1270 = vpack.c.b16 %v1207, %v1206
          %v1271 = vpack.c.b16 %v1209, %v1208
          %v1272 = vpack.c.b16 %v1211, %v1210
          %v1273 = vpack.c.b16 %v1213, %v1212
          %v1274 = vpack.c.b16 %v1215, %v1214
          %v1275 = vpack.c.b16 %v1217, %v1216
          %v1276 = vpack.c.b16 %v1219, %v1218
          %v1277 = vpack.c.b16 %v1221, %v1220
          %v1278 = vpack.c.b16 %v1223, %v1222
          %v1279 = vpack.c.b16 %v1225, %v1224
          %v1280 = vpack.c.b16 %v1227, %v1226
          %v1281 = vpack.c.b16 %v1229, %v1228
          %v1282 = vpack.c.b16 %v1231, %v1230
          %v1283 = vpack.c.b16 %v1233, %v1232
          %v1284 = vpack.c.b16 %v1235, %v1234
          %v1285 = vpack.c.b16 %v1237, %v1236
          %1334 = vmatprep.subr.bf16.mxu0 0
          %1335 = vmatpush1.bf16.msra.mxu0 %v1245
          %1336 = vmatprep.subr.bf16.mxu0 0
          %1337 = vmatpush1.bf16.msra.mxu0 %v1244
          %1338 = vmatprep.subr.bf16.mxu0 0
          %1339 = vmatpush1.bf16.msra.mxu0 %v1243
          %1340 = vmatprep.subr.bf16.mxu0 0
          %1341 = vmatpush1.bf16.msra.mxu0 %v1242
          %1342 = vmatprep.subr.bf16.mxu0 0
          %1343 = vmatpush1.bf16.msra.mxu0 %v1241
          %1344 = vmatprep.subr.bf16.mxu0 0
          %1345 = vmatpush1.bf16.msra.mxu0 %v1240
          %1346 = vmatprep.subr.bf16.mxu0 0
          %1347 = vmatpush1.bf16.msra.mxu0 %v1239
          %1348 = vmatprep.subr.bf16.mxu0 0
          %1349 = vmatpush1.bf16.msra.mxu0 %v1238
          %1350 = vmatprep.subr.bf16.mxu0 0
          %1351 = vmatpush2.bf16.msra.mxu0 %v1253
          %1352 = vmatprep.subr.bf16.mxu0 0
          %1353 = vmatpush2.bf16.msra.mxu0 %v1252
          %1354 = vmatprep.subr.bf16.mxu0 0
          %1355 = vmatpush2.bf16.msra.mxu0 %v1251
          %1356 = vmatprep.subr.bf16.mxu0 0
          %1357 = vmatpush2.bf16.msra.mxu0 %v1250
          %1358 = vmatprep.subr.bf16.mxu0 0
          %1359 = vmatpush2.bf16.msra.mxu0 %v1249
          %1360 = vmatprep.subr.bf16.mxu0 0
          %1361 = vmatpush2.bf16.msra.mxu0 %v1248
          %1362 = vmatprep.subr.bf16.mxu0 0
          %1363 = vmatpush2.bf16.msra.mxu0 %v1247
          %1364 = vmatprep.subr.bf16.mxu0 0
          %1365 = vmatpush2.bf16.msra.mxu0 %v1246
          %1366 = vmatprep.mubr.bf16.mxu0 %v1035
          %1367 = vmatmul.mubr.bf16.gmra.mxu0 %v1034
          %v1368 = vpop.f32.mrf.mxu0
          %v1369 = vadd.f32 %v904, %v1368
          %v1370 = vpop.f32.mrf.mxu0
          %v1371 = vpop.f32.mrf.mxu0
          %v1372 = vpop.f32.mrf.mxu0
          %1373 = vdwg.mxu0
          %1374 = vmatprep.subr.bf16.mxu0 0
          %1375 = vmatpush1.bf16.msra.mxu0 %v1261
          %1376 = vmatprep.subr.bf16.mxu0 0
          %1377 = vmatpush1.bf16.msra.mxu0 %v1260
          %1378 = vmatprep.subr.bf16.mxu0 0
          %1379 = vmatpush1.bf16.msra.mxu0 %v1259
          %1380 = vmatprep.subr.bf16.mxu0 0
          %1381 = vmatpush1.bf16.msra.mxu0 %v1258
          %1382 = vmatprep.subr.bf16.mxu0 0
          %1383 = vmatpush1.bf16.msra.mxu0 %v1257
          %1384 = vmatprep.subr.bf16.mxu0 0
          %1385 = vmatpush1.bf16.msra.mxu0 %v1256
          %1386 = vmatprep.subr.bf16.mxu0 0
          %1387 = vmatpush1.bf16.msra.mxu0 %v1255
          %1388 = vmatprep.subr.bf16.mxu0 0
          %1389 = vmatpush1.bf16.msra.mxu0 %v1254
          %1390 = vmatprep.subr.bf16.mxu0 0
          %1391 = vmatpush2.bf16.msra.mxu0 %v1269
          %1392 = vmatprep.subr.bf16.mxu0 0
          %1393 = vmatpush2.bf16.msra.mxu0 %v1268
          %1394 = vmatprep.subr.bf16.mxu0 0
          %1395 = vmatpush2.bf16.msra.mxu0 %v1267
          %1396 = vmatprep.subr.bf16.mxu0 0
          %1397 = vmatpush2.bf16.msra.mxu0 %v1266
          %1398 = vmatprep.subr.bf16.mxu0 0
          %1399 = vmatpush2.bf16.msra.mxu0 %v1265
          %1400 = vmatprep.subr.bf16.mxu0 0
          %1401 = vmatpush2.bf16.msra.mxu0 %v1264
          %1402 = vmatprep.subr.bf16.mxu0 0
          %1403 = vmatpush2.bf16.msra.mxu0 %v1263
          %1404 = vmatprep.subr.bf16.mxu0 0
          %1405 = vmatpush2.bf16.msra.mxu0 %v1262
          %1406 = vmatprep.mubr.bf16.mxu0 %v1037
          %1407 = vmatmul.mubr.bf16.gmra.mxu0 %v1036
          %v1408 = vpop.f32.mrf.mxu0
          %v1409 = vadd.f32 %v1369, %v1408
          %v1410 = vpop.f32.mrf.mxu0
          %v1411 = vpop.f32.mrf.mxu0
          %v1412 = vpop.f32.mrf.mxu0
          %1413 = vdwg.mxu0
          %1414 = vmatprep.subr.bf16.mxu0 0
          %1415 = vmatpush1.bf16.msra.mxu0 %v1277
          %1416 = vmatprep.subr.bf16.mxu0 0
          %1417 = vmatpush1.bf16.msra.mxu0 %v1276
          %1418 = vmatprep.subr.bf16.mxu0 0
          %1419 = vmatpush1.bf16.msra.mxu0 %v1275
          %1420 = vmatprep.subr.bf16.mxu0 0
          %1421 = vmatpush1.bf16.msra.mxu0 %v1274
          %1422 = vmatprep.subr.bf16.mxu0 0
          %1423 = vmatpush1.bf16.msra.mxu0 %v1273
          %1424 = vmatprep.subr.bf16.mxu0 0
          %1425 = vmatpush1.bf16.msra.mxu0 %v1272
          %1426 = vmatprep.subr.bf16.mxu0 0
          %1427 = vmatpush1.bf16.msra.mxu0 %v1271
          %1428 = vmatprep.subr.bf16.mxu0 0
          %1429 = vmatpush1.bf16.msra.mxu0 %v1270
          %1430 = vmatprep.subr.bf16.mxu0 0
          %1431 = vmatpush2.bf16.msra.mxu0 %v1285
          %1432 = vmatprep.subr.bf16.mxu0 0
          %1433 = vmatpush2.bf16.msra.mxu0 %v1284
          %1434 = vmatprep.subr.bf16.mxu0 0
          %1435 = vmatpush2.bf16.msra.mxu0 %v1283
          %1436 = vmatprep.subr.bf16.mxu0 0
          %1437 = vmatpush2.bf16.msra.mxu0 %v1282
          %1438 = vmatprep.subr.bf16.mxu0 0
          %1439 = vmatpush2.bf16.msra.mxu0 %v1281
          %1440 = vmatprep.subr.bf16.mxu0 0
          %1441 = vmatpush2.bf16.msra.mxu0 %v1280
          %1442 = vmatprep.subr.bf16.mxu0 0
          %1443 = vmatpush2.bf16.msra.mxu0 %v1279
          %1444 = vmatprep.subr.bf16.mxu0 0
          %1445 = vmatpush2.bf16.msra.mxu0 %v1278
          %1446 = vmatprep.mubr.bf16.mxu0 %v1039
          %1447 = vmatmul.mubr.bf16.gmra.mxu0 %v1038
          %v1448 = vpop.f32.mrf.mxu0
          %v1449 = vadd.f32 %v1409, %v1448
          %v1450 = vpop.f32.mrf.mxu0
          %v1451 = vpop.f32.mrf.mxu0
          %v1452 = vpop.f32.mrf.mxu0
          %1453 = vdwg.mxu0
          %vm1454 = vcmask 257024
          %v1455 = vsel %vm1454, %v1449, 0.0
          %1456 = vadd.xlane.f32.xlu0 %v1455
          %v1457 = vpop.xlane.xlu0 %1456
          %v1458 = vmul.f32 %v1457, %v912
          %v1459 = vsub.f32 %v1449, %v1458
          %v1460 = vmul.f32 %v1459, %v1459
          %v1461 = vsel %vm1454, %v1460, 0.0
          %1462 = vadd.xlane.f32.xlu0 %v1461
          %v1463 = vpop.xlane.xlu0 %1462
          %v1464 = vmul.f32 %v1463, %v912
          %v1465 = vadd.f32 %v1464, 1e-05
          %v1466 = vrsqrt.pop %v1465
          %v1467 = vmul.f32 %v1459, %v1466
          %v1469 = vlaneseq
          %v1470 = vshrl.u32 %v1469, 7
          %v1471 = vsub.s32 0, %v1470
          %v1472 = vrot.slane %v902, %v1471
          %v1474 = vmul.f32 %v1467, %v1472
          %v1476 = vlaneseq
          %v1477 = vshrl.u32 %v1476, 7
          %v1478 = vsub.s32 0, %v1477
          %v1479 = vrot.slane %v903, %v1478
          %v1481 = vadd.f32 %v1474, %v1479
          %1482 = vst.msk [vmem:[#allocation2 + $0x1] sm:$0xf] %vm1454, %v1481
          %v1483 = vld [vmem:[%s0] sm:$0xcc]
          %v1484 = vld [vmem:[%s0 + $0x8] sm:$0xcc]
          %v1485 = vld [vmem:[%s0 + $0x10] sm:$0xcc]
          %v1486 = vld [vmem:[%s1] sm:$0xf]
          %v1487 = vld [vmem:[%s1 + $0x4] sm:$0xf]
          %v1488 = vld [vmem:[%s1 + $0x8] sm:$0xf]
          %v1489 = vld [vmem:[%s1 + $0xc] sm:$0xf]
          %v1490 = vld [vmem:[%s1 + $0x10] sm:$0xf]
          %v1491 = vld [vmem:[%s1 + $0x14] sm:$0xf]
          %v1492 = vld [vmem:[%s1 + $0x18] sm:$0xf]
          %v1493 = vld [vmem:[%s1 + $0x1c] sm:$0xf]
          %v1494 = vld [vmem:[%s1 + $0x20] sm:$0xf]
          %v1495 = vld [vmem:[%s1 + $0x24] sm:$0xf]
          %v1496 = vld [vmem:[%s1 + $0x28] sm:$0xf]
          %v1497 = vld [vmem:[%s1 + $0x2c] sm:$0xf]
          %v1498 = vld [vmem:[%s1 + $0x30] sm:$0xf]
          %v1499 = vld [vmem:[%s1 + $0x34] sm:$0xf]
          %v1500 = vld [vmem:[%s1 + $0x38] sm:$0xf]
          %v1501 = vld [vmem:[%s1 + $0x3c] sm:$0xf]
          %v1502 = vld [vmem:[%s1 + $0x40] sm:$0xf]
          %v1503 = vld [vmem:[%s1 + $0x44] sm:$0xf]
          %v1504 = vld [vmem:[%s1 + $0x48] sm:$0xf]
          %v1505 = vld [vmem:[%s1 + $0x4c] sm:$0xf]
          %v1506 = vld [vmem:[%s1 + $0x50] sm:$0xf]
          %v1507 = vld [vmem:[%s1 + $0x54] sm:$0xf]
          %v1508 = vld [vmem:[%s1 + $0x58] sm:$0xf]
          %v1509 = vld [vmem:[%s1 + $0x5c] sm:$0xf]
          %v1510 = vld [vmem:[%s1 + $0x60] sm:$0xf]
          %v1511 = vld [vmem:[%s1 + $0x64] sm:$0xf]
          %v1512 = vld [vmem:[%s1 + $0x68] sm:$0xf]
          %v1513 = vld [vmem:[%s1 + $0x6c] sm:$0xf]
          %v1514 = vld [vmem:[%s1 + $0x70] sm:$0xf]
          %v1515 = vld [vmem:[%s1 + $0x74] sm:$0xf]
          %v1516 = vld [vmem:[%s1 + $0x78] sm:$0xf]
          %v1517 = vld [vmem:[%s1 + $0x7c] sm:$0xf]
          %v1518 = vld [vmem:[%s1 + $0x80] sm:$0xf]
          %v1519 = vld [vmem:[%s1 + $0x84] sm:$0xf]
          %v1520 = vld [vmem:[%s1 + $0x88] sm:$0xf]
          %v1521 = vld [vmem:[%s1 + $0x8c] sm:$0xf]
          %v1522 = vld [vmem:[%s1 + $0x90] sm:$0xf]
          %v1523 = vld [vmem:[%s1 + $0x94] sm:$0xf]
          %v1524 = vld [vmem:[%s1 + $0x98] sm:$0xf]
          %v1525 = vld [vmem:[%s1 + $0x9c] sm:$0xf]
          %v1526 = vld [vmem:[%s1 + $0xa0] sm:$0xf]
          %v1527 = vld [vmem:[%s1 + $0xa4] sm:$0xf]
          %v1528 = vld [vmem:[%s1 + $0xa8] sm:$0xf]
          %v1529 = vld [vmem:[%s1 + $0xac] sm:$0xf]
          %v1530 = vld [vmem:[%s1 + $0xb0] sm:$0xf]
          %v1531 = vld [vmem:[%s1 + $0xb4] sm:$0xf]
          %v1532 = vld [vmem:[%s1 + $0xb8] sm:$0xf]
          %v1533 = vld [vmem:[%s1 + $0xbc] sm:$0xf]
          %v1534 = vld [vmem:[%s1 + $0xc0] sm:$0xf]
          %v1535 = vld [vmem:[%s1 + $0xc4] sm:$0xf]
          %v1536 = vld [vmem:[%s1 + $0xc8] sm:$0xf]
          %v1537 = vld [vmem:[%s1 + $0xcc] sm:$0xf]
          %v1538 = vld [vmem:[%s1 + $0xd0] sm:$0xf]
          %v1539 = vld [vmem:[%s1 + $0xd4] sm:$0xf]
          %v1540 = vld [vmem:[%s1 + $0xd8] sm:$0xf]
          %v1541 = vld [vmem:[%s1 + $0xdc] sm:$0xf]
          %v1542 = vld [vmem:[%s1 + $0xe0] sm:$0xf]
          %v1543 = vld [vmem:[%s1 + $0xe4] sm:$0xf]
          %v1544 = vld [vmem:[%s1 + $0xe8] sm:$0xf]
          %v1545 = vld [vmem:[%s1 + $0xec] sm:$0xf]
          %v1546 = vld [vmem:[%s1 + $0xf0] sm:$0xf]
          %v1547 = vld [vmem:[%s1 + $0xf4] sm:$0xf]
          %v1548 = vld [vmem:[%s1 + $0xf8] sm:$0xf]
          %v1549 = vld [vmem:[%s1 + $0xfc] sm:$0xf]
          %v1550 = vld [vmem:[%s1 + $0x100] sm:$0xf]
          %v1551 = vld [vmem:[%s1 + $0x104] sm:$0xf]
          %v1552 = vld [vmem:[%s1 + $0x108] sm:$0xf]
          %v1553 = vld [vmem:[%s1 + $0x10c] sm:$0xf]
          %v1554 = vld [vmem:[%s1 + $0x110] sm:$0xf]
          %v1555 = vld [vmem:[%s1 + $0x114] sm:$0xf]
          %v1556 = vld [vmem:[%s1 + $0x118] sm:$0xf]
          %v1557 = vld [vmem:[%s1 + $0x11c] sm:$0xf]
          %v1558 = vld [vmem:[%s1 + $0x120] sm:$0xf]
          %v1559 = vld [vmem:[%s1 + $0x124] sm:$0xf]
          %v1560 = vld [vmem:[%s1 + $0x128] sm:$0xf]
          %v1561 = vld [vmem:[%s1 + $0x12c] sm:$0xf]
          %v1562 = vld [vmem:[%s1 + $0x130] sm:$0xf]
          %v1563 = vld [vmem:[%s1 + $0x134] sm:$0xf]
          %v1564 = vld [vmem:[%s1 + $0x138] sm:$0xf]
          %v1565 = vld [vmem:[%s1 + $0x13c] sm:$0xf]
          %v1566 = vld [vmem:[%s1 + $0x140] sm:$0xf]
          %v1567 = vld [vmem:[%s1 + $0x144] sm:$0xf]
          %v1568 = vld [vmem:[%s1 + $0x148] sm:$0xf]
          %v1569 = vld [vmem:[%s1 + $0x14c] sm:$0xf]
          %v1570 = vld [vmem:[%s1 + $0x150] sm:$0xf]
          %v1571 = vld [vmem:[%s1 + $0x154] sm:$0xf]
          %v1572 = vld [vmem:[%s1 + $0x158] sm:$0xf]
          %v1573 = vld [vmem:[%s1 + $0x15c] sm:$0xf]
          %v1574 = vld [vmem:[%s1 + $0x160] sm:$0xf]
          %v1575 = vld [vmem:[%s1 + $0x164] sm:$0xf]
          %v1576 = vld [vmem:[%s1 + $0x168] sm:$0xf]
          %v1577 = vld [vmem:[%s1 + $0x16c] sm:$0xf]
          %v1578 = vld [vmem:[%s1 + $0x170] sm:$0xf]
          %v1579 = vld [vmem:[%s1 + $0x174] sm:$0xf]
          %v1580 = vld [vmem:[%s1 + $0x178] sm:$0xf]
          %v1581 = vld [vmem:[%s1 + $0x17c] sm:$0xf]
          %1582 = vst.msk [vmem:[#allocation2 + $0x5] sm:$0x1] %vm908, %v924
          %v1586 = vunpack.c.l.b16 %v1483
          %v1587 = vunpack.c.h.b16 %v1483
          %v1588 = vunpack.c.l.b16 %v1484
          %v1589 = vunpack.c.h.b16 %v1484
          %v1590 = vunpack.c.l.b16 %v1485
          %v1591 = vunpack.c.h.b16 %v1485
          %v1592 = vpack.c.b16 %v1586, %v1586
          %v1593 = vpack.c.b16 %v1587, %v1587
          %v1594 = vpack.c.b16 %v1588, %v1588
          %v1595 = vpack.c.b16 %v1589, %v1589
          %v1596 = vpack.c.b16 %v1590, %v1590
          %v1597 = vpack.c.b16 %v1591, %v1591
          %v1598 = vrot.slane %v1592, 2
          %v1599 = vrot.slane %v1593, 2
          %v1600 = vrot.slane %v1594, 2
          %v1601 = vrot.slane %v1595, 2
          %v1602 = vrot.slane %v1596, 2
          %v1603 = vrot.slane %v1597, 2
          %v1706 = vunpack.c.l.b16 %v1486
          %v1707 = vunpack.c.l.b16 %v1487
          %v1708 = vunpack.c.l.b16 %v1488
          %v1709 = vunpack.c.l.b16 %v1489
          %v1710 = vunpack.c.l.b16 %v1490
          %v1711 = vunpack.c.l.b16 %v1491
          %v1712 = vunpack.c.l.b16 %v1492
          %v1713 = vunpack.c.l.b16 %v1493
          %v1714 = vunpack.c.l.b16 %v1494
          %v1715 = vunpack.c.l.b16 %v1495
          %v1716 = vunpack.c.l.b16 %v1496
          %v1717 = vunpack.c.l.b16 %v1497
          %v1718 = vunpack.c.l.b16 %v1498
          %v1719 = vunpack.c.l.b16 %v1499
          %v1720 = vunpack.c.l.b16 %v1500
          %v1721 = vunpack.c.l.b16 %v1501
          %v1722 = vunpack.c.l.b16 %v1502
          %v1723 = vunpack.c.l.b16 %v1503
          %v1724 = vunpack.c.l.b16 %v1504
          %v1725 = vunpack.c.l.b16 %v1505
          %v1726 = vunpack.c.l.b16 %v1506
          %v1727 = vunpack.c.l.b16 %v1507
          %v1728 = vunpack.c.l.b16 %v1508
          %v1729 = vunpack.c.l.b16 %v1509
          %v1730 = vunpack.c.l.b16 %v1510
          %v1731 = vunpack.c.l.b16 %v1511
          %v1732 = vunpack.c.l.b16 %v1512
          %v1733 = vunpack.c.l.b16 %v1513
          %v1734 = vunpack.c.l.b16 %v1514
          %v1735 = vunpack.c.l.b16 %v1515
          %v1736 = vunpack.c.l.b16 %v1516
          %v1737 = vunpack.c.l.b16 %v1517
          %v1738 = vunpack.c.l.b16 %v1518
          %v1739 = vunpack.c.l.b16 %v1519
          %v1740 = vunpack.c.l.b16 %v1520
          %v1741 = vunpack.c.l.b16 %v1521
          %v1742 = vunpack.c.l.b16 %v1522
          %v1743 = vunpack.c.l.b16 %v1523
          %v1744 = vunpack.c.l.b16 %v1524
          %v1745 = vunpack.c.l.b16 %v1525
          %v1746 = vunpack.c.l.b16 %v1526
          %v1747 = vunpack.c.l.b16 %v1527
          %v1748 = vunpack.c.l.b16 %v1528
          %v1749 = vunpack.c.l.b16 %v1529
          %v1750 = vunpack.c.l.b16 %v1530
          %v1751 = vunpack.c.l.b16 %v1531
          %v1752 = vunpack.c.l.b16 %v1532
          %v1753 = vunpack.c.l.b16 %v1533
          %v1754 = vunpack.c.l.b16 %v1534
          %v1755 = vunpack.c.l.b16 %v1535
          %v1756 = vunpack.c.l.b16 %v1536
          %v1757 = vunpack.c.l.b16 %v1537
          %v1758 = vunpack.c.l.b16 %v1538
          %v1759 = vunpack.c.l.b16 %v1539
          %v1760 = vunpack.c.l.b16 %v1540
          %v1761 = vunpack.c.l.b16 %v1541
          %v1762 = vunpack.c.l.b16 %v1542
          %v1763 = vunpack.c.l.b16 %v1543
          %v1764 = vunpack.c.l.b16 %v1544
          %v1765 = vunpack.c.l.b16 %v1545
          %v1766 = vunpack.c.l.b16 %v1546
          %v1767 = vunpack.c.l.b16 %v1547
          %v1768 = vunpack.c.l.b16 %v1548
          %v1769 = vunpack.c.l.b16 %v1549
          %v1770 = vunpack.c.l.b16 %v1550
          %v1771 = vunpack.c.l.b16 %v1551
          %v1772 = vunpack.c.l.b16 %v1552
          %v1773 = vunpack.c.l.b16 %v1553
          %v1774 = vunpack.c.l.b16 %v1554
          %v1775 = vunpack.c.l.b16 %v1555
          %v1776 = vunpack.c.l.b16 %v1556
          %v1777 = vunpack.c.l.b16 %v1557
          %v1778 = vunpack.c.l.b16 %v1558
          %v1779 = vunpack.c.l.b16 %v1559
          %v1780 = vunpack.c.l.b16 %v1560
          %v1781 = vunpack.c.l.b16 %v1561
          %v1782 = vunpack.c.l.b16 %v1562
          %v1783 = vunpack.c.l.b16 %v1563
          %v1784 = vunpack.c.l.b16 %v1564
          %v1785 = vunpack.c.l.b16 %v1565
          %v1786 = vunpack.c.l.b16 %v1566
          %v1787 = vunpack.c.l.b16 %v1567
          %v1788 = vunpack.c.l.b16 %v1568
          %v1789 = vunpack.c.l.b16 %v1569
          %v1790 = vunpack.c.l.b16 %v1570
          %v1791 = vunpack.c.l.b16 %v1571
          %v1792 = vunpack.c.l.b16 %v1572
          %v1793 = vunpack.c.l.b16 %v1573
          %v1794 = vunpack.c.l.b16 %v1574
          %v1795 = vunpack.c.l.b16 %v1575
          %v1796 = vunpack.c.l.b16 %v1576
          %v1797 = vunpack.c.l.b16 %v1577
          %v1798 = vunpack.c.l.b16 %v1578
          %v1799 = vunpack.c.l.b16 %v1579
          %v1800 = vunpack.c.l.b16 %v1580
          %v1801 = vunpack.c.l.b16 %v1581
          %v1802 = vpack.c.b16 %v1707, %v1706
          %v1803 = vpack.c.b16 %v1709, %v1708
          %v1804 = vpack.c.b16 %v1711, %v1710
          %v1805 = vpack.c.b16 %v1713, %v1712
          %v1806 = vpack.c.b16 %v1715, %v1714
          %v1807 = vpack.c.b16 %v1717, %v1716
          %v1808 = vpack.c.b16 %v1719, %v1718
          %v1809 = vpack.c.b16 %v1721, %v1720
          %v1810 = vpack.c.b16 %v1723, %v1722
          %v1811 = vpack.c.b16 %v1725, %v1724
          %v1812 = vpack.c.b16 %v1727, %v1726
          %v1813 = vpack.c.b16 %v1729, %v1728
          %v1814 = vpack.c.b16 %v1731, %v1730
          %v1815 = vpack.c.b16 %v1733, %v1732
          %v1816 = vpack.c.b16 %v1735, %v1734
          %v1817 = vpack.c.b16 %v1737, %v1736
          %v1818 = vpack.c.b16 %v1739, %v1738
          %v1819 = vpack.c.b16 %v1741, %v1740
          %v1820 = vpack.c.b16 %v1743, %v1742
          %v1821 = vpack.c.b16 %v1745, %v1744
          %v1822 = vpack.c.b16 %v1747, %v1746
          %v1823 = vpack.c.b16 %v1749, %v1748
          %v1824 = vpack.c.b16 %v1751, %v1750
          %v1825 = vpack.c.b16 %v1753, %v1752
          %v1826 = vpack.c.b16 %v1755, %v1754
          %v1827 = vpack.c.b16 %v1757, %v1756
          %v1828 = vpack.c.b16 %v1759, %v1758
          %v1829 = vpack.c.b16 %v1761, %v1760
          %v1830 = vpack.c.b16 %v1763, %v1762
          %v1831 = vpack.c.b16 %v1765, %v1764
          %v1832 = vpack.c.b16 %v1767, %v1766
          %v1833 = vpack.c.b16 %v1769, %v1768
          %v1834 = vpack.c.b16 %v1771, %v1770
          %v1835 = vpack.c.b16 %v1773, %v1772
          %v1836 = vpack.c.b16 %v1775, %v1774
          %v1837 = vpack.c.b16 %v1777, %v1776
          %v1838 = vpack.c.b16 %v1779, %v1778
          %v1839 = vpack.c.b16 %v1781, %v1780
          %v1840 = vpack.c.b16 %v1783, %v1782
          %v1841 = vpack.c.b16 %v1785, %v1784
          %v1842 = vpack.c.b16 %v1787, %v1786
          %v1843 = vpack.c.b16 %v1789, %v1788
          %v1844 = vpack.c.b16 %v1791, %v1790
          %v1845 = vpack.c.b16 %v1793, %v1792
          %v1846 = vpack.c.b16 %v1795, %v1794
          %v1847 = vpack.c.b16 %v1797, %v1796
          %v1848 = vpack.c.b16 %v1799, %v1798
          %v1849 = vpack.c.b16 %v1801, %v1800
          %1898 = vmatprep.subr.bf16.mxu0 0
          %1899 = vmatpush1.bf16.msra.mxu0 %v1809
          %1900 = vmatprep.subr.bf16.mxu0 0
          %1901 = vmatpush1.bf16.msra.mxu0 %v1808
          %1902 = vmatprep.subr.bf16.mxu0 0
          %1903 = vmatpush1.bf16.msra.mxu0 %v1807
          %1904 = vmatprep.subr.bf16.mxu0 0
          %1905 = vmatpush1.bf16.msra.mxu0 %v1806
          %1906 = vmatprep.subr.bf16.mxu0 0
          %1907 = vmatpush1.bf16.msra.mxu0 %v1805
          %1908 = vmatprep.subr.bf16.mxu0 0
          %1909 = vmatpush1.bf16.msra.mxu0 %v1804
          %1910 = vmatprep.subr.bf16.mxu0 0
          %1911 = vmatpush1.bf16.msra.mxu0 %v1803
          %1912 = vmatprep.subr.bf16.mxu0 0
          %1913 = vmatpush1.bf16.msra.mxu0 %v1802
          %1914 = vmatprep.subr.bf16.mxu0 0
          %1915 = vmatpush2.bf16.msra.mxu0 %v1817
          %1916 = vmatprep.subr.bf16.mxu0 0
          %1917 = vmatpush2.bf16.msra.mxu0 %v1816
          %1918 = vmatprep.subr.bf16.mxu0 0
          %1919 = vmatpush2.bf16.msra.mxu0 %v1815
          %1920 = vmatprep.subr.bf16.mxu0 0
          %1921 = vmatpush2.bf16.msra.mxu0 %v1814
          %1922 = vmatprep.subr.bf16.mxu0 0
          %1923 = vmatpush2.bf16.msra.mxu0 %v1813
          %1924 = vmatprep.subr.bf16.mxu0 0
          %1925 = vmatpush2.bf16.msra.mxu0 %v1812
          %1926 = vmatprep.subr.bf16.mxu0 0
          %1927 = vmatpush2.bf16.msra.mxu0 %v1811
          %1928 = vmatprep.subr.bf16.mxu0 0
          %1929 = vmatpush2.bf16.msra.mxu0 %v1810
          %1930 = vmatprep.mubr.bf16.mxu0 %v1599
          %1931 = vmatmul.mubr.bf16.gmra.mxu0 %v1598
          %v1932 = vpop.f32.mrf.mxu0
          %v1933 = vadd.f32 %v904, %v1932
          %v1934 = vpop.f32.mrf.mxu0
          %v1935 = vpop.f32.mrf.mxu0
          %v1936 = vpop.f32.mrf.mxu0
          %1937 = vdwg.mxu0
          %1938 = vmatprep.subr.bf16.mxu0 0
          %1939 = vmatpush1.bf16.msra.mxu0 %v1825
          %1940 = vmatprep.subr.bf16.mxu0 0
          %1941 = vmatpush1.bf16.msra.mxu0 %v1824
          %1942 = vmatprep.subr.bf16.mxu0 0
          %1943 = vmatpush1.bf16.msra.mxu0 %v1823
          %1944 = vmatprep.subr.bf16.mxu0 0
          %1945 = vmatpush1.bf16.msra.mxu0 %v1822
          %1946 = vmatprep.subr.bf16.mxu0 0
          %1947 = vmatpush1.bf16.msra.mxu0 %v1821
          %1948 = vmatprep.subr.bf16.mxu0 0
          %1949 = vmatpush1.bf16.msra.mxu0 %v1820
          %1950 = vmatprep.subr.bf16.mxu0 0
          %1951 = vmatpush1.bf16.msra.mxu0 %v1819
          %1952 = vmatprep.subr.bf16.mxu0 0
          %1953 = vmatpush1.bf16.msra.mxu0 %v1818
          %1954 = vmatprep.subr.bf16.mxu0 0
          %1955 = vmatpush2.bf16.msra.mxu0 %v1833
          %1956 = vmatprep.subr.bf16.mxu0 0
          %1957 = vmatpush2.bf16.msra.mxu0 %v1832
          %1958 = vmatprep.subr.bf16.mxu0 0
          %1959 = vmatpush2.bf16.msra.mxu0 %v1831
          %1960 = vmatprep.subr.bf16.mxu0 0
          %1961 = vmatpush2.bf16.msra.mxu0 %v1830
          %1962 = vmatprep.subr.bf16.mxu0 0
          %1963 = vmatpush2.bf16.msra.mxu0 %v1829
          %1964 = vmatprep.subr.bf16.mxu0 0
          %1965 = vmatpush2.bf16.msra.mxu0 %v1828
          %1966 = vmatprep.subr.bf16.mxu0 0
          %1967 = vmatpush2.bf16.msra.mxu0 %v1827
          %1968 = vmatprep.subr.bf16.mxu0 0
          %1969 = vmatpush2.bf16.msra.mxu0 %v1826
          %1970 = vmatprep.mubr.bf16.mxu0 %v1601
          %1971 = vmatmul.mubr.bf16.gmra.mxu0 %v1600
          %v1972 = vpop.f32.mrf.mxu0
          %v1973 = vadd.f32 %v1933, %v1972
          %v1974 = vpop.f32.mrf.mxu0
          %v1975 = vpop.f32.mrf.mxu0
          %v1976 = vpop.f32.mrf.mxu0
          %1977 = vdwg.mxu0
          %1978 = vmatprep.subr.bf16.mxu0 0
          %1979 = vmatpush1.bf16.msra.mxu0 %v1841
          %1980 = vmatprep.subr.bf16.mxu0 0
          %1981 = vmatpush1.bf16.msra.mxu0 %v1840
          %1982 = vmatprep.subr.bf16.mxu0 0
          %1983 = vmatpush1.bf16.msra.mxu0 %v1839
          %1984 = vmatprep.subr.bf16.mxu0 0
          %1985 = vmatpush1.bf16.msra.mxu0 %v1838
          %1986 = vmatprep.subr.bf16.mxu0 0
          %1987 = vmatpush1.bf16.msra.mxu0 %v1837
          %1988 = vmatprep.subr.bf16.mxu0 0
          %1989 = vmatpush1.bf16.msra.mxu0 %v1836
          %1990 = vmatprep.subr.bf16.mxu0 0
          %1991 = vmatpush1.bf16.msra.mxu0 %v1835
          %1992 = vmatprep.subr.bf16.mxu0 0
          %1993 = vmatpush1.bf16.msra.mxu0 %v1834
          %1994 = vmatprep.subr.bf16.mxu0 0
          %1995 = vmatpush2.bf16.msra.mxu0 %v1849
          %1996 = vmatprep.subr.bf16.mxu0 0
          %1997 = vmatpush2.bf16.msra.mxu0 %v1848
          %1998 = vmatprep.subr.bf16.mxu0 0
          %1999 = vmatpush2.bf16.msra.mxu0 %v1847
          %2000 = vmatprep.subr.bf16.mxu0 0
          %2001 = vmatpush2.bf16.msra.mxu0 %v1846
          %2002 = vmatprep.subr.bf16.mxu0 0
          %2003 = vmatpush2.bf16.msra.mxu0 %v1845
          %2004 = vmatprep.subr.bf16.mxu0 0
          %2005 = vmatpush2.bf16.msra.mxu0 %v1844
          %2006 = vmatprep.subr.bf16.mxu0 0
          %2007 = vmatpush2.bf16.msra.mxu0 %v1843
          %2008 = vmatprep.subr.bf16.mxu0 0
          %2009 = vmatpush2.bf16.msra.mxu0 %v1842
          %2010 = vmatprep.mubr.bf16.mxu0 %v1603
          %2011 = vmatmul.mubr.bf16.gmra.mxu0 %v1602
          %v2012 = vpop.f32.mrf.mxu0
          %v2013 = vadd.f32 %v1973, %v2012
          %v2014 = vpop.f32.mrf.mxu0
          %v2015 = vpop.f32.mrf.mxu0
          %v2016 = vpop.f32.mrf.mxu0
          %2017 = vdwg.mxu0
          %v2018 = vsel %vm1454, %v2013, 0.0
          %2019 = vadd.xlane.f32.xlu0 %v2018
          %v2020 = vpop.xlane.xlu0 %2019
          %v2021 = vmul.f32 %v2020, %v912
          %v2022 = vsub.f32 %v2013, %v2021
          %v2023 = vmul.f32 %v2022, %v2022
          %v2024 = vsel %vm1454, %v2023, 0.0
          %2025 = vadd.xlane.f32.xlu0 %v2024
          %v2026 = vpop.xlane.xlu0 %2025
          %v2027 = vmul.f32 %v2026, %v912
          %v2028 = vadd.f32 %v2027, 1e-05
          %v2029 = vrsqrt.pop %v2028
          %v2030 = vmul.f32 %v2022, %v2029
          %v2031 = vmul.f32 %v2030, %v1472
          %v2032 = vadd.f32 %v2031, %v1479
          %2033 = vst.msk [vmem:[#allocation2 + $0x6] sm:$0xf] %vm1454, %v2032
        $region120: #{vision_clip_forward.1} parent=115 // pred_fallthru
          _
        %v2034 = vld [vmem:[#allocation2] sm:$0xff]
        %v2035 = vld [vmem:[#allocation2 + $0x8] sm:$0x3]
        %v2036 = vld [vmem:[%s855] sm:$0x1]
        %v2037 = vld [vmem:[%s858] sm:$0x1]
        %vm2038 = vcmask 261120
        %v2039 = vsel %vm2038, %v2034, 0.0
        %2040 = vadd.xlane.f32.xlu0 %v2039
        %v2041 = vpop.xlane.xlu0 %2040
        %vm2042 = vcmask 254976
        %v2043 = vsel %vm2042, %v2035, 0.0
        %2044 = vadd.xlane.f32.xlu0 %v2043
        %v2045 = vpop.xlane.xlu0 %2044
        %v2046 = vrcp.pop 32.0
        %v2047 = vmul.f32 %v2041, %v2046
        %v2048 = vmul.f32 %v2045, %v2046
        %v2049 = vsub.f32 %v2034, %v2047
        %v2050 = vsub.f32 %v2035, %v2048
        %v2051 = vmul.f32 %v2049, %v2049
        %v2052 = vmul.f32 %v2050, %v2050
        %v2053 = vsel %vm2038, %v2051, 0.0
        %2054 = vadd.xlane.f32.xlu0 %v2053
        %v2055 = vpop.xlane.xlu0 %2054
        %v2056 = vsel %vm2042, %v2052, 0.0
        %2057 = vadd.xlane.f32.xlu0 %v2056
        %v2058 = vpop.xlane.xlu0 %2057
        %v2059 = vmul.f32 %v2055, %v2046
        %v2060 = vmul.f32 %v2058, %v2046
        %v2061 = vadd.f32 %v2059, 1e-05
        %v2062 = vadd.f32 %v2060, 1e-05
        %v2063 = vrsqrt.pop %v2061
        %v2064 = vrsqrt.pop %v2062
        %v2065 = vmul.f32 %v2049, %v2063
        %v2066 = vmul.f32 %v2050, %v2064
        %v2068 = vlaneseq
        %v2069 = vshrl.u32 %v2068, 7
        %v2070 = vsub.s32 0, %v2069
        %v2071 = vrot.slane %v2036, %v2070
        %v2073 = vmul.f32 %v2065, %v2071
        %v2074 = vmul.f32 %v2066, %v2071
        %v2076 = vlaneseq
        %v2077 = vshrl.u32 %v2076, 7
        %v2078 = vsub.s32 0, %v2077
        %v2079 = vrot.slane %v2037, %v2078
        %v2081 = vadd.f32 %v2073, %v2079
        %v2082 = vadd.f32 %v2074, %v2079
        %v2083 = vpack.c.bf16 %v2082, %v2081
        %v2084 = vld [vmem:[%s863] sm:$0xf]
        %v2085 = vld [vmem:[%s863 + $0x4] sm:$0xf]
        %v2086 = vld [vmem:[%s863 + $0x8] sm:$0xf]
        %v2087 = vld [vmem:[%s863 + $0xc] sm:$0xf]
        %v2088 = vld [vmem:[%s866] sm:$0x1]
        %v2090 = vlaneseq
        %v2091 = vshrl.u32 %v2090, 7
        %v2092 = vsub.s32 0, %v2091
        %v2093 = vrot.slane %v2088, %v2092
        %v2099 = vunpack.c.l.b16 %v2084
        %v2100 = vunpack.c.l.b16 %v2085
        %v2101 = vunpack.c.l.b16 %v2086
        %v2102 = vunpack.c.l.b16 %v2087
        %v2103 = vpack.c.b16 %v2100, %v2099
        %v2104 = vpack.c.b16 %v2102, %v2101
        %v2108 = vsel %vm2038, %v2083, 0
        %2110 = vmatprep.subr.bf16.mxu0 0
        %2111 = vmatpush1.bf16.msra.mxu0 0
        %2112 = vmatprep.subr.bf16.mxu0 0
        %2113 = vmatpush1.bf16.msra.mxu0 0
        %2114 = vmatprep.subr.bf16.mxu0 0
        %2115 = vmatpush1.bf16.msra.mxu0 0
        %2116 = vmatprep.subr.bf16.mxu0 0
        %2117 = vmatpush1.bf16.msra.mxu0 0
        %2118 = vmatprep.subr.bf16.mxu0 0
        %2119 = vmatpush1.bf16.msra.mxu0 0
        %2120 = vmatprep.subr.bf16.mxu0 0
        %2121 = vmatpush1.bf16.msra.mxu0 0
        %2122 = vmatprep.subr.bf16.mxu0 0
        %2123 = vmatpush1.bf16.msra.mxu0 %v2104
        %2124 = vmatprep.subr.bf16.mxu0 0
        %2125 = vmatpush1.bf16.msra.mxu0 %v2103
        %2126 = vmatprep.subr.bf16.mxu0 0
        %2127 = vmatpush2.bf16.msra.mxu0 0
        %2128 = vmatprep.subr.bf16.mxu0 0
        %2129 = vmatpush2.bf16.msra.mxu0 0
        %2130 = vmatprep.subr.bf16.mxu0 0
        %2131 = vmatpush2.bf16.msra.mxu0 0
        %2132 = vmatprep.subr.bf16.mxu0 0
        %2133 = vmatpush2.bf16.msra.mxu0 0
        %2134 = vmatprep.subr.bf16.mxu0 0
        %2135 = vmatpush2.bf16.msra.mxu0 0
        %2136 = vmatprep.subr.bf16.mxu0 0
        %2137 = vmatpush2.bf16.msra.mxu0 0
        %2138 = vmatprep.subr.bf16.mxu0 0
        %2139 = vmatpush2.bf16.msra.mxu0 0
        %2140 = vmatprep.subr.bf16.mxu0 0
        %2141 = vmatpush2.bf16.msra.mxu0 0
        %2142 = vmatprep.mubr.bf16.mxu0 0
        %2143 = vmatmul.mubr.bf16.gmra.mxu0 %v2108
        %v2144 = vpop.f32.mrf.mxu0
        %v2145 = vadd.f32 %v2093, %v2144
        %v2146 = vpop.f32.mrf.mxu0
        %v2147 = vpop.f32.mrf.mxu0
        %v2148 = vadd.f32 %v2093, %v2147
        %v2149 = vpop.f32.mrf.mxu0
        %2150 = vdwg.mxu0
        %v2151 = vld [vmem:[%s6] sm:$0xff]
        %v2152 = vld [vmem:[%s6 + $0x8] sm:$0x3]
        %v2153 = vpack.c.bf16 %v2148, %v2145
        %2155 = vrot.lane.b32.xlu0 %v2153, 96
        %v2156 = vpop.permute.xlu0 %2155
        %vm2157 = vcmask 64512
        %v2159 = vsel %vm2157, %v2153, 0
        %v2162 = vsel %vm2157, %v2156, 0
        %2164 = vmatprep.subr.bf16.mxu0 0
        %2165 = vmatpush1.bf16.xpose.msra.mxu0 0
        %2166 = vmatprep.subr.bf16.mxu0 0
        %2167 = vmatpush1.bf16.xpose.msra.mxu0 0
        %2168 = vmatprep.subr.bf16.mxu0 0
        %2169 = vmatpush1.bf16.xpose.msra.mxu0 0
        %2170 = vmatprep.subr.bf16.mxu0 0
        %2171 = vmatpush1.bf16.xpose.msra.mxu0 0
        %2172 = vmatprep.subr.bf16.mxu0 0
        %2173 = vmatpush1.bf16.xpose.msra.mxu0 0
        %2174 = vmatprep.subr.bf16.mxu0 0
        %2175 = vmatpush1.bf16.xpose.msra.mxu0 0
        %2176 = vmatprep.subr.bf16.mxu0 0
        %2177 = vmatpush1.bf16.xpose.msra.mxu0 0
        %2178 = vmatprep.subr.bf16.mxu0 0
        %2179 = vmatpush1.bf16.xpose.msra.mxu0 %v2162
        %2180 = vmatprep.subr.bf16.mxu0 0
        %2181 = vmatpush2.bf16.xpose.msra.mxu0 0
        %2182 = vmatprep.subr.bf16.mxu0 0
        %2183 = vmatpush2.bf16.xpose.msra.mxu0 0
        %2184 = vmatprep.subr.bf16.mxu0 0
        %2185 = vmatpush2.bf16.xpose.msra.mxu0 0
        %2186 = vmatprep.subr.bf16.mxu0 0
        %2187 = vmatpush2.bf16.xpose.msra.mxu0 0
        %2188 = vmatprep.subr.bf16.mxu0 0
        %2189 = vmatpush2.bf16.xpose.msra.mxu0 0
        %2190 = vmatprep.subr.bf16.mxu0 0
        %2191 = vmatpush2.bf16.xpose.msra.mxu0 0
        %2192 = vmatprep.subr.bf16.mxu0 0
        %2193 = vmatpush2.bf16.xpose.msra.mxu0 0
        %2194 = vmatprep.subr.bf16.mxu0 0
        %2195 = vmatpush2.bf16.xpose.msra.mxu0 0
        %2196 = vmatprep.mubr.bf16.mxu0 0
        %2197 = vmatmul.mubr.bf16.gmra.mxu0 %v2159
        %v2198 = vpop.f32.mrf.mxu0
        %v2199 = vadd.f32 0.0, %v2198
        %v2200 = vpop.f32.mrf.mxu0
        %v2201 = vpop.f32.mrf.mxu0
        %v2202 = vadd.f32 0.0, %v2201
        %v2203 = vpop.f32.mrf.mxu0
        %2204 = vdwg.mxu0
        %v2205 = vmul.f32 %v2199, 0.35355338
        %v2206 = vmul.f32 %v2202, 0.35355338
        %v2207 = vadd.f32 %v2205, %v2151
        %v2208 = vadd.f32 %v2206, %v2152
        %vm2209 = vcmask 80896
        %v2210 = vsel %vm2209, %v2207, -inf
        %2211 = vmax.xlane.f32.xlu0 %v2210
        %v2212 = vpop.xlane.xlu0 %2211
        %vm2213 = vcmask 74752
        %v2214 = vsel %vm2213, %v2208, -inf
        %2215 = vmax.xlane.f32.xlu0 %v2214
        %v2216 = vpop.xlane.xlu0 %2215
        %v2217 = vsub.f32 %v2207, %v2212
        %v2218 = vsub.f32 %v2208, %v2216
        %v2219 = vmul.f32 %v2217, 1.442695
        %v2220 = vpow.pop %v2219
        %v2221 = vmul.f32 %v2218, 1.442695
        %v2222 = vpow.pop %v2221
        %v2223 = vsel %vm2209, %v2220, 0.0
        %2224 = vadd.xlane.f32.xlu0 %v2223
        %v2225 = vpop.xlane.xlu0 %2224
        %v2226 = vsel %vm2213, %v2222, 0.0
        %2227 = vadd.xlane.f32.xlu0 %v2226
        %v2228 = vpop.xlane.xlu0 %2227
        %v2229 = vrcp.pop %v2225
        %v2230 = vrcp.pop %v2228
        %v2231 = vmul.f32 %v2220, %v2229
        %v2232 = vmul.f32 %v2222, %v2230
        %v2233 = vpack.c.bf16 %v2232, %v2231
        %2234 = vrot.lane.b32.xlu0 %v2153, 64
        %v2235 = vpop.permute.xlu0 %2234
        %v2237 = vsel %vm2209, %v2233, 0
        %vm2239 = vcmask 1044480
        %v2241 = vsel %vm2239, %v2235, 0
        %2243 = vmatprep.subr.bf16.mxu0 0
        %2244 = vmatpush1.bf16.msra.mxu0 0
        %2245 = vmatprep.subr.bf16.mxu0 0
        %2246 = vmatpush1.bf16.msra.mxu0 0
        %2247 = vmatprep.subr.bf16.mxu0 0
        %2248 = vmatpush1.bf16.msra.mxu0 0
        %2249 = vmatprep.subr.bf16.mxu0 0
        %2250 = vmatpush1.bf16.msra.mxu0 0
        %2251 = vmatprep.subr.bf16.mxu0 0
        %2252 = vmatpush1.bf16.msra.mxu0 0
        %2253 = vmatprep.subr.bf16.mxu0 0
        %2254 = vmatpush1.bf16.msra.mxu0 0
        %2255 = vmatprep.subr.bf16.mxu0 0
        %2256 = vmatpush1.bf16.msra.mxu0 0
        %2257 = vmatprep.subr.bf16.mxu0 0
        %2258 = vmatpush1.bf16.msra.mxu0 %v2241
        %2259 = vmatprep.subr.bf16.mxu0 0
        %2260 = vmatpush2.bf16.msra.mxu0 0
        %2261 = vmatprep.subr.bf16.mxu0 0
        %2262 = vmatpush2.bf16.msra.mxu0 0
        %2263 = vmatprep.subr.bf16.mxu0 0
        %2264 = vmatpush2.bf16.msra.mxu0 0
        %2265 = vmatprep.subr.bf16.mxu0 0
        %2266 = vmatpush2.bf16.msra.mxu0 0
        %2267 = vmatprep.subr.bf16.mxu0 0
        %2268 = vmatpush2.bf16.msra.mxu0 0
        %2269 = vmatprep.subr.bf16.mxu0 0
        %2270 = vmatpush2.bf16.msra.mxu0 0
        %2271 = vmatprep.subr.bf16.mxu0 0
        %2272 = vmatpush2.bf16.msra.mxu0 0
        %2273 = vmatprep.subr.bf16.mxu0 0
        %2274 = vmatpush2.bf16.msra.mxu0 0
        %2275 = vmatprep.mubr.bf16.mxu0 0
        %2276 = vmatmul.mubr.bf16.gmra.mxu0 %v2237
        %v2277 = vpop.f32.mrf.mxu0
        %v2278 = vadd.f32 0.0, %v2277
        %v2279 = vpop.f32.mrf.mxu0
        %v2280 = vpop.f32.mrf.mxu0
        %v2281 = vadd.f32 0.0, %v2280
        %v2282 = vpop.f32.mrf.mxu0
        %2283 = vdwg.mxu0
        %2284 = vrot.lane.b32.xlu0 %v2153, 120
        %v2285 = vpop.permute.xlu0 %2284
        %2286 = vrot.lane.b32.xlu0 %v2153, 88
        %v2287 = vpop.permute.xlu0 %2286
        %v2289 = vsel %vm2157, %v2285, 0
        %v2292 = vsel %vm2157, %v2287, 0
        %2294 = vmatprep.subr.bf16.mxu0 0
        %2295 = vmatpush1.bf16.xpose.msra.mxu0 0
        %2296 = vmatprep.subr.bf16.mxu0 0
        %2297 = vmatpush1.bf16.xpose.msra.mxu0 0
        %2298 = vmatprep.subr.bf16.mxu0 0
        %2299 = vmatpush1.bf16.xpose.msra.mxu0 0
        %2300 = vmatprep.subr.bf16.mxu0 0
        %2301 = vmatpush1.bf16.xpose.msra.mxu0 0
        %2302 = vmatprep.subr.bf16.mxu0 0
        %2303 = vmatpush1.bf16.xpose.msra.mxu0 0
        %2304 = vmatprep.subr.bf16.mxu0 0
        %2305 = vmatpush1.bf16.xpose.msra.mxu0 0
        %2306 = vmatprep.subr.bf16.mxu0 0
        %2307 = vmatpush1.bf16.xpose.msra.mxu0 0
        %2308 = vmatprep.subr.bf16.mxu0 0
        %2309 = vmatpush1.bf16.xpose.msra.mxu0 %v2292
        %2310 = vmatprep.subr.bf16.mxu0 0
        %2311 = vmatpush2.bf16.xpose.msra.mxu0 0
        %2312 = vmatprep.subr.bf16.mxu0 0
        %2313 = vmatpush2.bf16.xpose.msra.mxu0 0
        %2314 = vmatprep.subr.bf16.mxu0 0
        %2315 = vmatpush2.bf16.xpose.msra.mxu0 0
        %2316 = vmatprep.subr.bf16.mxu0 0
        %2317 = vmatpush2.bf16.xpose.msra.mxu0 0
        %2318 = vmatprep.subr.bf16.mxu0 0
        %2319 = vmatpush2.bf16.xpose.msra.mxu0 0
        %2320 = vmatprep.subr.bf16.mxu0 0
        %2321 = vmatpush2.bf16.xpose.msra.mxu0 0
        %2322 = vmatprep.subr.bf16.mxu0 0
        %2323 = vmatpush2.bf16.xpose.msra.mxu0 0
        %2324 = vmatprep.subr.bf16.mxu0 0
        %2325 = vmatpush2.bf16.xpose.msra.mxu0 0
        %2326 = vmatprep.mubr.bf16.mxu0 0
        %2327 = vmatmul.mubr.bf16.gmra.mxu0 %v2289
        %v2328 = vpop.f32.mrf.mxu0
        %v2329 = vadd.f32 0.0, %v2328
        %v2330 = vpop.f32.mrf.mxu0
        %v2331 = vpop.f32.mrf.mxu0
        %v2332 = vadd.f32 0.0, %v2331
        %v2333 = vpop.f32.mrf.mxu0
        %2334 = vdwg.mxu0
        %v2335 = vmul.f32 %v2329, 0.35355338
        %v2336 = vmul.f32 %v2332, 0.35355338
        %v2337 = vadd.f32 %v2335, %v2151
        %v2338 = vadd.f32 %v2336, %v2152
        %v2339 = vsel %vm2209, %v2337, -inf
        %2340 = vmax.xlane.f32.xlu0 %v2339
        %v2341 = vpop.xlane.xlu0 %2340
        %v2342 = vsel %vm2213, %v2338, -inf
        %2343 = vmax.xlane.f32.xlu0 %v2342
        %v2344 = vpop.xlane.xlu0 %2343
        %v2345 = vsub.f32 %v2337, %v2341
        %v2346 = vsub.f32 %v2338, %v2344
        %v2347 = vmul.f32 %v2345, 1.442695
        %v2348 = vpow.pop %v2347
        %v2349 = vmul.f32 %v2346, 1.442695
        %v2350 = vpow.pop %v2349
        %v2351 = vsel %vm2209, %v2348, 0.0
        %2352 = vadd.xlane.f32.xlu0 %v2351
        %v2353 = vpop.xlane.xlu0 %2352
        %v2354 = vsel %vm2213, %v2350, 0.0
        %2355 = vadd.xlane.f32.xlu0 %v2354
        %v2356 = vpop.xlane.xlu0 %2355
        %v2357 = vrcp.pop %v2353
        %v2358 = vrcp.pop %v2356
        %v2359 = vmul.f32 %v2348, %v2357
        %v2360 = vmul.f32 %v2350, %v2358
        %v2361 = vpack.c.bf16 %v2360, %v2359
        %2362 = vrot.lane.b32.xlu0 %v2153, 56
        %v2363 = vpop.permute.xlu0 %2362
        %v2365 = vsel %vm2209, %v2361, 0
        %v2368 = vsel %vm2239, %v2363, 0
        %2370 = vmatprep.subr.bf16.mxu0 0
        %2371 = vmatpush1.bf16.msra.mxu0 0
        %2372 = vmatprep.subr.bf16.mxu0 0
        %2373 = vmatpush1.bf16.msra.mxu0 0
        %2374 = vmatprep.subr.bf16.mxu0 0
        %2375 = vmatpush1.bf16.msra.mxu0 0
        %2376 = vmatprep.subr.bf16.mxu0 0
        %2377 = vmatpush1.bf16.msra.mxu0 0
        %2378 = vmatprep.subr.bf16.mxu0 0
        %2379 = vmatpush1.bf16.msra.mxu0 0
        %2380 = vmatprep.subr.bf16.mxu0 0
        %2381 = vmatpush1.bf16.msra.mxu0 0
        %2382 = vmatprep.subr.bf16.mxu0 0
        %2383 = vmatpush1.bf16.msra.mxu0 0
        %2384 = vmatprep.subr.bf16.mxu0 0
        %2385 = vmatpush1.bf16.msra.mxu0 %v2368
        %2386 = vmatprep.subr.bf16.mxu0 0
        %2387 = vmatpush2.bf16.msra.mxu0 0
        %2388 = vmatprep.subr.bf16.mxu0 0
        %2389 = vmatpush2.bf16.msra.mxu0 0
        %2390 = vmatprep.subr.bf16.mxu0 0
        %2391 = vmatpush2.bf16.msra.mxu0 0
        %2392 = vmatprep.subr.bf16.mxu0 0
        %2393 = vmatpush2.bf16.msra.mxu0 0
        %2394 = vmatprep.subr.bf16.mxu0 0
        %2395 = vmatpush2.bf16.msra.mxu0 0
        %2396 = vmatprep.subr.bf16.mxu0 0
        %2397 = vmatpush2.bf16.msra.mxu0 0
        %2398 = vmatprep.subr.bf16.mxu0 0
        %2399 = vmatpush2.bf16.msra.mxu0 0
        %2400 = vmatprep.subr.bf16.mxu0 0
        %2401 = vmatpush2.bf16.msra.mxu0 0
        %2402 = vmatprep.mubr.bf16.mxu0 0
        %2403 = vmatmul.mubr.bf16.gmra.mxu0 %v2365
        %v2404 = vpop.f32.mrf.mxu0
        %v2405 = vadd.f32 0.0, %v2404
        %v2406 = vpop.f32.mrf.mxu0
        %v2407 = vpop.f32.mrf.mxu0
        %v2408 = vadd.f32 0.0, %v2407
        %v2409 = vpop.f32.mrf.mxu0
        %2410 = vdwg.mxu0
        %2411 = vrot.lane.b32.xlu0 %v2153, 112
        %v2412 = vpop.permute.xlu0 %2411
        %2413 = vrot.lane.b32.xlu0 %v2153, 80
        %v2414 = vpop.permute.xlu0 %2413
        %v2416 = vsel %vm2157, %v2412, 0
        %v2419 = vsel %vm2157, %v2414, 0
        %2421 = vmatprep.subr.bf16.mxu0 0
        %2422 = vmatpush1.bf16.xpose.msra.mxu0 0
        %2423 = vmatprep.subr.bf16.mxu0 0
        %2424 = vmatpush1.bf16.xpose.msra.mxu0 0
        %2425 = vmatprep.subr.bf16.mxu0 0
        %2426 = vmatpush1.bf16.xpose.msra.mxu0 0
        %2427 = vmatprep.subr.bf16.mxu0 0
        %2428 = vmatpush1.bf16.xpose.msra.mxu0 0
        %2429 = vmatprep.subr.bf16.mxu0 0
        %2430 = vmatpush1.bf16.xpose.msra.mxu0 0
        %2431 = vmatprep.subr.bf16.mxu0 0
        %2432 = vmatpush1.bf16.xpose.msra.mxu0 0
        %2433 = vmatprep.subr.bf16.mxu0 0
        %2434 = vmatpush1.bf16.xpose.msra.mxu0 0
        %2435 = vmatprep.subr.bf16.mxu0 0
        %2436 = vmatpush1.bf16.xpose.msra.mxu0 %v2419
        %2437 = vmatprep.subr.bf16.mxu0 0
        %2438 = vmatpush2.bf16.xpose.msra.mxu0 0
        %2439 = vmatprep.subr.bf16.mxu0 0
        %2440 = vmatpush2.bf16.xpose.msra.mxu0 0
        %2441 = vmatprep.subr.bf16.mxu0 0
        %2442 = vmatpush2.bf16.xpose.msra.mxu0 0
        %2443 = vmatprep.subr.bf16.mxu0 0
        %2444 = vmatpush2.bf16.xpose.msra.mxu0 0
        %2445 = vmatprep.subr.bf16.mxu0 0
        %2446 = vmatpush2.bf16.xpose.msra.mxu0 0
        %2447 = vmatprep.subr.bf16.mxu0 0
        %2448 = vmatpush2.bf16.xpose.msra.mxu0 0
        %2449 = vmatprep.subr.bf16.mxu0 0
        %2450 = vmatpush2.bf16.xpose.msra.mxu0 0
        %2451 = vmatprep.subr.bf16.mxu0 0
        %2452 = vmatpush2.bf16.xpose.msra.mxu0 0
        %2453 = vmatprep.mubr.bf16.mxu0 0
        %2454 = vmatmul.mubr.bf16.gmra.mxu0 %v2416
        %v2455 = vpop.f32.mrf.mxu0
        %v2456 = vadd.f32 0.0, %v2455
        %v2457 = vpop.f32.mrf.mxu0
        %v2458 = vpop.f32.mrf.mxu0
        %v2459 = vadd.f32 0.0, %v2458
        %v2460 = vpop.f32.mrf.mxu0
        %2461 = vdwg.mxu0
        %v2462 = vmul.f32 %v2456, 0.35355338
        %v2463 = vmul.f32 %v2459, 0.35355338
        %v2464 = vadd.f32 %v2462, %v2151
        %v2465 = vadd.f32 %v2463, %v2152
        %v2466 = vsel %vm2209, %v2464, -inf
        %2467 = vmax.xlane.f32.xlu0 %v2466
        %v2468 = vpop.xlane.xlu0 %2467
        %v2469 = vsel %vm2213, %v2465, -inf
        %2470 = vmax.xlane.f32.xlu0 %v2469
        %v2471 = vpop.xlane.xlu0 %2470
        %v2472 = vsub.f32 %v2464, %v2468
        %v2473 = vsub.f32 %v2465, %v2471
        %v2474 = vmul.f32 %v2472, 1.442695
        %v2475 = vpow.pop %v2474
        %v2476 = vmul.f32 %v2473, 1.442695
        %v2477 = vpow.pop %v2476
        %v2478 = vsel %vm2209, %v2475, 0.0
        %2479 = vadd.xlane.f32.xlu0 %v2478
        %v2480 = vpop.xlane.xlu0 %2479
        %v2481 = vsel %vm2213, %v2477, 0.0
        %2482 = vadd.xlane.f32.xlu0 %v2481
        %v2483 = vpop.xlane.xlu0 %2482
        %v2484 = vrcp.pop %v2480
        %v2485 = vrcp.pop %v2483
        %v2486 = vmul.f32 %v2475, %v2484
        %v2487 = vmul.f32 %v2477, %v2485
        %v2488 = vpack.c.bf16 %v2487, %v2486
        %2489 = vrot.lane.b32.xlu0 %v2153, 48
        %v2490 = vpop.permute.xlu0 %2489
        %v2492 = vsel %vm2209, %v2488, 0
        %v2495 = vsel %vm2239, %v2490, 0
        %2497 = vmatprep.subr.bf16.mxu0 0
        %2498 = vmatpush1.bf16.msra.mxu0 0
        %2499 = vmatprep.subr.bf16.mxu0 0
        %2500 = vmatpush1.bf16.msra.mxu0 0
        %2501 = vmatprep.subr.bf16.mxu0 0
        %2502 = vmatpush1.bf16.msra.mxu0 0
        %2503 = vmatprep.subr.bf16.mxu0 0
        %2504 = vmatpush1.bf16.msra.mxu0 0
        %2505 = vmatprep.subr.bf16.mxu0 0
        %2506 = vmatpush1.bf16.msra.mxu0 0
        %2507 = vmatprep.subr.bf16.mxu0 0
        %2508 = vmatpush1.bf16.msra.mxu0 0
        %2509 = vmatprep.subr.bf16.mxu0 0
        %2510 = vmatpush1.bf16.msra.mxu0 0
        %2511 = vmatprep.subr.bf16.mxu0 0
        %2512 = vmatpush1.bf16.msra.mxu0 %v2495
        %2513 = vmatprep.subr.bf16.mxu0 0
        %2514 = vmatpush2.bf16.msra.mxu0 0
        %2515 = vmatprep.subr.bf16.mxu0 0
        %2516 = vmatpush2.bf16.msra.mxu0 0
        %2517 = vmatprep.subr.bf16.mxu0 0
        %2518 = vmatpush2.bf16.msra.mxu0 0
        %2519 = vmatprep.subr.bf16.mxu0 0
        %2520 = vmatpush2.bf16.msra.mxu0 0
        %2521 = vmatprep.subr.bf16.mxu0 0
        %2522 = vmatpush2.bf16.msra.mxu0 0
        %2523 = vmatprep.subr.bf16.mxu0 0
        %2524 = vmatpush2.bf16.msra.mxu0 0
        %2525 = vmatprep.subr.bf16.mxu0 0
        %2526 = vmatpush2.bf16.msra.mxu0 0
        %2527 = vmatprep.subr.bf16.mxu0 0
        %2528 = vmatpush2.bf16.msra.mxu0 0
        %2529 = vmatprep.mubr.bf16.mxu0 0
        %2530 = vmatmul.mubr.bf16.gmra.mxu0 %v2492
        %v2531 = vpop.f32.mrf.mxu0
        %v2532 = vadd.f32 0.0, %v2531
        %v2533 = vpop.f32.mrf.mxu0
        %v2534 = vpop.f32.mrf.mxu0
        %v2535 = vadd.f32 0.0, %v2534
        %v2536 = vpop.f32.mrf.mxu0
        %2537 = vdwg.mxu0
        %2538 = vrot.lane.b32.xlu0 %v2153, 104
        %v2539 = vpop.permute.xlu0 %2538
        %2540 = vrot.lane.b32.xlu0 %v2153, 72
        %v2541 = vpop.permute.xlu0 %2540
        %v2543 = vsel %vm2157, %v2539, 0
        %v2546 = vsel %vm2157, %v2541, 0
        %2548 = vmatprep.subr.bf16.mxu0 0
        %2549 = vmatpush1.bf16.xpose.msra.mxu0 0
        %2550 = vmatprep.subr.bf16.mxu0 0
        %2551 = vmatpush1.bf16.xpose.msra.mxu0 0
        %2552 = vmatprep.subr.bf16.mxu0 0
        %2553 = vmatpush1.bf16.xpose.msra.mxu0 0
        %2554 = vmatprep.subr.bf16.mxu0 0
        %2555 = vmatpush1.bf16.xpose.msra.mxu0 0
        %2556 = vmatprep.subr.bf16.mxu0 0
        %2557 = vmatpush1.bf16.xpose.msra.mxu0 0
        %2558 = vmatprep.subr.bf16.mxu0 0
        %2559 = vmatpush1.bf16.xpose.msra.mxu0 0
        %2560 = vmatprep.subr.bf16.mxu0 0
        %2561 = vmatpush1.bf16.xpose.msra.mxu0 0
        %2562 = vmatprep.subr.bf16.mxu0 0
        %2563 = vmatpush1.bf16.xpose.msra.mxu0 %v2546
        %2564 = vmatprep.subr.bf16.mxu0 0
        %2565 = vmatpush2.bf16.xpose.msra.mxu0 0
        %2566 = vmatprep.subr.bf16.mxu0 0
        %2567 = vmatpush2.bf16.xpose.msra.mxu0 0
        %2568 = vmatprep.subr.bf16.mxu0 0
        %2569 = vmatpush2.bf16.xpose.msra.mxu0 0
        %2570 = vmatprep.subr.bf16.mxu0 0
        %2571 = vmatpush2.bf16.xpose.msra.mxu0 0
        %2572 = vmatprep.subr.bf16.mxu0 0
        %2573 = vmatpush2.bf16.xpose.msra.mxu0 0
        %2574 = vmatprep.subr.bf16.mxu0 0
        %2575 = vmatpush2.bf16.xpose.msra.mxu0 0
        %2576 = vmatprep.subr.bf16.mxu0 0
        %2577 = vmatpush2.bf16.xpose.msra.mxu0 0
        %2578 = vmatprep.subr.bf16.mxu0 0
        %2579 = vmatpush2.bf16.xpose.msra.mxu0 0
        %2580 = vmatprep.mubr.bf16.mxu0 0
        %2581 = vmatmul.mubr.bf16.gmra.mxu0 %v2543
        %v2582 = vpop.f32.mrf.mxu0
        %v2583 = vadd.f32 0.0, %v2582
        %v2584 = vpop.f32.mrf.mxu0
        %v2585 = vpop.f32.mrf.mxu0
        %v2586 = vadd.f32 0.0, %v2585
        %v2587 = vpop.f32.mrf.mxu0
        %2588 = vdwg.mxu0
        %v2589 = vmul.f32 %v2583, 0.35355338
        %v2590 = vmul.f32 %v2586, 0.35355338
        %v2591 = vadd.f32 %v2589, %v2151
        %v2592 = vadd.f32 %v2590, %v2152
        %v2593 = vsel %vm2209, %v2591, -inf
        %2594 = vmax.xlane.f32.xlu0 %v2593
        %v2595 = vpop.xlane.xlu0 %2594
        %v2596 = vsel %vm2213, %v2592, -inf
        %2597 = vmax.xlane.f32.xlu0 %v2596
        %v2598 = vpop.xlane.xlu0 %2597
        %v2599 = vsub.f32 %v2591, %v2595
        %v2600 = vsub.f32 %v2592, %v2598
        %v2601 = vmul.f32 %v2599, 1.442695
        %v2602 = vpow.pop %v2601
        %v2603 = vmul.f32 %v2600, 1.442695
        %v2604 = vpow.pop %v2603
        %v2605 = vsel %vm2209, %v2602, 0.0
        %2606 = vadd.xlane.f32.xlu0 %v2605
        %v2607 = vpop.xlane.xlu0 %2606
        %v2608 = vsel %vm2213, %v2604, 0.0
        %2609 = vadd.xlane.f32.xlu0 %v2608
        %v2610 = vpop.xlane.xlu0 %2609
        %v2611 = vrcp.pop %v2607
        %v2612 = vrcp.pop %v2610
        %v2613 = vmul.f32 %v2602, %v2611
        %v2614 = vmul.f32 %v2604, %v2612
        %v2615 = vpack.c.bf16 %v2614, %v2613
        %2616 = vrot.lane.b32.xlu0 %v2153, 40
        %v2617 = vpop.permute.xlu0 %2616
        %v2619 = vsel %vm2209, %v2615, 0
        %v2622 = vsel %vm2239, %v2617, 0
        %2624 = vmatprep.subr.bf16.mxu0 0
        %2625 = vmatpush1.bf16.msra.mxu0 0
        %2626 = vmatprep.subr.bf16.mxu0 0
        %2627 = vmatpush1.bf16.msra.mxu0 0
        %2628 = vmatprep.subr.bf16.mxu0 0
        %2629 = vmatpush1.bf16.msra.mxu0 0
        %2630 = vmatprep.subr.bf16.mxu0 0
        %2631 = vmatpush1.bf16.msra.mxu0 0
        %2632 = vmatprep.subr.bf16.mxu0 0
        %2633 = vmatpush1.bf16.msra.mxu0 0
        %2634 = vmatprep.subr.bf16.mxu0 0
        %2635 = vmatpush1.bf16.msra.mxu0 0
        %2636 = vmatprep.subr.bf16.mxu0 0
        %2637 = vmatpush1.bf16.msra.mxu0 0
        %2638 = vmatprep.subr.bf16.mxu0 0
        %2639 = vmatpush1.bf16.msra.mxu0 %v2622
        %2640 = vmatprep.subr.bf16.mxu0 0
        %2641 = vmatpush2.bf16.msra.mxu0 0
        %2642 = vmatprep.subr.bf16.mxu0 0
        %2643 = vmatpush2.bf16.msra.mxu0 0
        %2644 = vmatprep.subr.bf16.mxu0 0
        %2645 = vmatpush2.bf16.msra.mxu0 0
        %2646 = vmatprep.subr.bf16.mxu0 0
        %2647 = vmatpush2.bf16.msra.mxu0 0
        %2648 = vmatprep.subr.bf16.mxu0 0
        %2649 = vmatpush2.bf16.msra.mxu0 0
        %2650 = vmatprep.subr.bf16.mxu0 0
        %2651 = vmatpush2.bf16.msra.mxu0 0
        %2652 = vmatprep.subr.bf16.mxu0 0
        %2653 = vmatpush2.bf16.msra.mxu0 0
        %2654 = vmatprep.subr.bf16.mxu0 0
        %2655 = vmatpush2.bf16.msra.mxu0 0
        %2656 = vmatprep.mubr.bf16.mxu0 0
        %2657 = vmatmul.mubr.bf16.gmra.mxu0 %v2619
        %v2658 = vpop.f32.mrf.mxu0
        %v2659 = vadd.f32 0.0, %v2658
        %v2660 = vpop.f32.mrf.mxu0
        %v2661 = vpop.f32.mrf.mxu0
        %v2662 = vadd.f32 0.0, %v2661
        %v2663 = vpop.f32.mrf.mxu0
        %2664 = vdwg.mxu0
        %2667 = vrot.lane.b32.xlu0 %v2405, 8
        %v2668 = vpop.permute.xlu0 %2667
        %2669 = vrot.lane.b32.xlu0 %v2408, 8
        %v2670 = vpop.permute.xlu0 %2669
        %2675 = vrot.lane.b32.xlu0 %v2532, 16
        %v2676 = vpop.permute.xlu0 %2675
        %2677 = vrot.lane.b32.xlu0 %v2535, 16
        %v2678 = vpop.permute.xlu0 %2677
        %2683 = vrot.lane.b32.xlu0 %v2659, 24
        %v2684 = vpop.permute.xlu0 %2683
        %2685 = vrot.lane.b32.xlu0 %v2662, 24
        %v2686 = vpop.permute.xlu0 %2685
        %v2689 = vsel %vm2157, %v2278, %v2668
        %v2690 = vsel %vm2157, %v2281, %v2670
        %vm2691 = vcmask 130048
        %v2692 = vsel %vm2691, %v2689, %v2676
        %v2693 = vsel %vm2691, %v2690, %v2678
        %vm2694 = vcmask 195584
        %v2695 = vsel %vm2694, %v2692, %v2684
        %v2696 = vsel %vm2694, %v2693, %v2686
        %v2697 = vpack.c.bf16 %v2696, %v2695
        %v2698 = vld [vmem:[%s871] sm:$0xf]
        %v2699 = vld [vmem:[%s871 + $0x4] sm:$0xf]
        %v2700 = vld [vmem:[%s871 + $0x8] sm:$0xf]
        %v2701 = vld [vmem:[%s871 + $0xc] sm:$0xf]
        %v2706 = vunpack.c.l.b16 %v2698
        %v2707 = vunpack.c.l.b16 %v2699
        %v2708 = vunpack.c.l.b16 %v2700
        %v2709 = vunpack.c.l.b16 %v2701
        %v2710 = vpack.c.b16 %v2707, %v2706
        %v2711 = vpack.c.b16 %v2709, %v2708
        %v2715 = vsel %vm2038, %v2697, 0
        %2717 = vmatprep.subr.bf16.mxu0 0
        %2718 = vmatpush1.bf16.msra.mxu0 0
        %2719 = vmatprep.subr.bf16.mxu0 0
        %2720 = vmatpush1.bf16.msra.mxu0 0
        %2721 = vmatprep.subr.bf16.mxu0 0
        %2722 = vmatpush1.bf16.msra.mxu0 0
        %2723 = vmatprep.subr.bf16.mxu0 0
        %2724 = vmatpush1.bf16.msra.mxu0 0
        %2725 = vmatprep.subr.bf16.mxu0 0
        %2726 = vmatpush1.bf16.msra.mxu0 0
        %2727 = vmatprep.subr.bf16.mxu0 0
        %2728 = vmatpush1.bf16.msra.mxu0 0
        %2729 = vmatprep.subr.bf16.mxu0 0
        %2730 = vmatpush1.bf16.msra.mxu0 %v2711
        %2731 = vmatprep.subr.bf16.mxu0 0
        %2732 = vmatpush1.bf16.msra.mxu0 %v2710
        %2733 = vmatprep.subr.bf16.mxu0 0
        %2734 = vmatpush2.bf16.msra.mxu0 0
        %2735 = vmatprep.subr.bf16.mxu0 0
        %2736 = vmatpush2.bf16.msra.mxu0 0
        %2737 = vmatprep.subr.bf16.mxu0 0
        %2738 = vmatpush2.bf16.msra.mxu0 0
        %2739 = vmatprep.subr.bf16.mxu0 0
        %2740 = vmatpush2.bf16.msra.mxu0 0
        %2741 = vmatprep.subr.bf16.mxu0 0
        %2742 = vmatpush2.bf16.msra.mxu0 0
        %2743 = vmatprep.subr.bf16.mxu0 0
        %2744 = vmatpush2.bf16.msra.mxu0 0
        %2745 = vmatprep.subr.bf16.mxu0 0
        %2746 = vmatpush2.bf16.msra.mxu0 0
        %2747 = vmatprep.subr.bf16.mxu0 0
        %2748 = vmatpush2.bf16.msra.mxu0 0
        %2749 = vmatprep.mubr.bf16.mxu0 0
        %2750 = vmatmul.mubr.bf16.gmra.mxu0 %v2715
        %v2751 = vpop.f32.mrf.mxu0
        %v2752 = vadd.f32 0.0, %v2751
        %v2753 = vpop.f32.mrf.mxu0
        %v2754 = vpop.f32.mrf.mxu0
        %v2755 = vadd.f32 0.0, %v2754
        %v2756 = vpop.f32.mrf.mxu0
        %2757 = vdwg.mxu0
        %v2758 = vadd.f32 %v2034, %v2752
        %v2759 = vadd.f32 %v2035, %v2755
        %v2760 = vld [vmem:[%s874] sm:$0x1]
        %v2762 = vlaneseq
        %v2763 = vshrl.u32 %v2762, 7
        %v2764 = vsub.s32 0, %v2763
        %v2765 = vrot.slane %v2760, %v2764
        %v2767 = vadd.f32 %v2758, %v2765
        %v2768 = vadd.f32 %v2759, %v2765
        %v2769 = vld [vmem:[%s877] sm:$0x1]
        %v2770 = vld [vmem:[%s880] sm:$0x1]
        %v2771 = vsel %vm2038, %v2767, 0.0
        %2772 = vadd.xlane.f32.xlu0 %v2771
        %v2773 = vpop.xlane.xlu0 %2772
        %v2774 = vsel %vm2042, %v2768, 0.0
        %2775 = vadd.xlane.f32.xlu0 %v2774
        %v2776 = vpop.xlane.xlu0 %2775
        %v2777 = vmul.f32 %v2773, %v2046
        %v2778 = vmul.f32 %v2776, %v2046
        %v2779 = vsub.f32 %v2767, %v2777
        %v2780 = vsub.f32 %v2768, %v2778
        %v2781 = vmul.f32 %v2779, %v2779
        %v2782 = vmul.f32 %v2780, %v2780
        %v2783 = vsel %vm2038, %v2781, 0.0
        %2784 = vadd.xlane.f32.xlu0 %v2783
        %v2785 = vpop.xlane.xlu0 %2784
        %v2786 = vsel %vm2042, %v2782, 0.0
        %2787 = vadd.xlane.f32.xlu0 %v2786
        %v2788 = vpop.xlane.xlu0 %2787
        %v2789 = vmul.f32 %v2785, %v2046
        %v2790 = vmul.f32 %v2788, %v2046
        %v2791 = vadd.f32 %v2789, 1e-05
        %v2792 = vadd.f32 %v2790, 1e-05
        %v2793 = vrsqrt.pop %v2791
        %v2794 = vrsqrt.pop %v2792
        %v2795 = vmul.f32 %v2779, %v2793
        %v2796 = vmul.f32 %v2780, %v2794
        %v2798 = vlaneseq
        %v2799 = vshrl.u32 %v2798, 7
        %v2800 = vsub.s32 0, %v2799
        %v2801 = vrot.slane %v2769, %v2800
        %v2803 = vmul.f32 %v2795, %v2801
        %v2804 = vmul.f32 %v2796, %v2801
        %v2806 = vlaneseq
        %v2807 = vshrl.u32 %v2806, 7
        %v2808 = vsub.s32 0, %v2807
        %v2809 = vrot.slane %v2770, %v2808
        %v2811 = vadd.f32 %v2803, %v2809
        %v2812 = vadd.f32 %v2804, %v2809
        %v2813 = vpack.c.bf16 %v2812, %v2811
        %v2814 = vld [vmem:[%s885] sm:$0xf]
        %v2815 = vld [vmem:[%s885 + $0x4] sm:$0xf]
        %v2816 = vld [vmem:[%s885 + $0x8] sm:$0xf]
        %v2817 = vld [vmem:[%s885 + $0xc] sm:$0xf]
        %v2818 = vld [vmem:[%s888] sm:$0x1]
        %v2820 = vlaneseq
        %v2821 = vshrl.u32 %v2820, 7
        %v2822 = vsub.s32 0, %v2821
        %v2823 = vrot.slane %v2818, %v2822
        %v2829 = vunpack.c.l.b16 %v2814
        %v2830 = vunpack.c.l.b16 %v2815
        %v2831 = vunpack.c.l.b16 %v2816
        %v2832 = vunpack.c.l.b16 %v2817
        %v2833 = vpack.c.b16 %v2830, %v2829
        %v2834 = vpack.c.b16 %v2832, %v2831
        %v2838 = vsel %vm2038, %v2813, 0
        %2840 = vmatprep.subr.bf16.mxu0 0
        %2841 = vmatpush1.bf16.msra.mxu0 0
        %2842 = vmatprep.subr.bf16.mxu0 0
        %2843 = vmatpush1.bf16.msra.mxu0 0
        %2844 = vmatprep.subr.bf16.mxu0 0
        %2845 = vmatpush1.bf16.msra.mxu0 0
        %2846 = vmatprep.subr.bf16.mxu0 0
        %2847 = vmatpush1.bf16.msra.mxu0 0
        %2848 = vmatprep.subr.bf16.mxu0 0
        %2849 = vmatpush1.bf16.msra.mxu0 0
        %2850 = vmatprep.subr.bf16.mxu0 0
        %2851 = vmatpush1.bf16.msra.mxu0 0
        %2852 = vmatprep.subr.bf16.mxu0 0
        %2853 = vmatpush1.bf16.msra.mxu0 %v2834
        %2854 = vmatprep.subr.bf16.mxu0 0
        %2855 = vmatpush1.bf16.msra.mxu0 %v2833
        %2856 = vmatprep.subr.bf16.mxu0 0
        %2857 = vmatpush2.bf16.msra.mxu0 0
        %2858 = vmatprep.subr.bf16.mxu0 0
        %2859 = vmatpush2.bf16.msra.mxu0 0
        %2860 = vmatprep.subr.bf16.mxu0 0
        %2861 = vmatpush2.bf16.msra.mxu0 0
        %2862 = vmatprep.subr.bf16.mxu0 0
        %2863 = vmatpush2.bf16.msra.mxu0 0
        %2864 = vmatprep.subr.bf16.mxu0 0
        %2865 = vmatpush2.bf16.msra.mxu0 0
        %2866 = vmatprep.subr.bf16.mxu0 0
        %2867 = vmatpush2.bf16.msra.mxu0 0
        %2868 = vmatprep.subr.bf16.mxu0 0
        %2869 = vmatpush2.bf16.msra.mxu0 0
        %2870 = vmatprep.subr.bf16.mxu0 0
        %2871 = vmatpush2.bf16.msra.mxu0 0
        %2872 = vmatprep.mubr.bf16.mxu0 0
        %2873 = vmatmul.mubr.bf16.gmra.mxu0 %v2838
        %v2874 = vpop.f32.mrf.mxu0
        %v2875 = vadd.f32 %v2823, %v2874
        %v2876 = vpop.f32.mrf.mxu0
        %v2877 = vpop.f32.mrf.mxu0
        %v2878 = vadd.f32 %v2823, %v2877
        %v2879 = vpop.f32.mrf.mxu0
        %2880 = vdwg.mxu0
        %v2881 = vmul.f32 %v2875, -1.702
        %v2882 = vmul.f32 %v2878, -1.702
        %v2883 = vmul.f32 %v2881, 1.442695
        %v2884 = vpow.pop %v2883
        %v2885 = vmul.f32 %v2882, 1.442695
        %v2886 = vpow.pop %v2885
        %v2887 = vadd.f32 %v2884, 1.0
        %v2888 = vadd.f32 %v2886, 1.0
        %v2889 = vrcp.pop %v2887
        %v2890 = vmul.f32 1.0, %v2889
        %v2891 = vrcp.pop %v2888
        %v2892 = vmul.f32 1.0, %v2891
        %v2893 = vmul.f32 %v2875, %v2890
        %v2894 = vmul.f32 %v2878, %v2892
        %v2895 = vpack.c.bf16 %v2894, %v2893
        %v2896 = vld [vmem:[%s893] sm:$0xf]
        %v2897 = vld [vmem:[%s893 + $0x4] sm:$0xf]
        %v2898 = vld [vmem:[%s893 + $0x8] sm:$0xf]
        %v2899 = vld [vmem:[%s893 + $0xc] sm:$0xf]
        %v2900 = vld [vmem:[%s893 + $0x10] sm:$0xf]
        %v2901 = vld [vmem:[%s893 + $0x14] sm:$0xf]
        %v2902 = vld [vmem:[%s893 + $0x18] sm:$0xf]
        %v2903 = vld [vmem:[%s893 + $0x1c] sm:$0xf]
        %v2904 = vld [vmem:[%s893 + $0x20] sm:$0xf]
        %v2905 = vld [vmem:[%s893 + $0x24] sm:$0xf]
        %v2906 = vld [vmem:[%s893 + $0x28] sm:$0xf]
        %v2907 = vld [vmem:[%s893 + $0x2c] sm:$0xf]
        %v2908 = vld [vmem:[%s893 + $0x30] sm:$0xf]
        %v2909 = vld [vmem:[%s893 + $0x34] sm:$0xf]
        %v2910 = vld [vmem:[%s893 + $0x38] sm:$0xf]
        %v2911 = vld [vmem:[%s893 + $0x3c] sm:$0xf]
        %v2928 = vunpack.c.l.b16 %v2896
        %v2929 = vunpack.c.l.b16 %v2897
        %v2930 = vunpack.c.l.b16 %v2898
        %v2931 = vunpack.c.l.b16 %v2899
        %v2932 = vunpack.c.l.b16 %v2900
        %v2933 = vunpack.c.l.b16 %v2901
        %v2934 = vunpack.c.l.b16 %v2902
        %v2935 = vunpack.c.l.b16 %v2903
        %v2936 = vunpack.c.l.b16 %v2904
        %v2937 = vunpack.c.l.b16 %v2905
        %v2938 = vunpack.c.l.b16 %v2906
        %v2939 = vunpack.c.l.b16 %v2907
        %v2940 = vunpack.c.l.b16 %v2908
        %v2941 = vunpack.c.l.b16 %v2909
        %v2942 = vunpack.c.l.b16 %v2910
        %v2943 = vunpack.c.l.b16 %v2911
        %v2944 = vpack.c.b16 %v2929, %v2928
        %v2945 = vpack.c.b16 %v2931, %v2930
        %v2946 = vpack.c.b16 %v2933, %v2932
        %v2947 = vpack.c.b16 %v2935, %v2934
        %v2948 = vpack.c.b16 %v2937, %v2936
        %v2949 = vpack.c.b16 %v2939, %v2938
        %v2950 = vpack.c.b16 %v2941, %v2940
        %v2951 = vpack.c.b16 %v2943, %v2942
        %2960 = vmatprep.subr.bf16.mxu0 0
        %2961 = vmatpush1.bf16.msra.mxu0 %v2951
        %2962 = vmatprep.subr.bf16.mxu0 0
        %2963 = vmatpush1.bf16.msra.mxu0 %v2950
        %2964 = vmatprep.subr.bf16.mxu0 0
        %2965 = vmatpush1.bf16.msra.mxu0 %v2949
        %2966 = vmatprep.subr.bf16.mxu0 0
        %2967 = vmatpush1.bf16.msra.mxu0 %v2948
        %2968 = vmatprep.subr.bf16.mxu0 0
        %2969 = vmatpush1.bf16.msra.mxu0 %v2947
        %2970 = vmatprep.subr.bf16.mxu0 0
        %2971 = vmatpush1.bf16.msra.mxu0 %v2946
        %2972 = vmatprep.subr.bf16.mxu0 0
        %2973 = vmatpush1.bf16.msra.mxu0 %v2945
        %2974 = vmatprep.subr.bf16.mxu0 0
        %2975 = vmatpush1.bf16.msra.mxu0 %v2944
        %2976 = vmatprep.subr.bf16.mxu0 0
        %2977 = vmatpush2.bf16.msra.mxu0 0
        %2978 = vmatprep.subr.bf16.mxu0 0
        %2979 = vmatpush2.bf16.msra.mxu0 0
        %2980 = vmatprep.subr.bf16.mxu0 0
        %2981 = vmatpush2.bf16.msra.mxu0 0
        %2982 = vmatprep.subr.bf16.mxu0 0
        %2983 = vmatpush2.bf16.msra.mxu0 0
        %2984 = vmatprep.subr.bf16.mxu0 0
        %2985 = vmatpush2.bf16.msra.mxu0 0
        %2986 = vmatprep.subr.bf16.mxu0 0
        %2987 = vmatpush2.bf16.msra.mxu0 0
        %2988 = vmatprep.subr.bf16.mxu0 0
        %2989 = vmatpush2.bf16.msra.mxu0 0
        %2990 = vmatprep.subr.bf16.mxu0 0
        %2991 = vmatpush2.bf16.msra.mxu0 0
        %2992 = vmatprep.mubr.bf16.mxu0 0
        %2993 = vmatmul.mubr.bf16.gmra.mxu0 %v2895
        %v2994 = vpop.f32.mrf.mxu0
        %v2995 = vadd.f32 0.0, %v2994
        %v2996 = vpop.f32.mrf.mxu0
        %v2997 = vpop.f32.mrf.mxu0
        %v2998 = vadd.f32 0.0, %v2997
        %v2999 = vpop.f32.mrf.mxu0
        %3000 = vdwg.mxu0
        %v3001 = vadd.f32 %v2767, %v2995
        %v3002 = vadd.f32 %v2768, %v2998
        %v3003 = vld [vmem:[%s896] sm:$0x1]
        %v3005 = vlaneseq
        %v3006 = vshrl.u32 %v3005, 7
        %v3007 = vsub.s32 0, %v3006
        %v3008 = vrot.slane %v3003, %v3007
        %v3010 = vadd.f32 %v3001, %v3008
        %v3011 = vadd.f32 %v3002, %v3008
        %3012 = vst.msk [vmem:[#allocation2] sm:$0xff] %vm2038, %v3010
        %3013 = vst.msk [vmem:[#allocation2 + $0x8] sm:$0x3] %vm2042, %v3011
        %p3014 = scmp.eq.s32.totalorder %s37, 1
        // Predicated region
        $region121: #{vision_clip_forward.1} parent=115 // pred_check
          %p3015 = pneg %p3014
        $region122: #{vision_clip_forward.1} parent=115 // pred_check_branch
          %3017 = sbr.rel (%p3015) target = $region124
        $region123: #{vision_clip_forward.1} parent=115 // pred_region
          %v3018 = vld [vmem:[#allocation2] sm:$0x1]
          %vm3019 = vcmask 253952
          %3020 = vst.msk [vmem:[#allocation3] sm:$0x1] %vm3019, %v3018
          %v3021 = vld [vmem:[#allocation2 + $0x5] sm:$0x1]
          %3022 = vst.msk [vmem:[#allocation3 + $0x1] sm:$0x1] %vm3019, %v3021
          %v3023 = vld [vmem:[#allocation3] sm:$0x3]
          %v3024 = vld [vmem:[%s19] sm:$0x1]
          %v3025 = vld [vmem:[%s20] sm:$0x1]
          %v3026 = vsel %vm2042, %v3023, 0.0
          %3027 = vadd.xlane.f32.xlu0 %v3026
          %v3028 = vpop.xlane.xlu0 %3027
          %v3029 = vmul.f32 %v3028, %v2046
          %v3030 = vsub.f32 %v3023, %v3029
          %v3031 = vmul.f32 %v3030, %v3030
          %v3032 = vsel %vm2042, %v3031, 0.0
          %3033 = vadd.xlane.f32.xlu0 %v3032
          %v3034 = vpop.xlane.xlu0 %3033
          %v3035 = vmul.f32 %v3034, %v2046
          %v3036 = vadd.f32 %v3035, 1e-05
          %v3037 = vrsqrt.pop %v3036
          %v3038 = vmul.f32 %v3030, %v3037
          %v3040 = vlaneseq
          %v3041 = vshrl.u32 %v3040, 7
          %v3042 = vsub.s32 0, %v3041
          %v3043 = vrot.slane %v3024, %v3042
          %v3045 = vmul.f32 %v3038, %v3043
          %v3047 = vlaneseq
          %v3048 = vshrl.u32 %v3047, 7
          %v3049 = vsub.s32 0, %v3048
          %v3050 = vrot.slane %v3025, %v3049
          %v3052 = vadd.f32 %v3045, %v3050
          %v3053 = vpack.c.bf16 %v3052, %v3052
          %v3054 = vld [vmem:[%s21] sm:$0xf]
          %v3055 = vld [vmem:[%s21 + $0x4] sm:$0xf]
          %v3056 = vld [vmem:[%s21 + $0x8] sm:$0xf]
          %v3057 = vld [vmem:[%s21 + $0xc] sm:$0xf]
          %v3062 = vunpack.c.l.b16 %v3054
          %v3063 = vunpack.c.l.b16 %v3055
          %v3064 = vunpack.c.l.b16 %v3056
          %v3065 = vunpack.c.l.b16 %v3057
          %v3066 = vpack.c.b16 %v3063, %v3062
          %v3067 = vpack.c.b16 %v3065, %v3064
          %v3071 = vsel %vm2038, %v3053, 0
          %3073 = vmatprep.subr.bf16.mxu0 0
          %3074 = vmatpush1.bf16.msra.mxu0 0
          %3075 = vmatprep.subr.bf16.mxu0 0
          %3076 = vmatpush1.bf16.msra.mxu0 0
          %3077 = vmatprep.subr.bf16.mxu0 0
          %3078 = vmatpush1.bf16.msra.mxu0 0
          %3079 = vmatprep.subr.bf16.mxu0 0
          %3080 = vmatpush1.bf16.msra.mxu0 0
          %3081 = vmatprep.subr.bf16.mxu0 0
          %3082 = vmatpush1.bf16.msra.mxu0 0
          %3083 = vmatprep.subr.bf16.mxu0 0
          %3084 = vmatpush1.bf16.msra.mxu0 0
          %3085 = vmatprep.subr.bf16.mxu0 0
          %3086 = vmatpush1.bf16.msra.mxu0 %v3067
          %3087 = vmatprep.subr.bf16.mxu0 0
          %3088 = vmatpush1.bf16.msra.mxu0 %v3066
          %3089 = vmatprep.subr.bf16.mxu0 0
          %3090 = vmatpush2.bf16.msra.mxu0 0
          %3091 = vmatprep.subr.bf16.mxu0 0
          %3092 = vmatpush2.bf16.msra.mxu0 0
          %3093 = vmatprep.subr.bf16.mxu0 0
          %3094 = vmatpush2.bf16.msra.mxu0 0
          %3095 = vmatprep.subr.bf16.mxu0 0
          %3096 = vmatpush2.bf16.msra.mxu0 0
          %3097 = vmatprep.subr.bf16.mxu0 0
          %3098 = vmatpush2.bf16.msra.mxu0 0
          %3099 = vmatprep.subr.bf16.mxu0 0
          %3100 = vmatpush2.bf16.msra.mxu0 0
          %3101 = vmatprep.subr.bf16.mxu0 0
          %3102 = vmatpush2.bf16.msra.mxu0 0
          %3103 = vmatprep.subr.bf16.mxu0 0
          %3104 = vmatpush2.bf16.msra.mxu0 0
          %3105 = vmatprep.mubr.bf16.mxu0 0
          %3106 = vmatmul.mubr.bf16.gmra.mxu0 %v3071
          %v3107 = vpop.f32.mrf.mxu0
          %v3108 = vadd.f32 0.0, %v3107
          %v3109 = vpop.f32.mrf.mxu0
          %v3110 = vpop.f32.mrf.mxu0
          %v3111 = vpop.f32.mrf.mxu0
          %3112 = vdwg.mxu0
          %v3113 = vmul.f32 %v3108, %v3108
          %vm3114 = vcmask 123904
          %v3115 = vsel %vm3114, %v3113, 0.0
          %3116 = vadd.xlane.f32.xlu0 %v3115
          %v3117 = vpop.xlane.xlu0 %3116
          %v3118 = vrsqrt.pop %v3117
          %v3119 = vmul.f32 %v3108, %v3118
          %v3120 = vld [vmem:[%s22] sm:$0x3f]
          %v3121 = vmul.f32 %v3120, %v3120
          %vm3122 = vcmask 128000
          %v3123 = vsel %vm3122, %v3121, 0.0
          %3124 = vadd.xlane.f32.xlu0 %v3123
          %v3125 = vpop.xlane.xlu0 %3124
          %v3126 = vrsqrt.pop %v3125
          %v3127 = vmul.f32 %v3120, %v3126
          %v3128 = vpack.c.bf16 %v3119, %v3119
          %v3129 = vpack.c.bf16 %v3127, %v3127
          %v3131 = vsel %vm2691, %v3128, 0
          %v3134 = vsel %vm2691, %v3129, 0
          %3136 = vmatprep.subr.bf16.mxu0 0
          %3137 = vmatpush1.bf16.xpose.msra.mxu0 0
          %3138 = vmatprep.subr.bf16.mxu0 0
          %3139 = vmatpush1.bf16.xpose.msra.mxu0 0
          %3140 = vmatprep.subr.bf16.mxu0 0
          %3141 = vmatpush1.bf16.xpose.msra.mxu0 0
          %3142 = vmatprep.subr.bf16.mxu0 0
          %3143 = vmatpush1.bf16.xpose.msra.mxu0 0
          %3144 = vmatprep.subr.bf16.mxu0 0
          %3145 = vmatpush1.bf16.xpose.msra.mxu0 0
          %3146 = vmatprep.subr.bf16.mxu0 0
          %3147 = vmatpush1.bf16.xpose.msra.mxu0 0
          %3148 = vmatprep.subr.bf16.mxu0 0
          %3149 = vmatpush1.bf16.xpose.msra.mxu0 0
          %3150 = vmatprep.subr.bf16.mxu0 0
          %3151 = vmatpush1.bf16.xpose.msra.mxu0 %v3134
          %3152 = vmatprep.subr.bf16.mxu0 0
          %3153 = vmatpush2.bf16.xpose.msra.mxu0 0
          %3154 = vmatprep.subr.bf16.mxu0 0
          %3155 = vmatpush2.bf16.xpose.msra.mxu0 0
          %3156 = vmatprep.subr.bf16.mxu0 0
          %3157 = vmatpush2.bf16.xpose.msra.mxu0 0
          %3158 = vmatprep.subr.bf16.mxu0 0
          %3159 = vmatpush2.bf16.xpose.msra.mxu0 0
          %3160 = vmatprep.subr.bf16.mxu0 0
          %3161 = vmatpush2.bf16.xpose.msra.mxu0 0
          %3162 = vmatprep.subr.bf16.mxu0 0
          %3163 = vmatpush2.bf16.xpose.msra.mxu0 0
          %3164 = vmatprep.subr.bf16.mxu0 0
          %3165 = vmatpush2.bf16.xpose.msra.mxu0 0
          %3166 = vmatprep.subr.bf16.mxu0 0
          %3167 = vmatpush2.bf16.xpose.msra.mxu0 0
          %3168 = vmatprep.mubr.bf16.mxu0 0
          %3169 = vmatmul.mubr.bf16.gmra.mxu0 %v3131
          %v3170 = vpop.f32.mrf.mxu0
          %v3171 = vadd.f32 0.0, %v3170
          %v3172 = vpop.f32.mrf.mxu0
          %v3173 = vpop.f32.mrf.mxu0
          %v3174 = vpop.f32.mrf.mxu0
          %3175 = vdwg.mxu0
          %s3176 = sld [smem:[#allocation4]]
          %v3177 = vstv %s3176
          %v3178 = vmul.f32 %v3177, 1.442695
          %v3179 = vpow.pop %v3178
          %s3180 = vtos %v3179
          %v3181 = vstv %s3180
          %v3182 = vmul.f32 %v3181, %v3171
          %vm3183 = vcmask 41984
          %3184 = vst.msk [vmem:[#allocation5] sm:$0x3] %vm3183, %v3182
        $region124: #{vision_clip_forward.1} parent=115 // pred_fallthru
          _
        // Predicated region
        $region125: #{vision_clip_forward.1} parent=115 // pred_check
          %p3185 = pneg %p614
        $region126: #{vision_clip_forward.1} parent=115 // pred_check_branch
          %3187 = sbr.rel (%p3185) target = $region128
        $region127: #{vision_clip_forward.1} parent=115 // pred_region
          %s3189 = ssub.s32 32, 32
          %3190 = vsyncadd [#allocation6], %s3189
          %s3192 = sshll.u32 [#allocation5], 4
          %s3193 = int_to_ptr.vmem [resolvable:$true] %s3192
          %3195 = dma.vmem_to_hbm [thread:$0]  %s3193, 32, %s24, [#allocation6]
        $region128: #{vision_clip_forward.1} parent=115 // pred_fallthru
          _
        // Predicated region
        $region129: #{vision_clip_forward.1} parent=115 // pred_check
          %p3196 = pneg %p614
        $region130: #{vision_clip_forward.1} parent=115 // pred_check_branch
          %3198 = sbr.rel (%p3196) target = $region132
        $region131: #{vision_clip_forward.1} parent=115 // pred_region
          %3199 = dma.done [#allocation6], 32
        $region132: #{vision_clip_forward.1} parent=115 // pred_fallthru
          _
      $region116: #{vision_clip_forward.1} parent=5 // pred_fallthru
        _
      %p3200 = scmp.le.s32.totalorder 2, %s32
      // Predicated region
      $region133: #{vision_clip_forward.1} parent=5 // pred_check
        %p3201 = pneg %p3200
      $region134: #{vision_clip_forward.1} parent=5 // pred_check_branch
        %3203 = sbr.rel (%p3201) target = $region136
      $region135: #{vision_clip_forward.1} parent=5 // pred_region
        %s3204 = ssub.s32 %s32, 2
      $region136: #{vision_clip_forward.1} parent=5 // pred_fallthru
        _
    $region6: #{vision_clip_forward.1} parent=1 // loop_footer
      %s36 = sadd.s32 1, %s32
    $region7: #{vision_clip_forward.1} parent=1 // loop_footer_branch
      %31 = sbr.rel target = $region3
    $region8: #{vision_clip_forward.1} parent=1 // loop_exit
      _
    %3205 = vsyncpa [#allocation6], 1
    %s3206 = scalar_lea.sflag [#allocation6], 1
    %3207 = vsyncpa %s3206, 1

</llo_original>
